<compile_context>
chip_gen: v7x
topology: tpu7x:2x2x1
jax: 0.10.0
libtpu: 0.0.40
codegen_flags: <defaults>
</compile_context>

<pallas_src>
import functools

import numpy as np
import jax
import jax.numpy as jnp
from jax import lax
from jax.experimental import pallas as pl
from jax.experimental.pallas import tpu as pltpu


# ---------------------------------------------------------------------------
# Parameter init (stand-in for the torch.load'ed pre-trained encoder params)
# ---------------------------------------------------------------------------

def _uniform(key, shape, fan_in):
    bound = 1.0 / np.sqrt(float(fan_in))
    return jax.random.uniform(key, shape, jnp.float32, -bound, bound)


def init_params(key):
    ks = jax.random.split(key, 6)
    p = {}
    # Conv2d(1 -> 12, k=5, p=2, s=2)
    p["conv1_w"] = _uniform(ks[0], (12, 1, 5, 5), 1 * 5 * 5)
    p["conv1_b"] = _uniform(ks[1], (12,), 1 * 5 * 5)
    p["ln1_scale"] = jnp.ones((1, 12, 1, 1), jnp.float32)
    p["ln1_offset"] = jnp.zeros((1, 12, 1, 1), jnp.float32)
    # Conv2d(12 -> 12, k=3, p=1, s=2)
    p["conv2_w"] = _uniform(ks[2], (12, 12, 3, 3), 12 * 3 * 3)
    p["conv2_b"] = _uniform(ks[3], (12,), 12 * 3 * 3)
    p["ln2_scale"] = jnp.ones((1, 12, 1, 1), jnp.float32)
    p["ln2_offset"] = jnp.zeros((1, 12, 1, 1), jnp.float32)
    # Linear(108 -> 200), torch layout (out, in)
    p["fc_w"] = _uniform(ks[4], (200, 108), 108)
    p["fc_b"] = _uniform(ks[5], (200,), 108)
    return p


# ---------------------------------------------------------------------------
# One-time weight preparation: fold conv taps / strides / padding / pool
# decimation / flatten order into constant matrices (done once at init).
# In-kernel activation layout: rows = H, lanes = W*12 + channel.
# ---------------------------------------------------------------------------

def prepare_fused_params(p):
    f32 = jnp.float32

    # ---- conv1 (1->12, k5, s2, p2) on 48x48 -> 24x24 ----------------------
    # a1[di][w, j*12+co] = w1[co,0,di,dj] whenever w == 2*j + dj - 2
    # (W-padding handled by omission of out-of-range taps).
    e = np.arange(5)[:, None, None]
    w = np.arange(48)[None, :, None]
    j = np.arange(24)[None, None, :]
    selw1 = (w == 2 * j + e - 2).astype(np.float32)                 # (5, 48, 24)
    a1 = jnp.einsum("ewj,ode->dwjo", jnp.asarray(selw1),
                    p["conv1_w"][:, 0, :, :].astype(f32))           # (5, 48, 24, 12)
    a1 = a1.reshape(5, 48, 24 * 12)

    # s1[di][i, h] = 1 iff h == 2*i + di - 2   (H-padding by omission)
    d = np.arange(5)[:, None, None]
    i = np.arange(24)[None, :, None]
    h = np.arange(48)[None, None, :]
    s1 = jnp.asarray((h == 2 * i + d - 2).astype(np.float32))       # (5, 24, 48)

    # ---- conv2 (12->12, k3, s2, p1) on pooled 12x12 -> 6x6 ----------------
    # The pool-1 output is kept *undecimated* (23x23 shift-max grid); the x2
    # pool decimation + conv2 stride/pad are folded into a2 / s2.
    e = np.arange(3)[:, None, None]
    jw = np.arange(23)[None, :, None]
    j = np.arange(6)[None, None, :]
    selw2 = (jw == 4 * j + 2 * e - 2).astype(np.float32)            # (3, 23, 6)
    a2 = jnp.einsum("ewj,ocde->dwcjo", jnp.asarray(selw2),
                    p["conv2_w"].astype(f32))                       # (3, 23, 12, 6, 12)
    a2 = a2.reshape(3, 23 * 12, 6 * 12)

    d = np.arange(3)[:, None, None]
    i = np.arange(6)[None, :, None]
    r = np.arange(23)[None, None, :]
    s2 = jnp.asarray((r == 4 * i + 2 * d - 2).astype(np.float32))   # (3, 6, 23)

    # ---- fc (108 -> 200): absorbs pool-2 decimation + NCHW flatten order --
    jwf = np.arange(5)[:, None]
    jjf = np.arange(3)[None, :]
    sel_f = (jwf == 2 * jjf).astype(np.float32)                     # (5, 3)
    fw = jnp.einsum("wj,ocij->iwco", jnp.asarray(sel_f),
                    p["fc_w"].reshape(200, 12, 3, 3).astype(f32))   # (3, 5, 12, 200)
    fw = fw.reshape(180, 200)

    # ---- biases / LayerNorm affine pre-tiled to the lane layout -----------
    return {
        "a1": a1, "s1": s1,
        "b1": jnp.tile(p["conv1_b"].astype(f32), 24).reshape(1, 288),
        "g1": jnp.tile(p["ln1_scale"].reshape(12).astype(f32), 24).reshape(1, 288),
        "o1": jnp.tile(p["ln1_offset"].reshape(12).astype(f32), 24).reshape(1, 288),
        "a2": a2, "s2": s2,
        "b2": jnp.tile(p["conv2_b"].astype(f32), 6).reshape(1, 72),
        "g2": jnp.tile(p["ln2_scale"].reshape(12).astype(f32), 6).reshape(1, 72),
        "o2": jnp.tile(p["ln2_offset"].reshape(12).astype(f32), 6).reshape(1, 72),
        "fw": fw, "fb": p["fc_b"].astype(f32).reshape(1, 200),
    }


# ---------------------------------------------------------------------------
# Fused Pallas kernel: full encoder + RBF, everything VMEM-resident
# ---------------------------------------------------------------------------

def _fused_forward_kernel(x_ref, a1_ref, s1_ref, b1_ref, g1_ref, o1_ref,
                          a2_ref, s2_ref, b2_ref, g2_ref, o2_ref,
                          fw_ref, fb_ref,
                          enc_ref, rbf_ref, *, batch, split, gamma):
    x = x_ref[...]                                                   # (B*48, 48)

    # ---- conv1: lane-direction matmul batched over B, row-direction per b.
    acc1 = [jnp.zeros((24, 288), jnp.float32) for _ in range(batch)]
    for di in range(5):
        u = jnp.dot(x, a1_ref[di], preferred_element_type=jnp.float32)   # (B*48, 288)
        s = s1_ref[di]                                                   # (24, 48)
        for b in range(batch):
            acc1[b] = acc1[b] + jnp.dot(
                s, u[b * 48:(b + 1) * 48, :], preferred_element_type=jnp.float32)

    encs = []
    for b in range(batch):
        # conv1 bias; layout: rows = H (24), lanes = W*C (288)
        y = acc1[b] + b1_ref[...]
        # MyLayerNorm2d: per-sample mean / unbiased std over (C,H,W), no eps
        mean = jnp.mean(y, keepdims=True)
        dlt = y - mean
        var = jnp.sum(dlt * dlt, keepdims=True) / (24.0 * 288.0 - 1.0)
        y = g1_ref[...] * (dlt * lax.rsqrt(var)) + o1_ref[...]
        y = jnp.maximum(y, 0.0)                                          # ReLU
        # MaxPool2d(2,2): shift-max here; the x2 decimation is folded into
        # conv2's constant matrices (a2 / s2).
        mh = jnp.maximum(y[0:23, :], y[1:24, :])                         # (23, 288)
        p1 = jnp.maximum(mh[:, 0:276], mh[:, 12:288])                    # (23, 276)

        # conv2
        acc2 = jnp.zeros((6, 72), jnp.float32)
        for di in range(3):
            v = jnp.dot(p1, a2_ref[di], preferred_element_type=jnp.float32)      # (23, 72)
            acc2 = acc2 + jnp.dot(s2_ref[di], v, preferred_element_type=jnp.float32)
        y2 = acc2 + b2_ref[...]                                          # (6, 72)
        mean2 = jnp.mean(y2, keepdims=True)
        dlt2 = y2 - mean2
        var2 = jnp.sum(dlt2 * dlt2, keepdims=True) / (6.0 * 72.0 - 1.0)
        y2 = g2_ref[...] * (dlt2 * lax.rsqrt(var2)) + o2_ref[...]
        y2 = jnp.maximum(y2, 0.0)
        # MaxPool2d(2,2): shift-max; decimation + NCHW flatten folded into fw.
        mh2 = jnp.maximum(y2[0:5, :], y2[1:6, :])                        # (5, 72)
        mw2 = jnp.maximum(mh2[:, 0:60], mh2[:, 12:72])                   # (5, 60)

        # Flatten -> Linear(108, 200) -> ReLU
        vfc = jnp.concatenate([mw2[0:1, :], mw2[2:3, :], mw2[4:5, :]], axis=1)   # (1, 180)
        e = jnp.dot(vfc, fw_ref[...], preferred_element_type=jnp.float32) + fb_ref[...]
        encs.append(jnp.maximum(e, 0.0))                                 # (1, 200)

    enc = jnp.concatenate(encs, axis=0)                                  # (B, 200)
    enc_ref[...] = enc

    # ---- RBF kernel (matches torch _rbf_kernel: no clamping, gamma=1/200) --
    if split is None:
        xe, ye = enc, enc
    else:
        xe, ye = enc[:split, :], enc[split:, :]
    nx = jnp.sum(xe * xe, axis=1, keepdims=True)                         # (Bx, 1)
    ny = jnp.sum(ye * ye, axis=1)[None, :]                               # (1, By)
    xy = lax.dot_general(xe, ye, (((1,), (1,)), ((), ())),
                         preferred_element_type=jnp.float32)             # (Bx, By)
    rbf_ref[...] = jnp.exp(-gamma * (nx - 2.0 * xy + ny))


@functools.partial(jax.jit, static_argnames=("split",))
def fused_forward(obs, prep, split=None):
    """obs: (B, 1, 48, 48).  Returns (rbf, encoded).  One pallas_call total."""
    B = obs.shape[0]
    x2 = obs.astype(jnp.float32).reshape(B * 48, 48)
    n_rows = B if split is None else split
    n_cols = B if split is None else B - split
    vmem = pl.BlockSpec(memory_space=pltpu.MemorySpace.VMEM)
    kernel = functools.partial(_fused_forward_kernel, batch=B, split=split,
                               gamma=1.0 / 200.0)
    # NOTE: total working set (weights + activations) is < 1 MB, so the whole
    # batch lives in a single un-gridded VMEM block.  If batch ever grows
    # large, switch to a grid over batch ('parallel') to also engage the
    # second TensorCore on v7x and to tile against its 64 MiB VMEM.
    enc, rbf = pl.pallas_call(
        kernel,
        out_shape=(jax.ShapeDtypeStruct((B, 200), jnp.float32),
                   jax.ShapeDtypeStruct((n_rows, n_cols), jnp.float32)),
        in_specs=[vmem] * 13,
        out_specs=(vmem, vmem),
    )(x2, prep["a1"], prep["s1"], prep["b1"], prep["g1"], prep["o1"],
      prep["a2"], prep["s2"], prep["b2"], prep["g2"], prep["o2"],
      prep["fw"], prep["fb"])
    return rbf, enc


def deep_kernel_forward(obs_1, prep, obs_2=None):
    """Mirrors Deep_Kernel.forward: returns (rbf_result, encoded_obs)."""
    if obs_2 is None:
        rbf, enc = fused_forward(obs_1, prep, split=None)
        return rbf, enc
    # Two-observation path: single fused encode over the concatenated batch,
    # RBF between the two halves computed in the same kernel.
    obs = jnp.concatenate([obs_1, obs_2], axis=0)
    rbf, _ = fused_forward(obs, prep, split=int(obs_1.shape[0]))
    return rbf, None


# TODO(synk): torch.load of pre-trained encoder/decoder checkpoints and the
# decoder / mlp submodules (never exercised by Deep_Kernel.forward) are
# intentionally omitted; requires_grad bookkeeping has no JAX equivalent.


if __name__ == "__main__":
    key = jax.random.PRNGKey(0)
    pkey, xkey = jax.random.split(key)
    params = init_params(pkey)
    prep = prepare_fused_params(params)

    # Spatial 48x48 is implied by Flatten -> Linear(in_features=108 = 12*3*3).
    obs_1 = jax.random.normal(xkey, (2, 1, 48, 48), jnp.float32)

    rbf_result, encoded_obs = deep_kernel_forward(obs_1, prep)
    jax.block_until_ready((rbf_result, encoded_obs))

    assert rbf_result.shape == (2, 2)
    assert encoded_obs.shape == (2, 200)
    assert bool(jnp.all(jnp.isfinite(rbf_result)))
    assert bool(jnp.all(jnp.isfinite(encoded_obs)))
    print("KERNEL_OK")
</pallas_src>

<mosaic_0001>
module attributes {stable_mosaic.version = 11 : i64} {
  func.func @_fused_forward_kernel(%arg0: memref<96x48xf32, #tpu.memory_space<vmem>>, %arg1: memref<5x48x288xf32, #tpu.memory_space<vmem>>, %arg2: memref<5x24x48xf32, #tpu.memory_space<vmem>>, %arg3: memref<1x288xf32, #tpu.memory_space<vmem>>, %arg4: memref<1x288xf32, #tpu.memory_space<vmem>>, %arg5: memref<1x288xf32, #tpu.memory_space<vmem>>, %arg6: memref<3x276x72xf32, #tpu.memory_space<vmem>>, %arg7: memref<3x6x23xf32, #tpu.memory_space<vmem>>, %arg8: memref<1x72xf32, #tpu.memory_space<vmem>>, %arg9: memref<1x72xf32, #tpu.memory_space<vmem>>, %arg10: memref<1x72xf32, #tpu.memory_space<vmem>>, %arg11: memref<180x200xf32, #tpu.memory_space<vmem>>, %arg12: memref<1x200xf32, #tpu.memory_space<vmem>>, %arg13: memref<2x200xf32, #tpu.memory_space<vmem>>, %arg14: memref<2x2xf32, #tpu.memory_space<vmem>>) attributes {dimension_semantics = [], scalar_prefetch = 0 : i64, scratch_operands = 0 : i64, tpu.core_type = #tpu.core_type<tc>} {
    %c0 = arith.constant 0 : index
    %c0_0 = arith.constant 0 : index
    %0 = vector.load %arg0[%c0, %c0_0] : memref<96x48xf32, #tpu.memory_space<vmem>>, vector<96x48xf32>
    %cst = arith.constant 0.000000e+00 : f32
    %1 = vector.broadcast %cst : f32 to vector<24x288xf32>
    %cst_1 = arith.constant 0.000000e+00 : f32
    %2 = vector.broadcast %cst_1 : f32 to vector<24x288xf32>
    %c0_2 = arith.constant 0 : index
    %c0_3 = arith.constant 0 : index
    %c0_4 = arith.constant 0 : index
    %3 = vector.load %arg1[%c0_2, %c0_3, %c0_4] : memref<5x48x288xf32, #tpu.memory_space<vmem>>, vector<1x48x288xf32>
    %4 = vector.shape_cast %3 : vector<1x48x288xf32> to vector<48x288xf32>
    %cst_5 = arith.constant dense<0.000000e+00> : vector<96x288xf32>
    %5 = tpu.matmul %0, %4, %cst_5 {dimension_numbers = #tpu.dot_dimension_numbers<[1], [0], [0], [1], [0, 0, 1, 1], [], []>} : vector<96x48xf32>, vector<48x288xf32>, vector<96x288xf32> -> vector<96x288xf32>
    %c0_6 = arith.constant 0 : index
    %c0_7 = arith.constant 0 : index
    %c0_8 = arith.constant 0 : index
    %6 = vector.load %arg2[%c0_6, %c0_7, %c0_8] : memref<5x24x48xf32, #tpu.memory_space<vmem>>, vector<1x24x48xf32>
    %7 = vector.shape_cast %6 : vector<1x24x48xf32> to vector<24x48xf32>
    %8 = vector.extract_strided_slice %5 {offsets = [0, 0], sizes = [48, 288], strides = [1, 1]} : vector<96x288xf32> to vector<48x288xf32>
    %cst_9 = arith.constant dense<0.000000e+00> : vector<24x288xf32>
    %9 = tpu.matmul %7, %8, %cst_9 {dimension_numbers = #tpu.dot_dimension_numbers<[1], [0], [0], [1], [0, 0, 1, 1], [], []>} : vector<24x48xf32>, vector<48x288xf32>, vector<24x288xf32> -> vector<24x288xf32>
    %10 = arith.addf %1, %9 : vector<24x288xf32>
    %11 = vector.extract_strided_slice %5 {offsets = [48, 0], sizes = [48, 288], strides = [1, 1]} : vector<96x288xf32> to vector<48x288xf32>
    %cst_10 = arith.constant dense<0.000000e+00> : vector<24x288xf32>
    %12 = tpu.matmul %7, %11, %cst_10 {dimension_numbers = #tpu.dot_dimension_numbers<[1], [0], [0], [1], [0, 0, 1, 1], [], []>} : vector<24x48xf32>, vector<48x288xf32>, vector<24x288xf32> -> vector<24x288xf32>
    %13 = arith.addf %2, %12 : vector<24x288xf32>
    %c1 = arith.constant 1 : index
    %c0_11 = arith.constant 0 : index
    %c0_12 = arith.constant 0 : index
    %14 = vector.load %arg1[%c1, %c0_11, %c0_12] : memref<5x48x288xf32, #tpu.memory_space<vmem>>, vector<1x48x288xf32>
    %15 = vector.shape_cast %14 : vector<1x48x288xf32> to vector<48x288xf32>
    %cst_13 = arith.constant dense<0.000000e+00> : vector<96x288xf32>
    %16 = tpu.matmul %0, %15, %cst_13 {dimension_numbers = #tpu.dot_dimension_numbers<[1], [0], [0], [1], [0, 0, 1, 1], [], []>} : vector<96x48xf32>, vector<48x288xf32>, vector<96x288xf32> -> vector<96x288xf32>
    %c1_14 = arith.constant 1 : index
    %c0_15 = arith.constant 0 : index
    %c0_16 = arith.constant 0 : index
    %17 = vector.load %arg2[%c1_14, %c0_15, %c0_16] : memref<5x24x48xf32, #tpu.memory_space<vmem>>, vector<1x24x48xf32>
    %18 = vector.shape_cast %17 : vector<1x24x48xf32> to vector<24x48xf32>
    %19 = vector.extract_strided_slice %16 {offsets = [0, 0], sizes = [48, 288], strides = [1, 1]} : vector<96x288xf32> to vector<48x288xf32>
    %cst_17 = arith.constant dense<0.000000e+00> : vector<24x288xf32>
    %20 = tpu.matmul %18, %19, %cst_17 {dimension_numbers = #tpu.dot_dimension_numbers<[1], [0], [0], [1], [0, 0, 1, 1], [], []>} : vector<24x48xf32>, vector<48x288xf32>, vector<24x288xf32> -> vector<24x288xf32>
    %21 = arith.addf %10, %20 : vector<24x288xf32>
    %22 = vector.extract_strided_slice %16 {offsets = [48, 0], sizes = [48, 288], strides = [1, 1]} : vector<96x288xf32> to vector<48x288xf32>
    %cst_18 = arith.constant dense<0.000000e+00> : vector<24x288xf32>
    %23 = tpu.matmul %18, %22, %cst_18 {dimension_numbers = #tpu.dot_dimension_numbers<[1], [0], [0], [1], [0, 0, 1, 1], [], []>} : vector<24x48xf32>, vector<48x288xf32>, vector<24x288xf32> -> vector<24x288xf32>
    %24 = arith.addf %13, %23 : vector<24x288xf32>
    %c2 = arith.constant 2 : index
    %c0_19 = arith.constant 0 : index
    %c0_20 = arith.constant 0 : index
    %25 = vector.load %arg1[%c2, %c0_19, %c0_20] : memref<5x48x288xf32, #tpu.memory_space<vmem>>, vector<1x48x288xf32>
    %26 = vector.shape_cast %25 : vector<1x48x288xf32> to vector<48x288xf32>
    %cst_21 = arith.constant dense<0.000000e+00> : vector<96x288xf32>
    %27 = tpu.matmul %0, %26, %cst_21 {dimension_numbers = #tpu.dot_dimension_numbers<[1], [0], [0], [1], [0, 0, 1, 1], [], []>} : vector<96x48xf32>, vector<48x288xf32>, vector<96x288xf32> -> vector<96x288xf32>
    %c2_22 = arith.constant 2 : index
    %c0_23 = arith.constant 0 : index
    %c0_24 = arith.constant 0 : index
    %28 = vector.load %arg2[%c2_22, %c0_23, %c0_24] : memref<5x24x48xf32, #tpu.memory_space<vmem>>, vector<1x24x48xf32>
    %29 = vector.shape_cast %28 : vector<1x24x48xf32> to vector<24x48xf32>
    %30 = vector.extract_strided_slice %27 {offsets = [0, 0], sizes = [48, 288], strides = [1, 1]} : vector<96x288xf32> to vector<48x288xf32>
    %cst_25 = arith.constant dense<0.000000e+00> : vector<24x288xf32>
    %31 = tpu.matmul %29, %30, %cst_25 {dimension_numbers = #tpu.dot_dimension_numbers<[1], [0], [0], [1], [0, 0, 1, 1], [], []>} : vector<24x48xf32>, vector<48x288xf32>, vector<24x288xf32> -> vector<24x288xf32>
    %32 = arith.addf %21, %31 : vector<24x288xf32>
    %33 = vector.extract_strided_slice %27 {offsets = [48, 0], sizes = [48, 288], strides = [1, 1]} : vector<96x288xf32> to vector<48x288xf32>
    %cst_26 = arith.constant dense<0.000000e+00> : vector<24x288xf32>
    %34 = tpu.matmul %29, %33, %cst_26 {dimension_numbers = #tpu.dot_dimension_numbers<[1], [0], [0], [1], [0, 0, 1, 1], [], []>} : vector<24x48xf32>, vector<48x288xf32>, vector<24x288xf32> -> vector<24x288xf32>
    %35 = arith.addf %24, %34 : vector<24x288xf32>
    %c3 = arith.constant 3 : index
    %c0_27 = arith.constant 0 : index
    %c0_28 = arith.constant 0 : index
    %36 = vector.load %arg1[%c3, %c0_27, %c0_28] : memref<5x48x288xf32, #tpu.memory_space<vmem>>, vector<1x48x288xf32>
    %37 = vector.shape_cast %36 : vector<1x48x288xf32> to vector<48x288xf32>
    %cst_29 = arith.constant dense<0.000000e+00> : vector<96x288xf32>
    %38 = tpu.matmul %0, %37, %cst_29 {dimension_numbers = #tpu.dot_dimension_numbers<[1], [0], [0], [1], [0, 0, 1, 1], [], []>} : vector<96x48xf32>, vector<48x288xf32>, vector<96x288xf32> -> vector<96x288xf32>
    %c3_30 = arith.constant 3 : index
    %c0_31 = arith.constant 0 : index
    %c0_32 = arith.constant 0 : index
    %39 = vector.load %arg2[%c3_30, %c0_31, %c0_32] : memref<5x24x48xf32, #tpu.memory_space<vmem>>, vector<1x24x48xf32>
    %40 = vector.shape_cast %39 : vector<1x24x48xf32> to vector<24x48xf32>
    %41 = vector.extract_strided_slice %38 {offsets = [0, 0], sizes = [48, 288], strides = [1, 1]} : vector<96x288xf32> to vector<48x288xf32>
    %cst_33 = arith.constant dense<0.000000e+00> : vector<24x288xf32>
    %42 = tpu.matmul %40, %41, %cst_33 {dimension_numbers = #tpu.dot_dimension_numbers<[1], [0], [0], [1], [0, 0, 1, 1], [], []>} : vector<24x48xf32>, vector<48x288xf32>, vector<24x288xf32> -> vector<24x288xf32>
    %43 = arith.addf %32, %42 : vector<24x288xf32>
    %44 = vector.extract_strided_slice %38 {offsets = [48, 0], sizes = [48, 288], strides = [1, 1]} : vector<96x288xf32> to vector<48x288xf32>
    %cst_34 = arith.constant dense<0.000000e+00> : vector<24x288xf32>
    %45 = tpu.matmul %40, %44, %cst_34 {dimension_numbers = #tpu.dot_dimension_numbers<[1], [0], [0], [1], [0, 0, 1, 1], [], []>} : vector<24x48xf32>, vector<48x288xf32>, vector<24x288xf32> -> vector<24x288xf32>
    %46 = arith.addf %35, %45 : vector<24x288xf32>
    %c4 = arith.constant 4 : index
    %c0_35 = arith.constant 0 : index
    %c0_36 = arith.constant 0 : index
    %47 = vector.load %arg1[%c4, %c0_35, %c0_36] : memref<5x48x288xf32, #tpu.memory_space<vmem>>, vector<1x48x288xf32>
    %48 = vector.shape_cast %47 : vector<1x48x288xf32> to vector<48x288xf32>
    %cst_37 = arith.constant dense<0.000000e+00> : vector<96x288xf32>
    %49 = tpu.matmul %0, %48, %cst_37 {dimension_numbers = #tpu.dot_dimension_numbers<[1], [0], [0], [1], [0, 0, 1, 1], [], []>} : vector<96x48xf32>, vector<48x288xf32>, vector<96x288xf32> -> vector<96x288xf32>
    %c4_38 = arith.constant 4 : index
    %c0_39 = arith.constant 0 : index
    %c0_40 = arith.constant 0 : index
    %50 = vector.load %arg2[%c4_38, %c0_39, %c0_40] : memref<5x24x48xf32, #tpu.memory_space<vmem>>, vector<1x24x48xf32>
    %51 = vector.shape_cast %50 : vector<1x24x48xf32> to vector<24x48xf32>
    %52 = vector.extract_strided_slice %49 {offsets = [0, 0], sizes = [48, 288], strides = [1, 1]} : vector<96x288xf32> to vector<48x288xf32>
    %cst_41 = arith.constant dense<0.000000e+00> : vector<24x288xf32>
    %53 = tpu.matmul %51, %52, %cst_41 {dimension_numbers = #tpu.dot_dimension_numbers<[1], [0], [0], [1], [0, 0, 1, 1], [], []>} : vector<24x48xf32>, vector<48x288xf32>, vector<24x288xf32> -> vector<24x288xf32>
    %54 = arith.addf %43, %53 : vector<24x288xf32>
    %55 = vector.extract_strided_slice %49 {offsets = [48, 0], sizes = [48, 288], strides = [1, 1]} : vector<96x288xf32> to vector<48x288xf32>
    %cst_42 = arith.constant dense<0.000000e+00> : vector<24x288xf32>
    %56 = tpu.matmul %51, %55, %cst_42 {dimension_numbers = #tpu.dot_dimension_numbers<[1], [0], [0], [1], [0, 0, 1, 1], [], []>} : vector<24x48xf32>, vector<48x288xf32>, vector<24x288xf32> -> vector<24x288xf32>
    %57 = arith.addf %46, %56 : vector<24x288xf32>
    %c0_43 = arith.constant 0 : index
    %c0_44 = arith.constant 0 : index
    %58 = vector.load %arg3[%c0_43, %c0_44] : memref<1x288xf32, #tpu.memory_space<vmem>>, vector<1x288xf32>
    %59 = vector.broadcast %58 : vector<1x288xf32> to vector<24x288xf32>
    %60 = arith.addf %54, %59 : vector<24x288xf32>
    %61 = vector.shape_cast %60 : vector<24x288xf32> to vector<1x24x288xf32>
    %cst_45 = arith.constant dense<0.000000e+00> : vector<1xf32>
    %62 = vector.multi_reduction <add>, %61, %cst_45 [1, 2] : vector<1x24x288xf32> to vector<1xf32>
    %63 = vector.shape_cast %62 : vector<1xf32> to vector<1x1x1xf32>
    %64 = vector.extract %63[0, 0, 0] : f32 from vector<1x1x1xf32>
    %65 = vector.broadcast %64 : f32 to vector<1x1xf32>
    %cst_46 = arith.constant 6.912000e+03 : f32
    %66 = vector.broadcast %cst_46 : f32 to vector<1x1xf32>
    %67 = arith.divf %65, %66 : vector<1x1xf32>
    %68 = vector.broadcast %67 : vector<1x1xf32> to vector<24x288xf32>
    %69 = arith.subf %60, %68 : vector<24x288xf32>
    %70 = arith.mulf %69, %69 : vector<24x288xf32>
    %71 = vector.shape_cast %70 : vector<24x288xf32> to vector<1x24x288xf32>
    %cst_47 = arith.constant dense<0.000000e+00> : vector<1xf32>
    %72 = vector.multi_reduction <add>, %71, %cst_47 [1, 2] : vector<1x24x288xf32> to vector<1xf32>
    %73 = vector.shape_cast %72 : vector<1xf32> to vector<1x1x1xf32>
    %74 = vector.extract %73[0, 0, 0] : f32 from vector<1x1x1xf32>
    %75 = vector.broadcast %74 : f32 to vector<1x1xf32>
    %cst_48 = arith.constant 6.911000e+03 : f32
    %76 = vector.broadcast %cst_48 : f32 to vector<1x1xf32>
    %77 = arith.divf %75, %76 : vector<1x1xf32>
    %c0_49 = arith.constant 0 : index
    %c0_50 = arith.constant 0 : index
    %78 = vector.load %arg4[%c0_49, %c0_50] : memref<1x288xf32, #tpu.memory_space<vmem>>, vector<1x288xf32>
    %79 = math.rsqrt %77 : vector<1x1xf32>
    %80 = vector.broadcast %79 : vector<1x1xf32> to vector<24x288xf32>
    %81 = arith.mulf %69, %80 : vector<24x288xf32>
    %82 = vector.broadcast %78 : vector<1x288xf32> to vector<24x288xf32>
    %83 = arith.mulf %82, %81 : vector<24x288xf32>
    %c0_51 = arith.constant 0 : index
    %c0_52 = arith.constant 0 : index
    %84 = vector.load %arg5[%c0_51, %c0_52] : memref<1x288xf32, #tpu.memory_space<vmem>>, vector<1x288xf32>
    %85 = vector.broadcast %84 : vector<1x288xf32> to vector<24x288xf32>
    %86 = arith.addf %83, %85 : vector<24x288xf32>
    %cst_53 = arith.constant 0.000000e+00 : f32
    %87 = vector.broadcast %cst_53 : f32 to vector<24x288xf32>
    %88 = arith.maximumf %86, %87 : vector<24x288xf32>
    %89 = vector.extract_strided_slice %88 {offsets = [0, 0], sizes = [23, 288], strides = [1, 1]} : vector<24x288xf32> to vector<23x288xf32>
    %90 = vector.extract_strided_slice %88 {offsets = [1, 0], sizes = [23, 288], strides = [1, 1]} : vector<24x288xf32> to vector<23x288xf32>
    %91 = arith.maximumf %89, %90 : vector<23x288xf32>
    %92 = vector.extract_strided_slice %91 {offsets = [0, 0], sizes = [23, 276], strides = [1, 1]} : vector<23x288xf32> to vector<23x276xf32>
    %93 = vector.extract_strided_slice %91 {offsets = [0, 12], sizes = [23, 276], strides = [1, 1]} : vector<23x288xf32> to vector<23x276xf32>
    %94 = arith.maximumf %92, %93 : vector<23x276xf32>
    %cst_54 = arith.constant 0.000000e+00 : f32
    %95 = vector.broadcast %cst_54 : f32 to vector<6x72xf32>
    %c0_55 = arith.constant 0 : index
    %c0_56 = arith.constant 0 : index
    %c0_57 = arith.constant 0 : index
    %96 = vector.load %arg6[%c0_55, %c0_56, %c0_57] : memref<3x276x72xf32, #tpu.memory_space<vmem>>, vector<1x276x72xf32>
    %97 = vector.shape_cast %96 : vector<1x276x72xf32> to vector<276x72xf32>
    %cst_58 = arith.constant dense<0.000000e+00> : vector<23x72xf32>
    %98 = tpu.matmul %94, %97, %cst_58 {dimension_numbers = #tpu.dot_dimension_numbers<[1], [0], [0], [1], [0, 0, 1, 1], [], []>} : vector<23x276xf32>, vector<276x72xf32>, vector<23x72xf32> -> vector<23x72xf32>
    %c0_59 = arith.constant 0 : index
    %c0_60 = arith.constant 0 : index
    %c0_61 = arith.constant 0 : index
    %99 = vector.load %arg7[%c0_59, %c0_60, %c0_61] : memref<3x6x23xf32, #tpu.memory_space<vmem>>, vector<1x6x23xf32>
    %100 = vector.shape_cast %99 : vector<1x6x23xf32> to vector<6x23xf32>
    %cst_62 = arith.constant dense<0.000000e+00> : vector<6x72xf32>
    %101 = tpu.matmul %100, %98, %cst_62 {dimension_numbers = #tpu.dot_dimension_numbers<[1], [0], [0], [1], [0, 0, 1, 1], [], []>} : vector<6x23xf32>, vector<23x72xf32>, vector<6x72xf32> -> vector<6x72xf32>
    %102 = arith.addf %95, %101 : vector<6x72xf32>
    %c1_63 = arith.constant 1 : index
    %c0_64 = arith.constant 0 : index
    %c0_65 = arith.constant 0 : index
    %103 = vector.load %arg6[%c1_63, %c0_64, %c0_65] : memref<3x276x72xf32, #tpu.memory_space<vmem>>, vector<1x276x72xf32>
    %104 = vector.shape_cast %103 : vector<1x276x72xf32> to vector<276x72xf32>
    %cst_66 = arith.constant dense<0.000000e+00> : vector<23x72xf32>
    %105 = tpu.matmul %94, %104, %cst_66 {dimension_numbers = #tpu.dot_dimension_numbers<[1], [0], [0], [1], [0, 0, 1, 1], [], []>} : vector<23x276xf32>, vector<276x72xf32>, vector<23x72xf32> -> vector<23x72xf32>
    %c1_67 = arith.constant 1 : index
    %c0_68 = arith.constant 0 : index
    %c0_69 = arith.constant 0 : index
    %106 = vector.load %arg7[%c1_67, %c0_68, %c0_69] : memref<3x6x23xf32, #tpu.memory_space<vmem>>, vector<1x6x23xf32>
    %107 = vector.shape_cast %106 : vector<1x6x23xf32> to vector<6x23xf32>
    %cst_70 = arith.constant dense<0.000000e+00> : vector<6x72xf32>
    %108 = tpu.matmul %107, %105, %cst_70 {dimension_numbers = #tpu.dot_dimension_numbers<[1], [0], [0], [1], [0, 0, 1, 1], [], []>} : vector<6x23xf32>, vector<23x72xf32>, vector<6x72xf32> -> vector<6x72xf32>
    %109 = arith.addf %102, %108 : vector<6x72xf32>
    %c2_71 = arith.constant 2 : index
    %c0_72 = arith.constant 0 : index
    %c0_73 = arith.constant 0 : index
    %110 = vector.load %arg6[%c2_71, %c0_72, %c0_73] : memref<3x276x72xf32, #tpu.memory_space<vmem>>, vector<1x276x72xf32>
    %111 = vector.shape_cast %110 : vector<1x276x72xf32> to vector<276x72xf32>
    %cst_74 = arith.constant dense<0.000000e+00> : vector<23x72xf32>
    %112 = tpu.matmul %94, %111, %cst_74 {dimension_numbers = #tpu.dot_dimension_numbers<[1], [0], [0], [1], [0, 0, 1, 1], [], []>} : vector<23x276xf32>, vector<276x72xf32>, vector<23x72xf32> -> vector<23x72xf32>
    %c2_75 = arith.constant 2 : index
    %c0_76 = arith.constant 0 : index
    %c0_77 = arith.constant 0 : index
    %113 = vector.load %arg7[%c2_75, %c0_76, %c0_77] : memref<3x6x23xf32, #tpu.memory_space<vmem>>, vector<1x6x23xf32>
    %114 = vector.shape_cast %113 : vector<1x6x23xf32> to vector<6x23xf32>
    %cst_78 = arith.constant dense<0.000000e+00> : vector<6x72xf32>
    %115 = tpu.matmul %114, %112, %cst_78 {dimension_numbers = #tpu.dot_dimension_numbers<[1], [0], [0], [1], [0, 0, 1, 1], [], []>} : vector<6x23xf32>, vector<23x72xf32>, vector<6x72xf32> -> vector<6x72xf32>
    %116 = arith.addf %109, %115 : vector<6x72xf32>
    %c0_79 = arith.constant 0 : index
    %c0_80 = arith.constant 0 : index
    %117 = vector.load %arg8[%c0_79, %c0_80] : memref<1x72xf32, #tpu.memory_space<vmem>>, vector<1x72xf32>
    %118 = vector.broadcast %117 : vector<1x72xf32> to vector<6x72xf32>
    %119 = arith.addf %116, %118 : vector<6x72xf32>
    %120 = vector.shape_cast %119 : vector<6x72xf32> to vector<1x6x72xf32>
    %cst_81 = arith.constant dense<0.000000e+00> : vector<1xf32>
    %121 = vector.multi_reduction <add>, %120, %cst_81 [1, 2] : vector<1x6x72xf32> to vector<1xf32>
    %122 = vector.shape_cast %121 : vector<1xf32> to vector<1x1x1xf32>
    %123 = vector.extract %122[0, 0, 0] : f32 from vector<1x1x1xf32>
    %124 = vector.broadcast %123 : f32 to vector<1x1xf32>
    %cst_82 = arith.constant 4.320000e+02 : f32
    %125 = vector.broadcast %cst_82 : f32 to vector<1x1xf32>
    %126 = arith.divf %124, %125 : vector<1x1xf32>
    %127 = vector.broadcast %126 : vector<1x1xf32> to vector<6x72xf32>
    %128 = arith.subf %119, %127 : vector<6x72xf32>
    %129 = arith.mulf %128, %128 : vector<6x72xf32>
    %130 = vector.shape_cast %129 : vector<6x72xf32> to vector<1x6x72xf32>
    %cst_83 = arith.constant dense<0.000000e+00> : vector<1xf32>
    %131 = vector.multi_reduction <add>, %130, %cst_83 [1, 2] : vector<1x6x72xf32> to vector<1xf32>
    %132 = vector.shape_cast %131 : vector<1xf32> to vector<1x1x1xf32>
    %133 = vector.extract %132[0, 0, 0] : f32 from vector<1x1x1xf32>
    %134 = vector.broadcast %133 : f32 to vector<1x1xf32>
    %cst_84 = arith.constant 4.310000e+02 : f32
    %135 = vector.broadcast %cst_84 : f32 to vector<1x1xf32>
    %136 = arith.divf %134, %135 : vector<1x1xf32>
    %c0_85 = arith.constant 0 : index
    %c0_86 = arith.constant 0 : index
    %137 = vector.load %arg9[%c0_85, %c0_86] : memref<1x72xf32, #tpu.memory_space<vmem>>, vector<1x72xf32>
    %138 = math.rsqrt %136 : vector<1x1xf32>
    %139 = vector.broadcast %138 : vector<1x1xf32> to vector<6x72xf32>
    %140 = arith.mulf %128, %139 : vector<6x72xf32>
    %141 = vector.broadcast %137 : vector<1x72xf32> to vector<6x72xf32>
    %142 = arith.mulf %141, %140 : vector<6x72xf32>
    %c0_87 = arith.constant 0 : index
    %c0_88 = arith.constant 0 : index
    %143 = vector.load %arg10[%c0_87, %c0_88] : memref<1x72xf32, #tpu.memory_space<vmem>>, vector<1x72xf32>
    %144 = vector.broadcast %143 : vector<1x72xf32> to vector<6x72xf32>
    %145 = arith.addf %142, %144 : vector<6x72xf32>
    %cst_89 = arith.constant 0.000000e+00 : f32
    %146 = vector.broadcast %cst_89 : f32 to vector<6x72xf32>
    %147 = arith.maximumf %145, %146 : vector<6x72xf32>
    %148 = vector.extract_strided_slice %147 {offsets = [0, 0], sizes = [5, 72], strides = [1, 1]} : vector<6x72xf32> to vector<5x72xf32>
    %149 = vector.extract_strided_slice %147 {offsets = [1, 0], sizes = [5, 72], strides = [1, 1]} : vector<6x72xf32> to vector<5x72xf32>
    %150 = arith.maximumf %148, %149 : vector<5x72xf32>
    %151 = vector.extract_strided_slice %150 {offsets = [0, 0], sizes = [5, 60], strides = [1, 1]} : vector<5x72xf32> to vector<5x60xf32>
    %152 = vector.extract_strided_slice %150 {offsets = [0, 12], sizes = [5, 60], strides = [1, 1]} : vector<5x72xf32> to vector<5x60xf32>
    %153 = arith.maximumf %151, %152 : vector<5x60xf32>
    %154 = vector.extract_strided_slice %153 {offsets = [0, 0], sizes = [1, 60], strides = [1, 1]} : vector<5x60xf32> to vector<1x60xf32>
    %155 = vector.extract_strided_slice %153 {offsets = [2, 0], sizes = [1, 60], strides = [1, 1]} : vector<5x60xf32> to vector<1x60xf32>
    %156 = vector.extract_strided_slice %153 {offsets = [4, 0], sizes = [1, 60], strides = [1, 1]} : vector<5x60xf32> to vector<1x60xf32>
    %157 = tpu.concatenate %154, %155, %156 in 1 : vector<1x60xf32>, vector<1x60xf32>, vector<1x60xf32> -> vector<1x180xf32>
    %c0_90 = arith.constant 0 : index
    %c0_91 = arith.constant 0 : index
    %158 = vector.load %arg11[%c0_90, %c0_91] : memref<180x200xf32, #tpu.memory_space<vmem>>, vector<180x200xf32>
    %cst_92 = arith.constant dense<0.000000e+00> : vector<1x200xf32>
    %159 = tpu.matmul %157, %158, %cst_92 {dimension_numbers = #tpu.dot_dimension_numbers<[1], [0], [0], [1], [0, 0, 1, 1], [], []>} : vector<1x180xf32>, vector<180x200xf32>, vector<1x200xf32> -> vector<1x200xf32>
    %c0_93 = arith.constant 0 : index
    %c0_94 = arith.constant 0 : index
    %160 = vector.load %arg12[%c0_93, %c0_94] : memref<1x200xf32, #tpu.memory_space<vmem>>, vector<1x200xf32>
    %161 = arith.addf %159, %160 : vector<1x200xf32>
    %cst_95 = arith.constant 0.000000e+00 : f32
    %162 = vector.broadcast %cst_95 : f32 to vector<1x200xf32>
    %163 = arith.maximumf %161, %162 : vector<1x200xf32>
    %c0_96 = arith.constant 0 : index
    %c0_97 = arith.constant 0 : index
    %164 = vector.load %arg3[%c0_96, %c0_97] : memref<1x288xf32, #tpu.memory_space<vmem>>, vector<1x288xf32>
    %165 = vector.broadcast %164 : vector<1x288xf32> to vector<24x288xf32>
    %166 = arith.addf %57, %165 : vector<24x288xf32>
    %167 = vector.shape_cast %166 : vector<24x288xf32> to vector<1x24x288xf32>
    %cst_98 = arith.constant dense<0.000000e+00> : vector<1xf32>
    %168 = vector.multi_reduction <add>, %167, %cst_98 [1, 2] : vector<1x24x288xf32> to vector<1xf32>
    %169 = vector.shape_cast %168 : vector<1xf32> to vector<1x1x1xf32>
    %170 = vector.extract %169[0, 0, 0] : f32 from vector<1x1x1xf32>
    %171 = vector.broadcast %170 : f32 to vector<1x1xf32>
    %cst_99 = arith.constant 6.912000e+03 : f32
    %172 = vector.broadcast %cst_99 : f32 to vector<1x1xf32>
    %173 = arith.divf %171, %172 : vector<1x1xf32>
    %174 = vector.broadcast %173 : vector<1x1xf32> to vector<24x288xf32>
    %175 = arith.subf %166, %174 : vector<24x288xf32>
    %176 = arith.mulf %175, %175 : vector<24x288xf32>
    %177 = vector.shape_cast %176 : vector<24x288xf32> to vector<1x24x288xf32>
    %cst_100 = arith.constant dense<0.000000e+00> : vector<1xf32>
    %178 = vector.multi_reduction <add>, %177, %cst_100 [1, 2] : vector<1x24x288xf32> to vector<1xf32>
    %179 = vector.shape_cast %178 : vector<1xf32> to vector<1x1x1xf32>
    %180 = vector.extract %179[0, 0, 0] : f32 from vector<1x1x1xf32>
    %181 = vector.broadcast %180 : f32 to vector<1x1xf32>
    %cst_101 = arith.constant 6.911000e+03 : f32
    %182 = vector.broadcast %cst_101 : f32 to vector<1x1xf32>
    %183 = arith.divf %181, %182 : vector<1x1xf32>
    %c0_102 = arith.constant 0 : index
    %c0_103 = arith.constant 0 : index
    %184 = vector.load %arg4[%c0_102, %c0_103] : memref<1x288xf32, #tpu.memory_space<vmem>>, vector<1x288xf32>
    %185 = math.rsqrt %183 : vector<1x1xf32>
    %186 = vector.broadcast %185 : vector<1x1xf32> to vector<24x288xf32>
    %187 = arith.mulf %175, %186 : vector<24x288xf32>
    %188 = vector.broadcast %184 : vector<1x288xf32> to vector<24x288xf32>
    %189 = arith.mulf %188, %187 : vector<24x288xf32>
    %c0_104 = arith.constant 0 : index
    %c0_105 = arith.constant 0 : index
    %190 = vector.load %arg5[%c0_104, %c0_105] : memref<1x288xf32, #tpu.memory_space<vmem>>, vector<1x288xf32>
    %191 = vector.broadcast %190 : vector<1x288xf32> to vector<24x288xf32>
    %192 = arith.addf %189, %191 : vector<24x288xf32>
    %cst_106 = arith.constant 0.000000e+00 : f32
    %193 = vector.broadcast %cst_106 : f32 to vector<24x288xf32>
    %194 = arith.maximumf %192, %193 : vector<24x288xf32>
    %195 = vector.extract_strided_slice %194 {offsets = [0, 0], sizes = [23, 288], strides = [1, 1]} : vector<24x288xf32> to vector<23x288xf32>
    %196 = vector.extract_strided_slice %194 {offsets = [1, 0], sizes = [23, 288], strides = [1, 1]} : vector<24x288xf32> to vector<23x288xf32>
    %197 = arith.maximumf %195, %196 : vector<23x288xf32>
    %198 = vector.extract_strided_slice %197 {offsets = [0, 0], sizes = [23, 276], strides = [1, 1]} : vector<23x288xf32> to vector<23x276xf32>
    %199 = vector.extract_strided_slice %197 {offsets = [0, 12], sizes = [23, 276], strides = [1, 1]} : vector<23x288xf32> to vector<23x276xf32>
    %200 = arith.maximumf %198, %199 : vector<23x276xf32>
    %cst_107 = arith.constant 0.000000e+00 : f32
    %201 = vector.broadcast %cst_107 : f32 to vector<6x72xf32>
    %c0_108 = arith.constant 0 : index
    %c0_109 = arith.constant 0 : index
    %c0_110 = arith.constant 0 : index
    %202 = vector.load %arg6[%c0_108, %c0_109, %c0_110] : memref<3x276x72xf32, #tpu.memory_space<vmem>>, vector<1x276x72xf32>
    %203 = vector.shape_cast %202 : vector<1x276x72xf32> to vector<276x72xf32>
    %cst_111 = arith.constant dense<0.000000e+00> : vector<23x72xf32>
    %204 = tpu.matmul %200, %203, %cst_111 {dimension_numbers = #tpu.dot_dimension_numbers<[1], [0], [0], [1], [0, 0, 1, 1], [], []>} : vector<23x276xf32>, vector<276x72xf32>, vector<23x72xf32> -> vector<23x72xf32>
    %c0_112 = arith.constant 0 : index
    %c0_113 = arith.constant 0 : index
    %c0_114 = arith.constant 0 : index
    %205 = vector.load %arg7[%c0_112, %c0_113, %c0_114] : memref<3x6x23xf32, #tpu.memory_space<vmem>>, vector<1x6x23xf32>
    %206 = vector.shape_cast %205 : vector<1x6x23xf32> to vector<6x23xf32>
    %cst_115 = arith.constant dense<0.000000e+00> : vector<6x72xf32>
    %207 = tpu.matmul %206, %204, %cst_115 {dimension_numbers = #tpu.dot_dimension_numbers<[1], [0], [0], [1], [0, 0, 1, 1], [], []>} : vector<6x23xf32>, vector<23x72xf32>, vector<6x72xf32> -> vector<6x72xf32>
    %208 = arith.addf %201, %207 : vector<6x72xf32>
    %c1_116 = arith.constant 1 : index
    %c0_117 = arith.constant 0 : index
    %c0_118 = arith.constant 0 : index
    %209 = vector.load %arg6[%c1_116, %c0_117, %c0_118] : memref<3x276x72xf32, #tpu.memory_space<vmem>>, vector<1x276x72xf32>
    %210 = vector.shape_cast %209 : vector<1x276x72xf32> to vector<276x72xf32>
    %cst_119 = arith.constant dense<0.000000e+00> : vector<23x72xf32>
    %211 = tpu.matmul %200, %210, %cst_119 {dimension_numbers = #tpu.dot_dimension_numbers<[1], [0], [0], [1], [0, 0, 1, 1], [], []>} : vector<23x276xf32>, vector<276x72xf32>, vector<23x72xf32> -> vector<23x72xf32>
    %c1_120 = arith.constant 1 : index
    %c0_121 = arith.constant 0 : index
    %c0_122 = arith.constant 0 : index
    %212 = vector.load %arg7[%c1_120, %c0_121, %c0_122] : memref<3x6x23xf32, #tpu.memory_space<vmem>>, vector<1x6x23xf32>
    %213 = vector.shape_cast %212 : vector<1x6x23xf32> to vector<6x23xf32>
    %cst_123 = arith.constant dense<0.000000e+00> : vector<6x72xf32>
    %214 = tpu.matmul %213, %211, %cst_123 {dimension_numbers = #tpu.dot_dimension_numbers<[1], [0], [0], [1], [0, 0, 1, 1], [], []>} : vector<6x23xf32>, vector<23x72xf32>, vector<6x72xf32> -> vector<6x72xf32>
    %215 = arith.addf %208, %214 : vector<6x72xf32>
    %c2_124 = arith.constant 2 : index
    %c0_125 = arith.constant 0 : index
    %c0_126 = arith.constant 0 : index
    %216 = vector.load %arg6[%c2_124, %c0_125, %c0_126] : memref<3x276x72xf32, #tpu.memory_space<vmem>>, vector<1x276x72xf32>
    %217 = vector.shape_cast %216 : vector<1x276x72xf32> to vector<276x72xf32>
    %cst_127 = arith.constant dense<0.000000e+00> : vector<23x72xf32>
    %218 = tpu.matmul %200, %217, %cst_127 {dimension_numbers = #tpu.dot_dimension_numbers<[1], [0], [0], [1], [0, 0, 1, 1], [], []>} : vector<23x276xf32>, vector<276x72xf32>, vector<23x72xf32> -> vector<23x72xf32>
    %c2_128 = arith.constant 2 : index
    %c0_129 = arith.constant 0 : index
    %c0_130 = arith.constant 0 : index
    %219 = vector.load %arg7[%c2_128, %c0_129, %c0_130] : memref<3x6x23xf32, #tpu.memory_space<vmem>>, vector<1x6x23xf32>
    %220 = vector.shape_cast %219 : vector<1x6x23xf32> to vector<6x23xf32>
    %cst_131 = arith.constant dense<0.000000e+00> : vector<6x72xf32>
    %221 = tpu.matmul %220, %218, %cst_131 {dimension_numbers = #tpu.dot_dimension_numbers<[1], [0], [0], [1], [0, 0, 1, 1], [], []>} : vector<6x23xf32>, vector<23x72xf32>, vector<6x72xf32> -> vector<6x72xf32>
    %222 = arith.addf %215, %221 : vector<6x72xf32>
    %c0_132 = arith.constant 0 : index
    %c0_133 = arith.constant 0 : index
    %223 = vector.load %arg8[%c0_132, %c0_133] : memref<1x72xf32, #tpu.memory_space<vmem>>, vector<1x72xf32>
    %224 = vector.broadcast %223 : vector<1x72xf32> to vector<6x72xf32>
    %225 = arith.addf %222, %224 : vector<6x72xf32>
    %226 = vector.shape_cast %225 : vector<6x72xf32> to vector<1x6x72xf32>
    %cst_134 = arith.constant dense<0.000000e+00> : vector<1xf32>
    %227 = vector.multi_reduction <add>, %226, %cst_134 [1, 2] : vector<1x6x72xf32> to vector<1xf32>
    %228 = vector.shape_cast %227 : vector<1xf32> to vector<1x1x1xf32>
    %229 = vector.extract %228[0, 0, 0] : f32 from vector<1x1x1xf32>
    %230 = vector.broadcast %229 : f32 to vector<1x1xf32>
    %cst_135 = arith.constant 4.320000e+02 : f32
    %231 = vector.broadcast %cst_135 : f32 to vector<1x1xf32>
    %232 = arith.divf %230, %231 : vector<1x1xf32>
    %233 = vector.broadcast %232 : vector<1x1xf32> to vector<6x72xf32>
    %234 = arith.subf %225, %233 : vector<6x72xf32>
    %235 = arith.mulf %234, %234 : vector<6x72xf32>
    %236 = vector.shape_cast %235 : vector<6x72xf32> to vector<1x6x72xf32>
    %cst_136 = arith.constant dense<0.000000e+00> : vector<1xf32>
    %237 = vector.multi_reduction <add>, %236, %cst_136 [1, 2] : vector<1x6x72xf32> to vector<1xf32>
    %238 = vector.shape_cast %237 : vector<1xf32> to vector<1x1x1xf32>
    %239 = vector.extract %238[0, 0, 0] : f32 from vector<1x1x1xf32>
    %240 = vector.broadcast %239 : f32 to vector<1x1xf32>
    %cst_137 = arith.constant 4.310000e+02 : f32
    %241 = vector.broadcast %cst_137 : f32 to vector<1x1xf32>
    %242 = arith.divf %240, %241 : vector<1x1xf32>
    %c0_138 = arith.constant 0 : index
    %c0_139 = arith.constant 0 : index
    %243 = vector.load %arg9[%c0_138, %c0_139] : memref<1x72xf32, #tpu.memory_space<vmem>>, vector<1x72xf32>
    %244 = math.rsqrt %242 : vector<1x1xf32>
    %245 = vector.broadcast %244 : vector<1x1xf32> to vector<6x72xf32>
    %246 = arith.mulf %234, %245 : vector<6x72xf32>
    %247 = vector.broadcast %243 : vector<1x72xf32> to vector<6x72xf32>
    %248 = arith.mulf %247, %246 : vector<6x72xf32>
    %c0_140 = arith.constant 0 : index
    %c0_141 = arith.constant 0 : index
    %249 = vector.load %arg10[%c0_140, %c0_141] : memref<1x72xf32, #tpu.memory_space<vmem>>, vector<1x72xf32>
    %250 = vector.broadcast %249 : vector<1x72xf32> to vector<6x72xf32>
    %251 = arith.addf %248, %250 : vector<6x72xf32>
    %cst_142 = arith.constant 0.000000e+00 : f32
    %252 = vector.broadcast %cst_142 : f32 to vector<6x72xf32>
    %253 = arith.maximumf %251, %252 : vector<6x72xf32>
    %254 = vector.extract_strided_slice %253 {offsets = [0, 0], sizes = [5, 72], strides = [1, 1]} : vector<6x72xf32> to vector<5x72xf32>
    %255 = vector.extract_strided_slice %253 {offsets = [1, 0], sizes = [5, 72], strides = [1, 1]} : vector<6x72xf32> to vector<5x72xf32>
    %256 = arith.maximumf %254, %255 : vector<5x72xf32>
    %257 = vector.extract_strided_slice %256 {offsets = [0, 0], sizes = [5, 60], strides = [1, 1]} : vector<5x72xf32> to vector<5x60xf32>
    %258 = vector.extract_strided_slice %256 {offsets = [0, 12], sizes = [5, 60], strides = [1, 1]} : vector<5x72xf32> to vector<5x60xf32>
    %259 = arith.maximumf %257, %258 : vector<5x60xf32>
    %260 = vector.extract_strided_slice %259 {offsets = [0, 0], sizes = [1, 60], strides = [1, 1]} : vector<5x60xf32> to vector<1x60xf32>
    %261 = vector.extract_strided_slice %259 {offsets = [2, 0], sizes = [1, 60], strides = [1, 1]} : vector<5x60xf32> to vector<1x60xf32>
    %262 = vector.extract_strided_slice %259 {offsets = [4, 0], sizes = [1, 60], strides = [1, 1]} : vector<5x60xf32> to vector<1x60xf32>
    %263 = tpu.concatenate %260, %261, %262 in 1 : vector<1x60xf32>, vector<1x60xf32>, vector<1x60xf32> -> vector<1x180xf32>
    %c0_143 = arith.constant 0 : index
    %c0_144 = arith.constant 0 : index
    %264 = vector.load %arg11[%c0_143, %c0_144] : memref<180x200xf32, #tpu.memory_space<vmem>>, vector<180x200xf32>
    %cst_145 = arith.constant dense<0.000000e+00> : vector<1x200xf32>
    %265 = tpu.matmul %263, %264, %cst_145 {dimension_numbers = #tpu.dot_dimension_numbers<[1], [0], [0], [1], [0, 0, 1, 1], [], []>} : vector<1x180xf32>, vector<180x200xf32>, vector<1x200xf32> -> vector<1x200xf32>
    %c0_146 = arith.constant 0 : index
    %c0_147 = arith.constant 0 : index
    %266 = vector.load %arg12[%c0_146, %c0_147] : memref<1x200xf32, #tpu.memory_space<vmem>>, vector<1x200xf32>
    %267 = arith.addf %265, %266 : vector<1x200xf32>
    %cst_148 = arith.constant 0.000000e+00 : f32
    %268 = vector.broadcast %cst_148 : f32 to vector<1x200xf32>
    %269 = arith.maximumf %267, %268 : vector<1x200xf32>
    %270 = tpu.concatenate %163, %269 in 0 : vector<1x200xf32>, vector<1x200xf32> -> vector<2x200xf32>
    %c0_149 = arith.constant 0 : index
    %c0_150 = arith.constant 0 : index
    %271 = vector.load %arg13[%c0_149, %c0_150] : memref<2x200xf32, #tpu.memory_space<vmem>>, vector<2x200xf32>
    tpu.vector_store %arg13[%c0_149, %c0_150], %270 {strides = array<i32>} : memref<2x200xf32, #tpu.memory_space<vmem>>, vector<2x200xf32>,
    %272 = arith.mulf %270, %270 : vector<2x200xf32>
    %cst_151 = arith.constant dense<0.000000e+00> : vector<2xf32>
    %273 = vector.multi_reduction <add>, %272, %cst_151 [1] : vector<2x200xf32> to vector<2xf32>
    %274 = vector.shape_cast %273 : vector<2xf32> to vector<2x1xf32>
    %275 = arith.mulf %270, %270 : vector<2x200xf32>
    %cst_152 = arith.constant dense<0.000000e+00> : vector<2xf32>
    %276 = vector.multi_reduction <add>, %275, %cst_152 [1] : vector<2x200xf32> to vector<2xf32>
    %277 = vector.shape_cast %276 : vector<2xf32> to vector<1x2xf32>
    %cst_153 = arith.constant dense<0.000000e+00> : vector<2x2xf32>
    %278 = tpu.matmul %270, %270, %cst_153 {dimension_numbers = #tpu.dot_dimension_numbers<[1], [1], [0], [0], [0, 0, 1, 0], [], []>} : vector<2x200xf32>, vector<2x200xf32>, vector<2x2xf32> -> vector<2x2xf32>
    %cst_154 = arith.constant 2.000000e+00 : f32
    %279 = vector.broadcast %cst_154 : f32 to vector<2x2xf32>
    %280 = arith.mulf %279, %278 : vector<2x2xf32>
    %281 = vector.broadcast %274 : vector<2x1xf32> to vector<2x2xf32>
    %282 = arith.subf %281, %280 : vector<2x2xf32>
    %283 = vector.broadcast %277 : vector<1x2xf32> to vector<2x2xf32>
    %284 = arith.addf %282, %283 : vector<2x2xf32>
    %cst_155 = arith.constant -5.000000e-03 : f32
    %285 = vector.broadcast %cst_155 : f32 to vector<2x2xf32>
    %286 = arith.mulf %285, %284 : vector<2x2xf32>
    %287 = math.exp %286 : vector<2x2xf32>
    %c0_156 = arith.constant 0 : index
    %c0_157 = arith.constant 0 : index
    %288 = vector.load %arg14[%c0_156, %c0_157] : memref<2x2xf32, #tpu.memory_space<vmem>>, vector<2x2xf32>
    tpu.vector_store %arg14[%c0_156, %c0_157], %287 {strides = array<i32>} : memref<2x2xf32, #tpu.memory_space<vmem>>, vector<2x2xf32>,
    return
  }
}

</mosaic_0001>

<llo_original>
// kernel: fused_forward.1
$region0: #{fused_forward.1}
  #allocation0 [shape = 'u32[]', space=smem, size = 0x4, offset = 0x4, fixed_abs, tag = 'smem constant byte address 0x4 - core index']
  #allocation1 [shape = 'u32[144,128]{1,0:T(1,128)}', space=vmem, size = 0x12000, scoped, tag = 'internal scratch']
  %s0 = inlined_call_operand.vmem [shape: f32[96,48], index: 0, kind: input, shape index: {}]
  %s1 = inlined_call_operand.vmem [shape: f32[5,48,288], index: 1, kind: input, shape index: {}]
  %s2 = inlined_call_operand.vmem [shape: f32[5,24,48], index: 2, kind: input, shape index: {}]
  %s3 = inlined_call_operand.vmem [shape: f32[1,288], index: 3, kind: input, shape index: {}]
  %s4 = inlined_call_operand.vmem [shape: f32[1,288], index: 4, kind: input, shape index: {}]
  %s5 = inlined_call_operand.vmem [shape: f32[1,288], index: 5, kind: input, shape index: {}]
  %s6 = inlined_call_operand.vmem [shape: f32[3,276,72], index: 6, kind: input, shape index: {}]
  %s7 = inlined_call_operand.vmem [shape: f32[3,6,23], index: 7, kind: input, shape index: {}]
  %s8 = inlined_call_operand.vmem [shape: f32[1,72], index: 8, kind: input, shape index: {}]
  %s9 = inlined_call_operand.vmem [shape: f32[1,72], index: 9, kind: input, shape index: {}]
  %s10 = inlined_call_operand.vmem [shape: f32[1,72], index: 10, kind: input, shape index: {}]
  %s11 = inlined_call_operand.vmem [shape: f32[180,200], index: 11, kind: input, shape index: {}]
  %s12 = inlined_call_operand.vmem [shape: f32[1,200], index: 12, kind: input, shape index: {}]
  %s13 = inlined_call_operand.hbm [shape: f32[2,200], index: 13, kind: output, shape index: {0}]
  %s14 = inlined_call_operand.hbm [shape: f32[2,2], index: 14, kind: output, shape index: {1}]
  %15 = xla_tuple %s13, %s14
  %s16 = sld [smem:[#allocation0]]
  $region70: #{fused_forward.1} parent=0
    _
  %s18 = ssub.s32 1, %s16
  %s19 = scalar_select 0, %s18, %s16
  $region1: #{fused_forward.1} parent=0
    #allocation2 [shape = 'u8[2048]{0}', space=vmem, size = 0x800, scoped, tag = 'output window, operand 0, single buffered']
    #allocation3 [shape = 's32[1]{0}', space=sflag, size = 0x4, scoped, tag = 'scoped memory for fused_forward.1']
    #allocation4 [shape = 'u8[1024]{0}', space=vmem, size = 0x400, scoped, tag = 'output window, operand 1, single buffered']
    #allocation5 [shape = 's32[1]{0}', space=sflag, size = 0x4, scoped, tag = 'scoped memory for fused_forward.1']
    %20 = vsyncpa [#allocation3], 0
    %21 = vsyncpa [#allocation5], 0
    // Predicated region
    $region2: #{fused_forward.1} parent=1 // pred_check
      _
    $region3: #{fused_forward.1} parent=1 // pred_check_branch
      %23 = sbr.rel (0) target = $region5
    $region4: #{fused_forward.1} parent=1 // pred_region
      _
    $region5: #{fused_forward.1} parent=1 // pred_fallthru
      _
    // Predicated region
    $region6: #{fused_forward.1} parent=1 // pred_check
      _
    $region7: #{fused_forward.1} parent=1 // pred_check_branch
      %25 = sbr.rel (0) target = $region9
    $region8: #{fused_forward.1} parent=1 // pred_region
      _
    $region9: #{fused_forward.1} parent=1 // pred_fallthru
      _
    // Predicated region
    $region10: #{fused_forward.1} parent=1 // pred_check
      _
    $region11: #{fused_forward.1} parent=1 // pred_check_branch
      %27 = sbr.rel (0) target = $region13
    $region12: #{fused_forward.1} parent=1 // pred_region
      _
    $region13: #{fused_forward.1} parent=1 // pred_fallthru
      _
    // Predicated region
    $region14: #{fused_forward.1} parent=1 // pred_check
      _
    $region15: #{fused_forward.1} parent=1 // pred_check_branch
      %29 = sbr.rel (0) target = $region17
    $region16: #{fused_forward.1} parent=1 // pred_region
      _
    $region17: #{fused_forward.1} parent=1 // pred_fallthru
      _
    // Predicated region
    $region18: #{fused_forward.1} parent=1 // pred_check
      _
    $region19: #{fused_forward.1} parent=1 // pred_check_branch
      %31 = sbr.rel (0) target = $region21
    $region20: #{fused_forward.1} parent=1 // pred_region
      _
    $region21: #{fused_forward.1} parent=1 // pred_fallthru
      _
    // Predicated region
    $region22: #{fused_forward.1} parent=1 // pred_check
      _
    $region23: #{fused_forward.1} parent=1 // pred_check_branch
      %33 = sbr.rel (0) target = $region25
    $region24: #{fused_forward.1} parent=1 // pred_region
      _
    $region25: #{fused_forward.1} parent=1 // pred_fallthru
      _
    // Predicated region
    $region26: #{fused_forward.1} parent=1 // pred_check
      _
    $region27: #{fused_forward.1} parent=1 // pred_check_branch
      %35 = sbr.rel (0) target = $region29
    $region28: #{fused_forward.1} parent=1 // pred_region
      _
    $region29: #{fused_forward.1} parent=1 // pred_fallthru
      _
    // Predicated region
    $region30: #{fused_forward.1} parent=1 // pred_check
      _
    $region31: #{fused_forward.1} parent=1 // pred_check_branch
      %37 = sbr.rel (0) target = $region33
    $region32: #{fused_forward.1} parent=1 // pred_region
      _
    $region33: #{fused_forward.1} parent=1 // pred_fallthru
      _
    // Predicated region
    $region34: #{fused_forward.1} parent=1 // pred_check
      _
    $region35: #{fused_forward.1} parent=1 // pred_check_branch
      %39 = sbr.rel (0) target = $region37
    $region36: #{fused_forward.1} parent=1 // pred_region
      _
    $region37: #{fused_forward.1} parent=1 // pred_fallthru
      _
    // Predicated region
    $region38: #{fused_forward.1} parent=1 // pred_check
      _
    $region39: #{fused_forward.1} parent=1 // pred_check_branch
      %41 = sbr.rel (0) target = $region41
    $region40: #{fused_forward.1} parent=1 // pred_region
      _
    $region41: #{fused_forward.1} parent=1 // pred_fallthru
      _
    // Predicated region
    $region42: #{fused_forward.1} parent=1 // pred_check
      _
    $region43: #{fused_forward.1} parent=1 // pred_check_branch
      %43 = sbr.rel (0) target = $region45
    $region44: #{fused_forward.1} parent=1 // pred_region
      _
    $region45: #{fused_forward.1} parent=1 // pred_fallthru
      _
    // Predicated region
    $region46: #{fused_forward.1} parent=1 // pred_check
      _
    $region47: #{fused_forward.1} parent=1 // pred_check_branch
      %45 = sbr.rel (0) target = $region49
    $region48: #{fused_forward.1} parent=1 // pred_region
      _
    $region49: #{fused_forward.1} parent=1 // pred_fallthru
      _
    // Predicated region
    $region50: #{fused_forward.1} parent=1 // pred_check
      _
    $region51: #{fused_forward.1} parent=1 // pred_check_branch
      %47 = sbr.rel (0) target = $region53
    $region52: #{fused_forward.1} parent=1 // pred_region
      _
    $region53: #{fused_forward.1} parent=1 // pred_fallthru
      _
    %v48 = vld [vmem:[%s0] sm:$0xff]
    %v49 = vld [vmem:[%s0 + $0x8] sm:$0xff]
    %v50 = vld [vmem:[%s0 + $0x10] sm:$0xff]
    %v51 = vld [vmem:[%s0 + $0x18] sm:$0xff]
    %v52 = vld [vmem:[%s0 + $0x20] sm:$0xff]
    %v53 = vld [vmem:[%s0 + $0x28] sm:$0xff]
    %v54 = vld [vmem:[%s0 + $0x30] sm:$0xff]
    %v55 = vld [vmem:[%s0 + $0x38] sm:$0xff]
    %v56 = vld [vmem:[%s0 + $0x40] sm:$0xff]
    %v57 = vld [vmem:[%s0 + $0x48] sm:$0xff]
    %v58 = vld [vmem:[%s0 + $0x50] sm:$0xff]
    %v59 = vld [vmem:[%s0 + $0x58] sm:$0xff]
    %v60 = vld [vmem:[%s1] sm:$0xff]
    %v61 = vld [vmem:[%s1 + $0x8] sm:$0xff]
    %v62 = vld [vmem:[%s1 + $0x10] sm:$0xff]
    %v63 = vld [vmem:[%s1 + $0x18] sm:$0xff]
    %v64 = vld [vmem:[%s1 + $0x20] sm:$0xff]
    %v65 = vld [vmem:[%s1 + $0x28] sm:$0xff]
    %v66 = vld [vmem:[%s1 + $0x30] sm:$0xff]
    %v67 = vld [vmem:[%s1 + $0x38] sm:$0xff]
    %v68 = vld [vmem:[%s1 + $0x40] sm:$0xff]
    %v69 = vld [vmem:[%s1 + $0x48] sm:$0xff]
    %v70 = vld [vmem:[%s1 + $0x50] sm:$0xff]
    %v71 = vld [vmem:[%s1 + $0x58] sm:$0xff]
    %v72 = vld [vmem:[%s1 + $0x60] sm:$0xff]
    %v73 = vld [vmem:[%s1 + $0x68] sm:$0xff]
    %v74 = vld [vmem:[%s1 + $0x70] sm:$0xff]
    %v75 = vld [vmem:[%s1 + $0x78] sm:$0xff]
    %v76 = vld [vmem:[%s1 + $0x80] sm:$0xff]
    %v77 = vld [vmem:[%s1 + $0x88] sm:$0xff]
    %vm78 = vcmask 392192
    %v80 = vsel %vm78, %v48, 0
    %v83 = vsel %vm78, %v49, 0
    %v86 = vsel %vm78, %v50, 0
    %v89 = vsel %vm78, %v51, 0
    %v92 = vsel %vm78, %v52, 0
    %v95 = vsel %vm78, %v53, 0
    %v98 = vsel %vm78, %v54, 0
    %v101 = vsel %vm78, %v55, 0
    %v104 = vsel %vm78, %v56, 0
    %v107 = vsel %vm78, %v57, 0
    %v110 = vsel %vm78, %v58, 0
    %v113 = vsel %vm78, %v59, 0
    %115 = vmatprep.subr.mxu0 %v61
    %116 = vmatpush1.msra.mxu0 %v60
    %117 = vmatprep.subr.mxu0 %v64
    %118 = vmatpush1.msra.mxu0 %v63
    %119 = vmatprep.subr.mxu0 %v67
    %120 = vmatpush1.msra.mxu0 %v66
    %121 = vmatprep.subr.mxu0 %v70
    %122 = vmatpush1.msra.mxu0 %v69
    %123 = vmatprep.subr.mxu0 %v73
    %124 = vmatpush1.msra.mxu0 %v72
    %125 = vmatprep.subr.mxu0 %v76
    %126 = vmatpush1.msra.mxu0 %v75
    %127 = vmatprep.subr.mxu0 0.0
    %128 = vmatpush1.msra.mxu0 0.0
    %129 = vmatprep.subr.mxu0 0.0
    %130 = vmatpush1.msra.mxu0 0.0
    %131 = vmatprep.subr.mxu0 0.0
    %132 = vmatpush1.msra.mxu0 0.0
    %133 = vmatprep.subr.mxu0 0.0
    %134 = vmatpush1.msra.mxu0 0.0
    %135 = vmatprep.subr.mxu0 0.0
    %136 = vmatpush1.msra.mxu0 0.0
    %137 = vmatprep.subr.mxu0 0.0
    %138 = vmatpush1.msra.mxu0 0.0
    %139 = vmatprep.subr.mxu0 0.0
    %140 = vmatpush1.msra.mxu0 0.0
    %141 = vmatprep.subr.mxu0 0.0
    %142 = vmatpush1.msra.mxu0 0.0
    %143 = vmatprep.subr.mxu0 0.0
    %144 = vmatpush1.msra.mxu0 0.0
    %145 = vmatprep.subr.mxu0 0.0
    %146 = vmatpush1.msra.mxu0 0.0
    %147 = vmatprep.subr.mxu0 0.0
    %148 = vmatpush1.msra.mxu0 0.0
    %149 = vmatprep.subr.mxu0 0.0
    %150 = vmatpush1.msra.mxu0 0.0
    %151 = vmatprep.subr.mxu0 0.0
    %152 = vmatpush1.msra.mxu0 0.0
    %153 = vmatprep.subr.mxu0 0.0
    %154 = vmatpush1.msra.mxu0 0.0
    %155 = vmatprep.subr.mxu0 0.0
    %156 = vmatpush1.msra.mxu0 0.0
    %157 = vmatprep.subr.mxu0 0.0
    %158 = vmatpush1.msra.mxu0 0.0
    %159 = vmatprep.subr.mxu0 0.0
    %160 = vmatpush1.msra.mxu0 0.0
    %161 = vmatprep.subr.mxu0 0.0
    %162 = vmatpush1.msra.mxu0 0.0
    %163 = vmatprep.subr.mxu0 0.0
    %164 = vmatpush1.msra.mxu0 0.0
    %165 = vmatprep.subr.mxu0 0.0
    %166 = vmatpush1.msra.mxu0 0.0
    %167 = vmatprep.subr.mxu0 0.0
    %168 = vmatpush1.msra.mxu0 0.0
    %169 = vmatprep.subr.mxu0 0.0
    %170 = vmatpush1.msra.mxu0 0.0
    %171 = vmatprep.subr.mxu0 0.0
    %172 = vmatpush1.msra.mxu0 0.0
    %173 = vmatprep.subr.mxu0 0.0
    %174 = vmatpush1.msra.mxu0 0.0
    %175 = vmatprep.subr.mxu0 0.0
    %176 = vmatpush1.msra.mxu0 0.0
    %177 = vmatprep.subr.mxu0 0.0
    %178 = vmatpush1.msra.mxu0 0.0
    %179 = vmatprep.mubr.f32.mxu0 0.0
    %180 = vmatmul.mubr.f32.gmra.mrb[0].mxu0 %v80
    %v181 = vpop.f32.mrb[0].mxu0
    %v182 = vadd.f32 0.0, %v181
    %v183 = vpop.f32.mrb[0].mxu0
    %v184 = vadd.f32 0.0, %v183
    %185 = vmatprep.mubr.f32.mxu0 0.0
    %186 = vmatmul.mubr.f32.gmra.mrb[0].mxu0 %v83
    %v187 = vpop.f32.mrb[0].mxu0
    %v188 = vadd.f32 0.0, %v187
    %v189 = vpop.f32.mrb[0].mxu0
    %v190 = vadd.f32 0.0, %v189
    %191 = vmatprep.mubr.f32.mxu0 0.0
    %192 = vmatmul.mubr.f32.gmra.mrb[0].mxu0 %v86
    %v193 = vpop.f32.mrb[0].mxu0
    %v194 = vadd.f32 0.0, %v193
    %v195 = vpop.f32.mrb[0].mxu0
    %v196 = vadd.f32 0.0, %v195
    %197 = vmatprep.mubr.f32.mxu0 0.0
    %198 = vmatmul.mubr.f32.gmra.mrb[0].mxu0 %v89
    %v199 = vpop.f32.mrb[0].mxu0
    %v200 = vadd.f32 0.0, %v199
    %v201 = vpop.f32.mrb[0].mxu0
    %v202 = vadd.f32 0.0, %v201
    %203 = vmatprep.mubr.f32.mxu0 0.0
    %204 = vmatmul.mubr.f32.gmra.mrb[0].mxu0 %v92
    %v205 = vpop.f32.mrb[0].mxu0
    %v206 = vadd.f32 0.0, %v205
    %v207 = vpop.f32.mrb[0].mxu0
    %v208 = vadd.f32 0.0, %v207
    %209 = vmatprep.mubr.f32.mxu0 0.0
    %210 = vmatmul.mubr.f32.gmra.mrb[0].mxu0 %v95
    %v211 = vpop.f32.mrb[0].mxu0
    %v212 = vadd.f32 0.0, %v211
    %v213 = vpop.f32.mrb[0].mxu0
    %v214 = vadd.f32 0.0, %v213
    %215 = vmatprep.mubr.f32.mxu0 0.0
    %216 = vmatmul.mubr.f32.gmra.mrb[0].mxu0 %v98
    %v217 = vpop.f32.mrb[0].mxu0
    %v218 = vadd.f32 0.0, %v217
    %v219 = vpop.f32.mrb[0].mxu0
    %v220 = vadd.f32 0.0, %v219
    %221 = vmatprep.mubr.f32.mxu0 0.0
    %222 = vmatmul.mubr.f32.gmra.mrb[0].mxu0 %v101
    %v223 = vpop.f32.mrb[0].mxu0
    %v224 = vadd.f32 0.0, %v223
    %v225 = vpop.f32.mrb[0].mxu0
    %v226 = vadd.f32 0.0, %v225
    %227 = vmatprep.mubr.f32.mxu0 0.0
    %228 = vmatmul.mubr.f32.gmra.mrb[0].mxu0 %v104
    %v229 = vpop.f32.mrb[0].mxu0
    %v230 = vadd.f32 0.0, %v229
    %v231 = vpop.f32.mrb[0].mxu0
    %v232 = vadd.f32 0.0, %v231
    %233 = vmatprep.mubr.f32.mxu0 0.0
    %234 = vmatmul.mubr.f32.gmra.mrb[0].mxu0 %v107
    %v235 = vpop.f32.mrb[0].mxu0
    %v236 = vadd.f32 0.0, %v235
    %v237 = vpop.f32.mrb[0].mxu0
    %v238 = vadd.f32 0.0, %v237
    %239 = vmatprep.mubr.f32.mxu0 0.0
    %240 = vmatmul.mubr.f32.gmra.mrb[0].mxu0 %v110
    %v241 = vpop.f32.mrb[0].mxu0
    %v242 = vadd.f32 0.0, %v241
    %v243 = vpop.f32.mrb[0].mxu0
    %v244 = vadd.f32 0.0, %v243
    %245 = vmatprep.mubr.f32.mxu0 0.0
    %246 = vmatmul.mubr.f32.gmra.mrb[0].mxu0 %v113
    %v247 = vpop.f32.mrb[0].mxu0
    %v248 = vadd.f32 0.0, %v247
    %v249 = vpop.f32.mrb[0].mxu0
    %v250 = vadd.f32 0.0, %v249
    %251 = vdwg.mxu0
    %252 = vmatprep.subr.mxu0 0.0
    %253 = vmatpush1.msra.mxu0 %v62
    %254 = vmatprep.subr.mxu0 0.0
    %255 = vmatpush1.msra.mxu0 %v65
    %256 = vmatprep.subr.mxu0 0.0
    %257 = vmatpush1.msra.mxu0 %v68
    %258 = vmatprep.subr.mxu0 0.0
    %259 = vmatpush1.msra.mxu0 %v71
    %260 = vmatprep.subr.mxu0 0.0
    %261 = vmatpush1.msra.mxu0 %v74
    %262 = vmatprep.subr.mxu0 0.0
    %263 = vmatpush1.msra.mxu0 %v77
    %264 = vmatprep.subr.mxu0 0.0
    %265 = vmatpush1.msra.mxu0 0.0
    %266 = vmatprep.subr.mxu0 0.0
    %267 = vmatpush1.msra.mxu0 0.0
    %268 = vmatprep.subr.mxu0 0.0
    %269 = vmatpush1.msra.mxu0 0.0
    %270 = vmatprep.subr.mxu0 0.0
    %271 = vmatpush1.msra.mxu0 0.0
    %272 = vmatprep.subr.mxu0 0.0
    %273 = vmatpush1.msra.mxu0 0.0
    %274 = vmatprep.subr.mxu0 0.0
    %275 = vmatpush1.msra.mxu0 0.0
    %276 = vmatprep.subr.mxu0 0.0
    %277 = vmatpush1.msra.mxu0 0.0
    %278 = vmatprep.subr.mxu0 0.0
    %279 = vmatpush1.msra.mxu0 0.0
    %280 = vmatprep.subr.mxu0 0.0
    %281 = vmatpush1.msra.mxu0 0.0
    %282 = vmatprep.subr.mxu0 0.0
    %283 = vmatpush1.msra.mxu0 0.0
    %284 = vmatprep.subr.mxu0 0.0
    %285 = vmatpush1.msra.mxu0 0.0
    %286 = vmatprep.subr.mxu0 0.0
    %287 = vmatpush1.msra.mxu0 0.0
    %288 = vmatprep.subr.mxu0 0.0
    %289 = vmatpush1.msra.mxu0 0.0
    %290 = vmatprep.subr.mxu0 0.0
    %291 = vmatpush1.msra.mxu0 0.0
    %292 = vmatprep.subr.mxu0 0.0
    %293 = vmatpush1.msra.mxu0 0.0
    %294 = vmatprep.subr.mxu0 0.0
    %295 = vmatpush1.msra.mxu0 0.0
    %296 = vmatprep.subr.mxu0 0.0
    %297 = vmatpush1.msra.mxu0 0.0
    %298 = vmatprep.subr.mxu0 0.0
    %299 = vmatpush1.msra.mxu0 0.0
    %300 = vmatprep.subr.mxu0 0.0
    %301 = vmatpush1.msra.mxu0 0.0
    %302 = vmatprep.subr.mxu0 0.0
    %303 = vmatpush1.msra.mxu0 0.0
    %304 = vmatprep.subr.mxu0 0.0
    %305 = vmatpush1.msra.mxu0 0.0
    %306 = vmatprep.subr.mxu0 0.0
    %307 = vmatpush1.msra.mxu0 0.0
    %308 = vmatprep.subr.mxu0 0.0
    %309 = vmatpush1.msra.mxu0 0.0
    %310 = vmatprep.subr.mxu0 0.0
    %311 = vmatpush1.msra.mxu0 0.0
    %312 = vmatprep.subr.mxu0 0.0
    %313 = vmatpush1.msra.mxu0 0.0
    %314 = vmatprep.subr.mxu0 0.0
    %315 = vmatpush1.msra.mxu0 0.0
    %316 = vmatprep.mubr.f32.mxu0 0.0
    %317 = vmatmul.mubr.f32.gmra.mrb[0].mxu0 %v80
    %v318 = vpop.f32.mrb[0].mxu0
    %v319 = vadd.f32 0.0, %v318
    %v320 = vpop.f32.mrb[0].mxu0
    %321 = vmatprep.mubr.f32.mxu0 0.0
    %322 = vmatmul.mubr.f32.gmra.mrb[0].mxu0 %v83
    %v323 = vpop.f32.mrb[0].mxu0
    %v324 = vadd.f32 0.0, %v323
    %v325 = vpop.f32.mrb[0].mxu0
    %326 = vmatprep.mubr.f32.mxu0 0.0
    %327 = vmatmul.mubr.f32.gmra.mrb[0].mxu0 %v86
    %v328 = vpop.f32.mrb[0].mxu0
    %v329 = vadd.f32 0.0, %v328
    %v330 = vpop.f32.mrb[0].mxu0
    %331 = vmatprep.mubr.f32.mxu0 0.0
    %332 = vmatmul.mubr.f32.gmra.mrb[0].mxu0 %v89
    %v333 = vpop.f32.mrb[0].mxu0
    %v334 = vadd.f32 0.0, %v333
    %v335 = vpop.f32.mrb[0].mxu0
    %336 = vmatprep.mubr.f32.mxu0 0.0
    %337 = vmatmul.mubr.f32.gmra.mrb[0].mxu0 %v92
    %v338 = vpop.f32.mrb[0].mxu0
    %v339 = vadd.f32 0.0, %v338
    %v340 = vpop.f32.mrb[0].mxu0
    %341 = vmatprep.mubr.f32.mxu0 0.0
    %342 = vmatmul.mubr.f32.gmra.mrb[0].mxu0 %v95
    %v343 = vpop.f32.mrb[0].mxu0
    %v344 = vadd.f32 0.0, %v343
    %v345 = vpop.f32.mrb[0].mxu0
    %346 = vmatprep.mubr.f32.mxu0 0.0
    %347 = vmatmul.mubr.f32.gmra.mrb[0].mxu0 %v98
    %v348 = vpop.f32.mrb[0].mxu0
    %v349 = vadd.f32 0.0, %v348
    %v350 = vpop.f32.mrb[0].mxu0
    %351 = vmatprep.mubr.f32.mxu0 0.0
    %352 = vmatmul.mubr.f32.gmra.mrb[0].mxu0 %v101
    %v353 = vpop.f32.mrb[0].mxu0
    %v354 = vadd.f32 0.0, %v353
    %v355 = vpop.f32.mrb[0].mxu0
    %356 = vmatprep.mubr.f32.mxu0 0.0
    %357 = vmatmul.mubr.f32.gmra.mrb[0].mxu0 %v104
    %v358 = vpop.f32.mrb[0].mxu0
    %v359 = vadd.f32 0.0, %v358
    %v360 = vpop.f32.mrb[0].mxu0
    %361 = vmatprep.mubr.f32.mxu0 0.0
    %362 = vmatmul.mubr.f32.gmra.mrb[0].mxu0 %v107
    %v363 = vpop.f32.mrb[0].mxu0
    %v364 = vadd.f32 0.0, %v363
    %v365 = vpop.f32.mrb[0].mxu0
    %366 = vmatprep.mubr.f32.mxu0 0.0
    %367 = vmatmul.mubr.f32.gmra.mrb[0].mxu0 %v110
    %v368 = vpop.f32.mrb[0].mxu0
    %v369 = vadd.f32 0.0, %v368
    %v370 = vpop.f32.mrb[0].mxu0
    %371 = vmatprep.mubr.f32.mxu0 0.0
    %372 = vmatmul.mubr.f32.gmra.mrb[0].mxu0 %v113
    %v373 = vpop.f32.mrb[0].mxu0
    %v374 = vadd.f32 0.0, %v373
    %v375 = vpop.f32.mrb[0].mxu0
    %376 = vdwg.mxu0
    %v377 = vld [vmem:[%s2] sm:$0xff]
    %v378 = vld [vmem:[%s2 + $0x8] sm:$0xff]
    %v379 = vld [vmem:[%s2 + $0x10] sm:$0xff]
    %s380 = scalar_lea.vmem %s1, 144
    %v381 = vld [vmem:[%s380] sm:$0xff]
    %v382 = vld [vmem:[%s380 + $0x8] sm:$0xff]
    %v383 = vld [vmem:[%s380 + $0x10] sm:$0xff]
    %v384 = vld [vmem:[%s380 + $0x18] sm:$0xff]
    %v385 = vld [vmem:[%s380 + $0x20] sm:$0xff]
    %v386 = vld [vmem:[%s380 + $0x28] sm:$0xff]
    %v387 = vld [vmem:[%s380 + $0x30] sm:$0xff]
    %v388 = vld [vmem:[%s380 + $0x38] sm:$0xff]
    %v389 = vld [vmem:[%s380 + $0x40] sm:$0xff]
    %v390 = vld [vmem:[%s380 + $0x48] sm:$0xff]
    %v391 = vld [vmem:[%s380 + $0x50] sm:$0xff]
    %v392 = vld [vmem:[%s380 + $0x58] sm:$0xff]
    %v393 = vld [vmem:[%s380 + $0x60] sm:$0xff]
    %v394 = vld [vmem:[%s380 + $0x68] sm:$0xff]
    %v395 = vld [vmem:[%s380 + $0x70] sm:$0xff]
    %v396 = vld [vmem:[%s380 + $0x78] sm:$0xff]
    %v397 = vld [vmem:[%s380 + $0x80] sm:$0xff]
    %v398 = vld [vmem:[%s380 + $0x88] sm:$0xff]
    %399 = vmatprep.subr.mxu0 %v382
    %400 = vmatpush1.msra.mxu0 %v381
    %401 = vmatprep.subr.mxu0 %v385
    %402 = vmatpush1.msra.mxu0 %v384
    %403 = vmatprep.subr.mxu0 %v388
    %404 = vmatpush1.msra.mxu0 %v387
    %405 = vmatprep.subr.mxu0 %v391
    %406 = vmatpush1.msra.mxu0 %v390
    %407 = vmatprep.subr.mxu0 %v394
    %408 = vmatpush1.msra.mxu0 %v393
    %409 = vmatprep.subr.mxu0 %v397
    %410 = vmatpush1.msra.mxu0 %v396
    %411 = vmatprep.subr.mxu0 0.0
    %412 = vmatpush1.msra.mxu0 0.0
    %413 = vmatprep.subr.mxu0 0.0
    %414 = vmatpush1.msra.mxu0 0.0
    %415 = vmatprep.subr.mxu0 0.0
    %416 = vmatpush1.msra.mxu0 0.0
    %417 = vmatprep.subr.mxu0 0.0
    %418 = vmatpush1.msra.mxu0 0.0
    %419 = vmatprep.subr.mxu0 0.0
    %420 = vmatpush1.msra.mxu0 0.0
    %421 = vmatprep.subr.mxu0 0.0
    %422 = vmatpush1.msra.mxu0 0.0
    %423 = vmatprep.subr.mxu0 0.0
    %424 = vmatpush1.msra.mxu0 0.0
    %425 = vmatprep.subr.mxu0 0.0
    %426 = vmatpush1.msra.mxu0 0.0
    %427 = vmatprep.subr.mxu0 0.0
    %428 = vmatpush1.msra.mxu0 0.0
    %429 = vmatprep.subr.mxu0 0.0
    %430 = vmatpush1.msra.mxu0 0.0
    %431 = vmatprep.subr.mxu0 0.0
    %432 = vmatpush1.msra.mxu0 0.0
    %433 = vmatprep.subr.mxu0 0.0
    %434 = vmatpush1.msra.mxu0 0.0
    %435 = vmatprep.subr.mxu0 0.0
    %436 = vmatpush1.msra.mxu0 0.0
    %437 = vmatprep.subr.mxu0 0.0
    %438 = vmatpush1.msra.mxu0 0.0
    %439 = vmatprep.subr.mxu0 0.0
    %440 = vmatpush1.msra.mxu0 0.0
    %441 = vmatprep.subr.mxu0 0.0
    %442 = vmatpush1.msra.mxu0 0.0
    %443 = vmatprep.subr.mxu0 0.0
    %444 = vmatpush1.msra.mxu0 0.0
    %445 = vmatprep.subr.mxu0 0.0
    %446 = vmatpush1.msra.mxu0 0.0
    %447 = vmatprep.subr.mxu0 0.0
    %448 = vmatpush1.msra.mxu0 0.0
    %449 = vmatprep.subr.mxu0 0.0
    %450 = vmatpush1.msra.mxu0 0.0
    %451 = vmatprep.subr.mxu0 0.0
    %452 = vmatpush1.msra.mxu0 0.0
    %453 = vmatprep.subr.mxu0 0.0
    %454 = vmatpush1.msra.mxu0 0.0
    %455 = vmatprep.subr.mxu0 0.0
    %456 = vmatpush1.msra.mxu0 0.0
    %457 = vmatprep.subr.mxu0 0.0
    %458 = vmatpush1.msra.mxu0 0.0
    %459 = vmatprep.subr.mxu0 0.0
    %460 = vmatpush1.msra.mxu0 0.0
    %461 = vmatprep.subr.mxu0 0.0
    %462 = vmatpush1.msra.mxu0 0.0
    %463 = vmatprep.mubr.f32.mxu0 0.0
    %464 = vmatmul.mubr.f32.gmra.mrb[0].mxu0 %v80
    %v465 = vpop.f32.mrb[0].mxu0
    %v466 = vadd.f32 0.0, %v465
    %v467 = vpop.f32.mrb[0].mxu0
    %v468 = vadd.f32 0.0, %v467
    %469 = vmatprep.mubr.f32.mxu0 0.0
    %470 = vmatmul.mubr.f32.gmra.mrb[0].mxu0 %v83
    %v471 = vpop.f32.mrb[0].mxu0
    %v472 = vadd.f32 0.0, %v471
    %v473 = vpop.f32.mrb[0].mxu0
    %v474 = vadd.f32 0.0, %v473
    %475 = vmatprep.mubr.f32.mxu0 0.0
    %476 = vmatmul.mubr.f32.gmra.mrb[0].mxu0 %v86
    %v477 = vpop.f32.mrb[0].mxu0
    %v478 = vadd.f32 0.0, %v477
    %v479 = vpop.f32.mrb[0].mxu0
    %v480 = vadd.f32 0.0, %v479
    %481 = vmatprep.mubr.f32.mxu0 0.0
    %482 = vmatmul.mubr.f32.gmra.mrb[0].mxu0 %v89
    %v483 = vpop.f32.mrb[0].mxu0
    %v484 = vadd.f32 0.0, %v483
    %v485 = vpop.f32.mrb[0].mxu0
    %v486 = vadd.f32 0.0, %v485
    %487 = vmatprep.mubr.f32.mxu0 0.0
    %488 = vmatmul.mubr.f32.gmra.mrb[0].mxu0 %v92
    %v489 = vpop.f32.mrb[0].mxu0
    %v490 = vadd.f32 0.0, %v489
    %v491 = vpop.f32.mrb[0].mxu0
    %v492 = vadd.f32 0.0, %v491
    %493 = vmatprep.mubr.f32.mxu0 0.0
    %494 = vmatmul.mubr.f32.gmra.mrb[0].mxu0 %v95
    %v495 = vpop.f32.mrb[0].mxu0
    %v496 = vadd.f32 0.0, %v495
    %v497 = vpop.f32.mrb[0].mxu0
    %v498 = vadd.f32 0.0, %v497
    %499 = vmatprep.mubr.f32.mxu0 0.0
    %500 = vmatmul.mubr.f32.gmra.mrb[0].mxu0 %v98
    %v501 = vpop.f32.mrb[0].mxu0
    %v502 = vadd.f32 0.0, %v501
    %v503 = vpop.f32.mrb[0].mxu0
    %v504 = vadd.f32 0.0, %v503
    %505 = vmatprep.mubr.f32.mxu0 0.0
    %506 = vmatmul.mubr.f32.gmra.mrb[0].mxu0 %v101
    %v507 = vpop.f32.mrb[0].mxu0
    %v508 = vadd.f32 0.0, %v507
    %v509 = vpop.f32.mrb[0].mxu0
    %v510 = vadd.f32 0.0, %v509
    %511 = vmatprep.mubr.f32.mxu0 0.0
    %512 = vmatmul.mubr.f32.gmra.mrb[0].mxu0 %v104
    %v513 = vpop.f32.mrb[0].mxu0
    %v514 = vadd.f32 0.0, %v513
    %v515 = vpop.f32.mrb[0].mxu0
    %v516 = vadd.f32 0.0, %v515
    %517 = vmatprep.mubr.f32.mxu0 0.0
    %518 = vmatmul.mubr.f32.gmra.mrb[0].mxu0 %v107
    %v519 = vpop.f32.mrb[0].mxu0
    %v520 = vadd.f32 0.0, %v519
    %v521 = vpop.f32.mrb[0].mxu0
    %v522 = vadd.f32 0.0, %v521
    %523 = vmatprep.mubr.f32.mxu0 0.0
    %524 = vmatmul.mubr.f32.gmra.mrb[0].mxu0 %v110
    %v525 = vpop.f32.mrb[0].mxu0
    %v526 = vadd.f32 0.0, %v525
    %v527 = vpop.f32.mrb[0].mxu0
    %v528 = vadd.f32 0.0, %v527
    %529 = vmatprep.mubr.f32.mxu0 0.0
    %530 = vmatmul.mubr.f32.gmra.mrb[0].mxu0 %v113
    %v531 = vpop.f32.mrb[0].mxu0
    %v532 = vadd.f32 0.0, %v531
    %v533 = vpop.f32.mrb[0].mxu0
    %v534 = vadd.f32 0.0, %v533
    %535 = vdwg.mxu0
    %536 = vmatprep.subr.mxu0 0.0
    %537 = vmatpush1.msra.mxu0 %v383
    %538 = vmatprep.subr.mxu0 0.0
    %539 = vmatpush1.msra.mxu0 %v386
    %540 = vmatprep.subr.mxu0 0.0
    %541 = vmatpush1.msra.mxu0 %v389
    %542 = vmatprep.subr.mxu0 0.0
    %543 = vmatpush1.msra.mxu0 %v392
    %544 = vmatprep.subr.mxu0 0.0
    %545 = vmatpush1.msra.mxu0 %v395
    %546 = vmatprep.subr.mxu0 0.0
    %547 = vmatpush1.msra.mxu0 %v398
    %548 = vmatprep.subr.mxu0 0.0
    %549 = vmatpush1.msra.mxu0 0.0
    %550 = vmatprep.subr.mxu0 0.0
    %551 = vmatpush1.msra.mxu0 0.0
    %552 = vmatprep.subr.mxu0 0.0
    %553 = vmatpush1.msra.mxu0 0.0
    %554 = vmatprep.subr.mxu0 0.0
    %555 = vmatpush1.msra.mxu0 0.0
    %556 = vmatprep.subr.mxu0 0.0
    %557 = vmatpush1.msra.mxu0 0.0
    %558 = vmatprep.subr.mxu0 0.0
    %559 = vmatpush1.msra.mxu0 0.0
    %560 = vmatprep.subr.mxu0 0.0
    %561 = vmatpush1.msra.mxu0 0.0
    %562 = vmatprep.subr.mxu0 0.0
    %563 = vmatpush1.msra.mxu0 0.0
    %564 = vmatprep.subr.mxu0 0.0
    %565 = vmatpush1.msra.mxu0 0.0
    %566 = vmatprep.subr.mxu0 0.0
    %567 = vmatpush1.msra.mxu0 0.0
    %568 = vmatprep.subr.mxu0 0.0
    %569 = vmatpush1.msra.mxu0 0.0
    %570 = vmatprep.subr.mxu0 0.0
    %571 = vmatpush1.msra.mxu0 0.0
    %572 = vmatprep.subr.mxu0 0.0
    %573 = vmatpush1.msra.mxu0 0.0
    %574 = vmatprep.subr.mxu0 0.0
    %575 = vmatpush1.msra.mxu0 0.0
    %576 = vmatprep.subr.mxu0 0.0
    %577 = vmatpush1.msra.mxu0 0.0
    %578 = vmatprep.subr.mxu0 0.0
    %579 = vmatpush1.msra.mxu0 0.0
    %580 = vmatprep.subr.mxu0 0.0
    %581 = vmatpush1.msra.mxu0 0.0
    %582 = vmatprep.subr.mxu0 0.0
    %583 = vmatpush1.msra.mxu0 0.0
    %584 = vmatprep.subr.mxu0 0.0
    %585 = vmatpush1.msra.mxu0 0.0
    %586 = vmatprep.subr.mxu0 0.0
    %587 = vmatpush1.msra.mxu0 0.0
    %588 = vmatprep.subr.mxu0 0.0
    %589 = vmatpush1.msra.mxu0 0.0
    %590 = vmatprep.subr.mxu0 0.0
    %591 = vmatpush1.msra.mxu0 0.0
    %592 = vmatprep.subr.mxu0 0.0
    %593 = vmatpush1.msra.mxu0 0.0
    %594 = vmatprep.subr.mxu0 0.0
    %595 = vmatpush1.msra.mxu0 0.0
    %596 = vmatprep.subr.mxu0 0.0
    %597 = vmatpush1.msra.mxu0 0.0
    %598 = vmatprep.subr.mxu0 0.0
    %599 = vmatpush1.msra.mxu0 0.0
    %600 = vmatprep.mubr.f32.mxu0 0.0
    %601 = vmatmul.mubr.f32.gmra.mrb[0].mxu0 %v80
    %v602 = vpop.f32.mrb[0].mxu0
    %v603 = vadd.f32 0.0, %v602
    %v604 = vpop.f32.mrb[0].mxu0
    %605 = vmatprep.mubr.f32.mxu0 0.0
    %606 = vmatmul.mubr.f32.gmra.mrb[0].mxu0 %v83
    %v607 = vpop.f32.mrb[0].mxu0
    %v608 = vadd.f32 0.0, %v607
    %v609 = vpop.f32.mrb[0].mxu0
    %610 = vmatprep.mubr.f32.mxu0 0.0
    %611 = vmatmul.mubr.f32.gmra.mrb[0].mxu0 %v86
    %v612 = vpop.f32.mrb[0].mxu0
    %v613 = vadd.f32 0.0, %v612
    %v614 = vpop.f32.mrb[0].mxu0
    %615 = vmatprep.mubr.f32.mxu0 0.0
    %616 = vmatmul.mubr.f32.gmra.mrb[0].mxu0 %v89
    %v617 = vpop.f32.mrb[0].mxu0
    %v618 = vadd.f32 0.0, %v617
    %v619 = vpop.f32.mrb[0].mxu0
    %620 = vmatprep.mubr.f32.mxu0 0.0
    %621 = vmatmul.mubr.f32.gmra.mrb[0].mxu0 %v92
    %v622 = vpop.f32.mrb[0].mxu0
    %v623 = vadd.f32 0.0, %v622
    %v624 = vpop.f32.mrb[0].mxu0
    %625 = vmatprep.mubr.f32.mxu0 0.0
    %626 = vmatmul.mubr.f32.gmra.mrb[0].mxu0 %v95
    %v627 = vpop.f32.mrb[0].mxu0
    %v628 = vadd.f32 0.0, %v627
    %v629 = vpop.f32.mrb[0].mxu0
    %630 = vmatprep.mubr.f32.mxu0 0.0
    %631 = vmatmul.mubr.f32.gmra.mrb[0].mxu0 %v98
    %v632 = vpop.f32.mrb[0].mxu0
    %v633 = vadd.f32 0.0, %v632
    %v634 = vpop.f32.mrb[0].mxu0
    %635 = vmatprep.mubr.f32.mxu0 0.0
    %636 = vmatmul.mubr.f32.gmra.mrb[0].mxu0 %v101
    %v637 = vpop.f32.mrb[0].mxu0
    %v638 = vadd.f32 0.0, %v637
    %v639 = vpop.f32.mrb[0].mxu0
    %640 = vmatprep.mubr.f32.mxu0 0.0
    %641 = vmatmul.mubr.f32.gmra.mrb[0].mxu0 %v104
    %v642 = vpop.f32.mrb[0].mxu0
    %v643 = vadd.f32 0.0, %v642
    %v644 = vpop.f32.mrb[0].mxu0
    %645 = vmatprep.mubr.f32.mxu0 0.0
    %646 = vmatmul.mubr.f32.gmra.mrb[0].mxu0 %v107
    %v647 = vpop.f32.mrb[0].mxu0
    %v648 = vadd.f32 0.0, %v647
    %v649 = vpop.f32.mrb[0].mxu0
    %650 = vmatprep.mubr.f32.mxu0 0.0
    %651 = vmatmul.mubr.f32.gmra.mrb[0].mxu0 %v110
    %v652 = vpop.f32.mrb[0].mxu0
    %v653 = vadd.f32 0.0, %v652
    %v654 = vpop.f32.mrb[0].mxu0
    %655 = vmatprep.mubr.f32.mxu0 0.0
    %656 = vmatmul.mubr.f32.gmra.mrb[0].mxu0 %v113
    %v657 = vpop.f32.mrb[0].mxu0
    %v658 = vadd.f32 0.0, %v657
    %v659 = vpop.f32.mrb[0].mxu0
    %660 = vdwg.mxu0
    %s661 = scalar_lea.vmem %s2, 24
    %v662 = vld [vmem:[%s661] sm:$0xff]
    %v663 = vld [vmem:[%s661 + $0x8] sm:$0xff]
    %v664 = vld [vmem:[%s661 + $0x10] sm:$0xff]
    %v666 = vsel %vm78, %v662, 0
    %v669 = vsel %vm78, %v663, 0
    %v672 = vsel %vm78, %v664, 0
    %674 = vmatprep.subr.mxu0 %v468
    %675 = vmatpush1.msra.mxu0 %v466
    %676 = vmatprep.subr.mxu0 %v474
    %677 = vmatpush1.msra.mxu0 %v472
    %678 = vmatprep.subr.mxu0 %v480
    %679 = vmatpush1.msra.mxu0 %v478
    %680 = vmatprep.subr.mxu0 %v486
    %681 = vmatpush1.msra.mxu0 %v484
    %682 = vmatprep.subr.mxu0 %v492
    %683 = vmatpush1.msra.mxu0 %v490
    %684 = vmatprep.subr.mxu0 %v498
    %685 = vmatpush1.msra.mxu0 %v496
    %686 = vmatprep.subr.mxu0 0.0
    %687 = vmatpush1.msra.mxu0 0.0
    %688 = vmatprep.subr.mxu0 0.0
    %689 = vmatpush1.msra.mxu0 0.0
    %690 = vmatprep.subr.mxu0 0.0
    %691 = vmatpush1.msra.mxu0 0.0
    %692 = vmatprep.subr.mxu0 0.0
    %693 = vmatpush1.msra.mxu0 0.0
    %694 = vmatprep.subr.mxu0 0.0
    %695 = vmatpush1.msra.mxu0 0.0
    %696 = vmatprep.subr.mxu0 0.0
    %697 = vmatpush1.msra.mxu0 0.0
    %698 = vmatprep.subr.mxu0 0.0
    %699 = vmatpush1.msra.mxu0 0.0
    %700 = vmatprep.subr.mxu0 0.0
    %701 = vmatpush1.msra.mxu0 0.0
    %702 = vmatprep.subr.mxu0 0.0
    %703 = vmatpush1.msra.mxu0 0.0
    %704 = vmatprep.subr.mxu0 0.0
    %705 = vmatpush1.msra.mxu0 0.0
    %706 = vmatprep.subr.mxu0 0.0
    %707 = vmatpush1.msra.mxu0 0.0
    %708 = vmatprep.subr.mxu0 0.0
    %709 = vmatpush1.msra.mxu0 0.0
    %710 = vmatprep.subr.mxu0 0.0
    %711 = vmatpush1.msra.mxu0 0.0
    %712 = vmatprep.subr.mxu0 0.0
    %713 = vmatpush1.msra.mxu0 0.0
    %714 = vmatprep.subr.mxu0 0.0
    %715 = vmatpush1.msra.mxu0 0.0
    %716 = vmatprep.subr.mxu0 0.0
    %717 = vmatpush1.msra.mxu0 0.0
    %718 = vmatprep.subr.mxu0 0.0
    %719 = vmatpush1.msra.mxu0 0.0
    %720 = vmatprep.subr.mxu0 0.0
    %721 = vmatpush1.msra.mxu0 0.0
    %722 = vmatprep.subr.mxu0 0.0
    %723 = vmatpush1.msra.mxu0 0.0
    %724 = vmatprep.subr.mxu0 0.0
    %725 = vmatpush1.msra.mxu0 0.0
    %726 = vmatprep.subr.mxu0 0.0
    %727 = vmatpush1.msra.mxu0 0.0
    %728 = vmatprep.subr.mxu0 0.0
    %729 = vmatpush1.msra.mxu0 0.0
    %730 = vmatprep.subr.mxu0 0.0
    %731 = vmatpush1.msra.mxu0 0.0
    %732 = vmatprep.subr.mxu0 0.0
    %733 = vmatpush1.msra.mxu0 0.0
    %734 = vmatprep.subr.mxu0 0.0
    %735 = vmatpush1.msra.mxu0 0.0
    %736 = vmatprep.subr.mxu0 0.0
    %737 = vmatpush1.msra.mxu0 0.0
    %738 = vmatprep.mubr.f32.mxu0 0.0
    %739 = vmatmul.mubr.f32.gmra.mrb[0].mxu0 %v666
    %v740 = vpop.f32.mrb[0].mxu0
    %v741 = vadd.f32 0.0, %v740
    %v742 = vpop.f32.mrb[0].mxu0
    %v743 = vadd.f32 0.0, %v742
    %744 = vmatprep.mubr.f32.mxu0 0.0
    %745 = vmatmul.mubr.f32.gmra.mrb[0].mxu0 %v669
    %v746 = vpop.f32.mrb[0].mxu0
    %v747 = vadd.f32 0.0, %v746
    %v748 = vpop.f32.mrb[0].mxu0
    %v749 = vadd.f32 0.0, %v748
    %750 = vmatprep.mubr.f32.mxu0 0.0
    %751 = vmatmul.mubr.f32.gmra.mrb[0].mxu0 %v672
    %v752 = vpop.f32.mrb[0].mxu0
    %v753 = vadd.f32 0.0, %v752
    %v754 = vpop.f32.mrb[0].mxu0
    %v755 = vadd.f32 0.0, %v754
    %756 = vdwg.mxu0
    %757 = vmatprep.subr.mxu0 0.0
    %758 = vmatpush1.msra.mxu0 %v603
    %759 = vmatprep.subr.mxu0 0.0
    %760 = vmatpush1.msra.mxu0 %v608
    %761 = vmatprep.subr.mxu0 0.0
    %762 = vmatpush1.msra.mxu0 %v613
    %763 = vmatprep.subr.mxu0 0.0
    %764 = vmatpush1.msra.mxu0 %v618
    %765 = vmatprep.subr.mxu0 0.0
    %766 = vmatpush1.msra.mxu0 %v623
    %767 = vmatprep.subr.mxu0 0.0
    %768 = vmatpush1.msra.mxu0 %v628
    %769 = vmatprep.subr.mxu0 0.0
    %770 = vmatpush1.msra.mxu0 0.0
    %771 = vmatprep.subr.mxu0 0.0
    %772 = vmatpush1.msra.mxu0 0.0
    %773 = vmatprep.subr.mxu0 0.0
    %774 = vmatpush1.msra.mxu0 0.0
    %775 = vmatprep.subr.mxu0 0.0
    %776 = vmatpush1.msra.mxu0 0.0
    %777 = vmatprep.subr.mxu0 0.0
    %778 = vmatpush1.msra.mxu0 0.0
    %779 = vmatprep.subr.mxu0 0.0
    %780 = vmatpush1.msra.mxu0 0.0
    %781 = vmatprep.subr.mxu0 0.0
    %782 = vmatpush1.msra.mxu0 0.0
    %783 = vmatprep.subr.mxu0 0.0
    %784 = vmatpush1.msra.mxu0 0.0
    %785 = vmatprep.subr.mxu0 0.0
    %786 = vmatpush1.msra.mxu0 0.0
    %787 = vmatprep.subr.mxu0 0.0
    %788 = vmatpush1.msra.mxu0 0.0
    %789 = vmatprep.subr.mxu0 0.0
    %790 = vmatpush1.msra.mxu0 0.0
    %791 = vmatprep.subr.mxu0 0.0
    %792 = vmatpush1.msra.mxu0 0.0
    %793 = vmatprep.subr.mxu0 0.0
    %794 = vmatpush1.msra.mxu0 0.0
    %795 = vmatprep.subr.mxu0 0.0
    %796 = vmatpush1.msra.mxu0 0.0
    %797 = vmatprep.subr.mxu0 0.0
    %798 = vmatpush1.msra.mxu0 0.0
    %799 = vmatprep.subr.mxu0 0.0
    %800 = vmatpush1.msra.mxu0 0.0
    %801 = vmatprep.subr.mxu0 0.0
    %802 = vmatpush1.msra.mxu0 0.0
    %803 = vmatprep.subr.mxu0 0.0
    %804 = vmatpush1.msra.mxu0 0.0
    %805 = vmatprep.subr.mxu0 0.0
    %806 = vmatpush1.msra.mxu0 0.0
    %807 = vmatprep.subr.mxu0 0.0
    %808 = vmatpush1.msra.mxu0 0.0
    %809 = vmatprep.subr.mxu0 0.0
    %810 = vmatpush1.msra.mxu0 0.0
    %811 = vmatprep.subr.mxu0 0.0
    %812 = vmatpush1.msra.mxu0 0.0
    %813 = vmatprep.subr.mxu0 0.0
    %814 = vmatpush1.msra.mxu0 0.0
    %815 = vmatprep.subr.mxu0 0.0
    %816 = vmatpush1.msra.mxu0 0.0
    %817 = vmatprep.subr.mxu0 0.0
    %818 = vmatpush1.msra.mxu0 0.0
    %819 = vmatprep.subr.mxu0 0.0
    %820 = vmatpush1.msra.mxu0 0.0
    %821 = vmatprep.mubr.f32.mxu0 0.0
    %822 = vmatmul.mubr.f32.gmra.mrb[0].mxu0 %v666
    %v823 = vpop.f32.mrb[0].mxu0
    %v824 = vadd.f32 0.0, %v823
    %v825 = vpop.f32.mrb[0].mxu0
    %826 = vmatprep.mubr.f32.mxu0 0.0
    %827 = vmatmul.mubr.f32.gmra.mrb[0].mxu0 %v669
    %v828 = vpop.f32.mrb[0].mxu0
    %v829 = vadd.f32 0.0, %v828
    %v830 = vpop.f32.mrb[0].mxu0
    %831 = vmatprep.mubr.f32.mxu0 0.0
    %832 = vmatmul.mubr.f32.gmra.mrb[0].mxu0 %v672
    %v833 = vpop.f32.mrb[0].mxu0
    %v834 = vadd.f32 0.0, %v833
    %v835 = vpop.f32.mrb[0].mxu0
    %836 = vdwg.mxu0
    %v838 = vsel %vm78, %v377, 0
    %v841 = vsel %vm78, %v378, 0
    %v844 = vsel %vm78, %v379, 0
    %846 = vmatprep.subr.mxu0 %v184
    %847 = vmatpush1.msra.mxu0 %v182
    %848 = vmatprep.subr.mxu0 %v190
    %849 = vmatpush1.msra.mxu0 %v188
    %850 = vmatprep.subr.mxu0 %v196
    %851 = vmatpush1.msra.mxu0 %v194
    %852 = vmatprep.subr.mxu0 %v202
    %853 = vmatpush1.msra.mxu0 %v200
    %854 = vmatprep.subr.mxu0 %v208
    %855 = vmatpush1.msra.mxu0 %v206
    %856 = vmatprep.subr.mxu0 %v214
    %857 = vmatpush1.msra.mxu0 %v212
    %858 = vmatprep.subr.mxu0 0.0
    %859 = vmatpush1.msra.mxu0 0.0
    %860 = vmatprep.subr.mxu0 0.0
    %861 = vmatpush1.msra.mxu0 0.0
    %862 = vmatprep.subr.mxu0 0.0
    %863 = vmatpush1.msra.mxu0 0.0
    %864 = vmatprep.subr.mxu0 0.0
    %865 = vmatpush1.msra.mxu0 0.0
    %866 = vmatprep.subr.mxu0 0.0
    %867 = vmatpush1.msra.mxu0 0.0
    %868 = vmatprep.subr.mxu0 0.0
    %869 = vmatpush1.msra.mxu0 0.0
    %870 = vmatprep.subr.mxu0 0.0
    %871 = vmatpush1.msra.mxu0 0.0
    %872 = vmatprep.subr.mxu0 0.0
    %873 = vmatpush1.msra.mxu0 0.0
    %874 = vmatprep.subr.mxu0 0.0
    %875 = vmatpush1.msra.mxu0 0.0
    %876 = vmatprep.subr.mxu0 0.0
    %877 = vmatpush1.msra.mxu0 0.0
    %878 = vmatprep.subr.mxu0 0.0
    %879 = vmatpush1.msra.mxu0 0.0
    %880 = vmatprep.subr.mxu0 0.0
    %881 = vmatpush1.msra.mxu0 0.0
    %882 = vmatprep.subr.mxu0 0.0
    %883 = vmatpush1.msra.mxu0 0.0
    %884 = vmatprep.subr.mxu0 0.0
    %885 = vmatpush1.msra.mxu0 0.0
    %886 = vmatprep.subr.mxu0 0.0
    %887 = vmatpush1.msra.mxu0 0.0
    %888 = vmatprep.subr.mxu0 0.0
    %889 = vmatpush1.msra.mxu0 0.0
    %890 = vmatprep.subr.mxu0 0.0
    %891 = vmatpush1.msra.mxu0 0.0
    %892 = vmatprep.subr.mxu0 0.0
    %893 = vmatpush1.msra.mxu0 0.0
    %894 = vmatprep.subr.mxu0 0.0
    %895 = vmatpush1.msra.mxu0 0.0
    %896 = vmatprep.subr.mxu0 0.0
    %897 = vmatpush1.msra.mxu0 0.0
    %898 = vmatprep.subr.mxu0 0.0
    %899 = vmatpush1.msra.mxu0 0.0
    %900 = vmatprep.subr.mxu0 0.0
    %901 = vmatpush1.msra.mxu0 0.0
    %902 = vmatprep.subr.mxu0 0.0
    %903 = vmatpush1.msra.mxu0 0.0
    %904 = vmatprep.subr.mxu0 0.0
    %905 = vmatpush1.msra.mxu0 0.0
    %906 = vmatprep.subr.mxu0 0.0
    %907 = vmatpush1.msra.mxu0 0.0
    %908 = vmatprep.subr.mxu0 0.0
    %909 = vmatpush1.msra.mxu0 0.0
    %910 = vmatprep.mubr.f32.mxu0 0.0
    %911 = vmatmul.mubr.f32.gmra.mrb[0].mxu0 %v838
    %v912 = vpop.f32.mrb[0].mxu0
    %v913 = vadd.f32 %v741, %v912
    %v914 = vpop.f32.mrb[0].mxu0
    %v915 = vadd.f32 %v743, %v914
    %916 = vmatprep.mubr.f32.mxu0 0.0
    %917 = vmatmul.mubr.f32.gmra.mrb[0].mxu0 %v841
    %v918 = vpop.f32.mrb[0].mxu0
    %v919 = vadd.f32 %v747, %v918
    %v920 = vpop.f32.mrb[0].mxu0
    %v921 = vadd.f32 %v749, %v920
    %922 = vmatprep.mubr.f32.mxu0 0.0
    %923 = vmatmul.mubr.f32.gmra.mrb[0].mxu0 %v844
    %v924 = vpop.f32.mrb[0].mxu0
    %v925 = vadd.f32 %v753, %v924
    %v926 = vpop.f32.mrb[0].mxu0
    %v927 = vadd.f32 %v755, %v926
    %928 = vdwg.mxu0
    %929 = vmatprep.subr.mxu0 0.0
    %930 = vmatpush1.msra.mxu0 %v319
    %931 = vmatprep.subr.mxu0 0.0
    %932 = vmatpush1.msra.mxu0 %v324
    %933 = vmatprep.subr.mxu0 0.0
    %934 = vmatpush1.msra.mxu0 %v329
    %935 = vmatprep.subr.mxu0 0.0
    %936 = vmatpush1.msra.mxu0 %v334
    %937 = vmatprep.subr.mxu0 0.0
    %938 = vmatpush1.msra.mxu0 %v339
    %939 = vmatprep.subr.mxu0 0.0
    %940 = vmatpush1.msra.mxu0 %v344
    %941 = vmatprep.subr.mxu0 0.0
    %942 = vmatpush1.msra.mxu0 0.0
    %943 = vmatprep.subr.mxu0 0.0
    %944 = vmatpush1.msra.mxu0 0.0
    %945 = vmatprep.subr.mxu0 0.0
    %946 = vmatpush1.msra.mxu0 0.0
    %947 = vmatprep.subr.mxu0 0.0
    %948 = vmatpush1.msra.mxu0 0.0
    %949 = vmatprep.subr.mxu0 0.0
    %950 = vmatpush1.msra.mxu0 0.0
    %951 = vmatprep.subr.mxu0 0.0
    %952 = vmatpush1.msra.mxu0 0.0
    %953 = vmatprep.subr.mxu0 0.0
    %954 = vmatpush1.msra.mxu0 0.0
    %955 = vmatprep.subr.mxu0 0.0
    %956 = vmatpush1.msra.mxu0 0.0
    %957 = vmatprep.subr.mxu0 0.0
    %958 = vmatpush1.msra.mxu0 0.0
    %959 = vmatprep.subr.mxu0 0.0
    %960 = vmatpush1.msra.mxu0 0.0
    %961 = vmatprep.subr.mxu0 0.0
    %962 = vmatpush1.msra.mxu0 0.0
    %963 = vmatprep.subr.mxu0 0.0
    %964 = vmatpush1.msra.mxu0 0.0
    %965 = vmatprep.subr.mxu0 0.0
    %966 = vmatpush1.msra.mxu0 0.0
    %967 = vmatprep.subr.mxu0 0.0
    %968 = vmatpush1.msra.mxu0 0.0
    %969 = vmatprep.subr.mxu0 0.0
    %970 = vmatpush1.msra.mxu0 0.0
    %971 = vmatprep.subr.mxu0 0.0
    %972 = vmatpush1.msra.mxu0 0.0
    %973 = vmatprep.subr.mxu0 0.0
    %974 = vmatpush1.msra.mxu0 0.0
    %975 = vmatprep.subr.mxu0 0.0
    %976 = vmatpush1.msra.mxu0 0.0
    %977 = vmatprep.subr.mxu0 0.0
    %978 = vmatpush1.msra.mxu0 0.0
    %979 = vmatprep.subr.mxu0 0.0
    %980 = vmatpush1.msra.mxu0 0.0
    %981 = vmatprep.subr.mxu0 0.0
    %982 = vmatpush1.msra.mxu0 0.0
    %983 = vmatprep.subr.mxu0 0.0
    %984 = vmatpush1.msra.mxu0 0.0
    %985 = vmatprep.subr.mxu0 0.0
    %986 = vmatpush1.msra.mxu0 0.0
    %987 = vmatprep.subr.mxu0 0.0
    %988 = vmatpush1.msra.mxu0 0.0
    %989 = vmatprep.subr.mxu0 0.0
    %990 = vmatpush1.msra.mxu0 0.0
    %991 = vmatprep.subr.mxu0 0.0
    %992 = vmatpush1.msra.mxu0 0.0
    %993 = vmatprep.mubr.f32.mxu0 0.0
    %994 = vmatmul.mubr.f32.gmra.mrb[0].mxu0 %v838
    %v995 = vpop.f32.mrb[0].mxu0
    %v996 = vadd.f32 %v824, %v995
    %v997 = vpop.f32.mrb[0].mxu0
    %998 = vmatprep.mubr.f32.mxu0 0.0
    %999 = vmatmul.mubr.f32.gmra.mrb[0].mxu0 %v841
    %v1000 = vpop.f32.mrb[0].mxu0
    %v1001 = vadd.f32 %v829, %v1000
    %v1002 = vpop.f32.mrb[0].mxu0
    %1003 = vmatprep.mubr.f32.mxu0 0.0
    %1004 = vmatmul.mubr.f32.gmra.mrb[0].mxu0 %v844
    %v1005 = vpop.f32.mrb[0].mxu0
    %v1006 = vadd.f32 %v834, %v1005
    %v1007 = vpop.f32.mrb[0].mxu0
    %1008 = vdwg.mxu0
    %1009 = vmatprep.subr.mxu0 %v504
    %1010 = vmatpush1.msra.mxu0 %v502
    %1011 = vmatprep.subr.mxu0 %v510
    %1012 = vmatpush1.msra.mxu0 %v508
    %1013 = vmatprep.subr.mxu0 %v516
    %1014 = vmatpush1.msra.mxu0 %v514
    %1015 = vmatprep.subr.mxu0 %v522
    %1016 = vmatpush1.msra.mxu0 %v520
    %1017 = vmatprep.subr.mxu0 %v528
    %1018 = vmatpush1.msra.mxu0 %v526
    %1019 = vmatprep.subr.mxu0 %v534
    %1020 = vmatpush1.msra.mxu0 %v532
    %1021 = vmatprep.subr.mxu0 0.0
    %1022 = vmatpush1.msra.mxu0 0.0
    %1023 = vmatprep.subr.mxu0 0.0
    %1024 = vmatpush1.msra.mxu0 0.0
    %1025 = vmatprep.subr.mxu0 0.0
    %1026 = vmatpush1.msra.mxu0 0.0
    %1027 = vmatprep.subr.mxu0 0.0
    %1028 = vmatpush1.msra.mxu0 0.0
    %1029 = vmatprep.subr.mxu0 0.0
    %1030 = vmatpush1.msra.mxu0 0.0
    %1031 = vmatprep.subr.mxu0 0.0
    %1032 = vmatpush1.msra.mxu0 0.0
    %1033 = vmatprep.subr.mxu0 0.0
    %1034 = vmatpush1.msra.mxu0 0.0
    %1035 = vmatprep.subr.mxu0 0.0
    %1036 = vmatpush1.msra.mxu0 0.0
    %1037 = vmatprep.subr.mxu0 0.0
    %1038 = vmatpush1.msra.mxu0 0.0
    %1039 = vmatprep.subr.mxu0 0.0
    %1040 = vmatpush1.msra.mxu0 0.0
    %1041 = vmatprep.subr.mxu0 0.0
    %1042 = vmatpush1.msra.mxu0 0.0
    %1043 = vmatprep.subr.mxu0 0.0
    %1044 = vmatpush1.msra.mxu0 0.0
    %1045 = vmatprep.subr.mxu0 0.0
    %1046 = vmatpush1.msra.mxu0 0.0
    %1047 = vmatprep.subr.mxu0 0.0
    %1048 = vmatpush1.msra.mxu0 0.0
    %1049 = vmatprep.subr.mxu0 0.0
    %1050 = vmatpush1.msra.mxu0 0.0
    %1051 = vmatprep.subr.mxu0 0.0
    %1052 = vmatpush1.msra.mxu0 0.0
    %1053 = vmatprep.subr.mxu0 0.0
    %1054 = vmatpush1.msra.mxu0 0.0
    %1055 = vmatprep.subr.mxu0 0.0
    %1056 = vmatpush1.msra.mxu0 0.0
    %1057 = vmatprep.subr.mxu0 0.0
    %1058 = vmatpush1.msra.mxu0 0.0
    %1059 = vmatprep.subr.mxu0 0.0
    %1060 = vmatpush1.msra.mxu0 0.0
    %1061 = vmatprep.subr.mxu0 0.0
    %1062 = vmatpush1.msra.mxu0 0.0
    %1063 = vmatprep.subr.mxu0 0.0
    %1064 = vmatpush1.msra.mxu0 0.0
    %1065 = vmatprep.subr.mxu0 0.0
    %1066 = vmatpush1.msra.mxu0 0.0
    %1067 = vmatprep.subr.mxu0 0.0
    %1068 = vmatpush1.msra.mxu0 0.0
    %1069 = vmatprep.subr.mxu0 0.0
    %1070 = vmatpush1.msra.mxu0 0.0
    %1071 = vmatprep.subr.mxu0 0.0
    %1072 = vmatpush1.msra.mxu0 0.0
    %1073 = vmatprep.mubr.f32.mxu0 0.0
    %1074 = vmatmul.mubr.f32.gmra.mrb[0].mxu0 %v666
    %v1075 = vpop.f32.mrb[0].mxu0
    %v1076 = vadd.f32 0.0, %v1075
    %v1077 = vpop.f32.mrb[0].mxu0
    %v1078 = vadd.f32 0.0, %v1077
    %1079 = vmatprep.mubr.f32.mxu0 0.0
    %1080 = vmatmul.mubr.f32.gmra.mrb[0].mxu0 %v669
    %v1081 = vpop.f32.mrb[0].mxu0
    %v1082 = vadd.f32 0.0, %v1081
    %v1083 = vpop.f32.mrb[0].mxu0
    %v1084 = vadd.f32 0.0, %v1083
    %1085 = vmatprep.mubr.f32.mxu0 0.0
    %1086 = vmatmul.mubr.f32.gmra.mrb[0].mxu0 %v672
    %v1087 = vpop.f32.mrb[0].mxu0
    %v1088 = vadd.f32 0.0, %v1087
    %v1089 = vpop.f32.mrb[0].mxu0
    %v1090 = vadd.f32 0.0, %v1089
    %1091 = vdwg.mxu0
    %1092 = vmatprep.subr.mxu0 0.0
    %1093 = vmatpush1.msra.mxu0 %v633
    %1094 = vmatprep.subr.mxu0 0.0
    %1095 = vmatpush1.msra.mxu0 %v638
    %1096 = vmatprep.subr.mxu0 0.0
    %1097 = vmatpush1.msra.mxu0 %v643
    %1098 = vmatprep.subr.mxu0 0.0
    %1099 = vmatpush1.msra.mxu0 %v648
    %1100 = vmatprep.subr.mxu0 0.0
    %1101 = vmatpush1.msra.mxu0 %v653
    %1102 = vmatprep.subr.mxu0 0.0
    %1103 = vmatpush1.msra.mxu0 %v658
    %1104 = vmatprep.subr.mxu0 0.0
    %1105 = vmatpush1.msra.mxu0 0.0
    %1106 = vmatprep.subr.mxu0 0.0
    %1107 = vmatpush1.msra.mxu0 0.0
    %1108 = vmatprep.subr.mxu0 0.0
    %1109 = vmatpush1.msra.mxu0 0.0
    %1110 = vmatprep.subr.mxu0 0.0
    %1111 = vmatpush1.msra.mxu0 0.0
    %1112 = vmatprep.subr.mxu0 0.0
    %1113 = vmatpush1.msra.mxu0 0.0
    %1114 = vmatprep.subr.mxu0 0.0
    %1115 = vmatpush1.msra.mxu0 0.0
    %1116 = vmatprep.subr.mxu0 0.0
    %1117 = vmatpush1.msra.mxu0 0.0
    %1118 = vmatprep.subr.mxu0 0.0
    %1119 = vmatpush1.msra.mxu0 0.0
    %1120 = vmatprep.subr.mxu0 0.0
    %1121 = vmatpush1.msra.mxu0 0.0
    %1122 = vmatprep.subr.mxu0 0.0
    %1123 = vmatpush1.msra.mxu0 0.0
    %1124 = vmatprep.subr.mxu0 0.0
    %1125 = vmatpush1.msra.mxu0 0.0
    %1126 = vmatprep.subr.mxu0 0.0
    %1127 = vmatpush1.msra.mxu0 0.0
    %1128 = vmatprep.subr.mxu0 0.0
    %1129 = vmatpush1.msra.mxu0 0.0
    %1130 = vmatprep.subr.mxu0 0.0
    %1131 = vmatpush1.msra.mxu0 0.0
    %1132 = vmatprep.subr.mxu0 0.0
    %1133 = vmatpush1.msra.mxu0 0.0
    %1134 = vmatprep.subr.mxu0 0.0
    %1135 = vmatpush1.msra.mxu0 0.0
    %1136 = vmatprep.subr.mxu0 0.0
    %1137 = vmatpush1.msra.mxu0 0.0
    %1138 = vmatprep.subr.mxu0 0.0
    %1139 = vmatpush1.msra.mxu0 0.0
    %1140 = vmatprep.subr.mxu0 0.0
    %1141 = vmatpush1.msra.mxu0 0.0
    %1142 = vmatprep.subr.mxu0 0.0
    %1143 = vmatpush1.msra.mxu0 0.0
    %1144 = vmatprep.subr.mxu0 0.0
    %1145 = vmatpush1.msra.mxu0 0.0
    %1146 = vmatprep.subr.mxu0 0.0
    %1147 = vmatpush1.msra.mxu0 0.0
    %1148 = vmatprep.subr.mxu0 0.0
    %1149 = vmatpush1.msra.mxu0 0.0
    %1150 = vmatprep.subr.mxu0 0.0
    %1151 = vmatpush1.msra.mxu0 0.0
    %1152 = vmatprep.subr.mxu0 0.0
    %1153 = vmatpush1.msra.mxu0 0.0
    %1154 = vmatprep.subr.mxu0 0.0
    %1155 = vmatpush1.msra.mxu0 0.0
    %1156 = vmatprep.mubr.f32.mxu0 0.0
    %1157 = vmatmul.mubr.f32.gmra.mrb[0].mxu0 %v666
    %v1158 = vpop.f32.mrb[0].mxu0
    %v1159 = vadd.f32 0.0, %v1158
    %v1160 = vpop.f32.mrb[0].mxu0
    %1161 = vmatprep.mubr.f32.mxu0 0.0
    %1162 = vmatmul.mubr.f32.gmra.mrb[0].mxu0 %v669
    %v1163 = vpop.f32.mrb[0].mxu0
    %v1164 = vadd.f32 0.0, %v1163
    %v1165 = vpop.f32.mrb[0].mxu0
    %1166 = vmatprep.mubr.f32.mxu0 0.0
    %1167 = vmatmul.mubr.f32.gmra.mrb[0].mxu0 %v672
    %v1168 = vpop.f32.mrb[0].mxu0
    %v1169 = vadd.f32 0.0, %v1168
    %v1170 = vpop.f32.mrb[0].mxu0
    %1171 = vdwg.mxu0
    %1172 = vmatprep.subr.mxu0 %v220
    %1173 = vmatpush1.msra.mxu0 %v218
    %1174 = vmatprep.subr.mxu0 %v226
    %1175 = vmatpush1.msra.mxu0 %v224
    %1176 = vmatprep.subr.mxu0 %v232
    %1177 = vmatpush1.msra.mxu0 %v230
    %1178 = vmatprep.subr.mxu0 %v238
    %1179 = vmatpush1.msra.mxu0 %v236
    %1180 = vmatprep.subr.mxu0 %v244
    %1181 = vmatpush1.msra.mxu0 %v242
    %1182 = vmatprep.subr.mxu0 %v250
    %1183 = vmatpush1.msra.mxu0 %v248
    %1184 = vmatprep.subr.mxu0 0.0
    %1185 = vmatpush1.msra.mxu0 0.0
    %1186 = vmatprep.subr.mxu0 0.0
    %1187 = vmatpush1.msra.mxu0 0.0
    %1188 = vmatprep.subr.mxu0 0.0
    %1189 = vmatpush1.msra.mxu0 0.0
    %1190 = vmatprep.subr.mxu0 0.0
    %1191 = vmatpush1.msra.mxu0 0.0
    %1192 = vmatprep.subr.mxu0 0.0
    %1193 = vmatpush1.msra.mxu0 0.0
    %1194 = vmatprep.subr.mxu0 0.0
    %1195 = vmatpush1.msra.mxu0 0.0
    %1196 = vmatprep.subr.mxu0 0.0
    %1197 = vmatpush1.msra.mxu0 0.0
    %1198 = vmatprep.subr.mxu0 0.0
    %1199 = vmatpush1.msra.mxu0 0.0
    %1200 = vmatprep.subr.mxu0 0.0
    %1201 = vmatpush1.msra.mxu0 0.0
    %1202 = vmatprep.subr.mxu0 0.0
    %1203 = vmatpush1.msra.mxu0 0.0
    %1204 = vmatprep.subr.mxu0 0.0
    %1205 = vmatpush1.msra.mxu0 0.0
    %1206 = vmatprep.subr.mxu0 0.0
    %1207 = vmatpush1.msra.mxu0 0.0
    %1208 = vmatprep.subr.mxu0 0.0
    %1209 = vmatpush1.msra.mxu0 0.0
    %1210 = vmatprep.subr.mxu0 0.0
    %1211 = vmatpush1.msra.mxu0 0.0
    %1212 = vmatprep.subr.mxu0 0.0
    %1213 = vmatpush1.msra.mxu0 0.0
    %1214 = vmatprep.subr.mxu0 0.0
    %1215 = vmatpush1.msra.mxu0 0.0
    %1216 = vmatprep.subr.mxu0 0.0
    %1217 = vmatpush1.msra.mxu0 0.0
    %1218 = vmatprep.subr.mxu0 0.0
    %1219 = vmatpush1.msra.mxu0 0.0
    %1220 = vmatprep.subr.mxu0 0.0
    %1221 = vmatpush1.msra.mxu0 0.0
    %1222 = vmatprep.subr.mxu0 0.0
    %1223 = vmatpush1.msra.mxu0 0.0
    %1224 = vmatprep.subr.mxu0 0.0
    %1225 = vmatpush1.msra.mxu0 0.0
    %1226 = vmatprep.subr.mxu0 0.0
    %1227 = vmatpush1.msra.mxu0 0.0
    %1228 = vmatprep.subr.mxu0 0.0
    %1229 = vmatpush1.msra.mxu0 0.0
    %1230 = vmatprep.subr.mxu0 0.0
    %1231 = vmatpush1.msra.mxu0 0.0
    %1232 = vmatprep.subr.mxu0 0.0
    %1233 = vmatpush1.msra.mxu0 0.0
    %1234 = vmatprep.subr.mxu0 0.0
    %1235 = vmatpush1.msra.mxu0 0.0
    %1236 = vmatprep.mubr.f32.mxu0 0.0
    %1237 = vmatmul.mubr.f32.gmra.mrb[0].mxu0 %v838
    %v1238 = vpop.f32.mrb[0].mxu0
    %v1239 = vadd.f32 %v1076, %v1238
    %v1240 = vpop.f32.mrb[0].mxu0
    %v1241 = vadd.f32 %v1078, %v1240
    %1242 = vmatprep.mubr.f32.mxu0 0.0
    %1243 = vmatmul.mubr.f32.gmra.mrb[0].mxu0 %v841
    %v1244 = vpop.f32.mrb[0].mxu0
    %v1245 = vadd.f32 %v1082, %v1244
    %v1246 = vpop.f32.mrb[0].mxu0
    %v1247 = vadd.f32 %v1084, %v1246
    %1248 = vmatprep.mubr.f32.mxu0 0.0
    %1249 = vmatmul.mubr.f32.gmra.mrb[0].mxu0 %v844
    %v1250 = vpop.f32.mrb[0].mxu0
    %v1251 = vadd.f32 %v1088, %v1250
    %v1252 = vpop.f32.mrb[0].mxu0
    %v1253 = vadd.f32 %v1090, %v1252
    %1254 = vdwg.mxu0
    %1255 = vmatprep.subr.mxu0 0.0
    %1256 = vmatpush1.msra.mxu0 %v349
    %1257 = vmatprep.subr.mxu0 0.0
    %1258 = vmatpush1.msra.mxu0 %v354
    %1259 = vmatprep.subr.mxu0 0.0
    %1260 = vmatpush1.msra.mxu0 %v359
    %1261 = vmatprep.subr.mxu0 0.0
    %1262 = vmatpush1.msra.mxu0 %v364
    %1263 = vmatprep.subr.mxu0 0.0
    %1264 = vmatpush1.msra.mxu0 %v369
    %1265 = vmatprep.subr.mxu0 0.0
    %1266 = vmatpush1.msra.mxu0 %v374
    %1267 = vmatprep.subr.mxu0 0.0
    %1268 = vmatpush1.msra.mxu0 0.0
    %1269 = vmatprep.subr.mxu0 0.0
    %1270 = vmatpush1.msra.mxu0 0.0
    %1271 = vmatprep.subr.mxu0 0.0
    %1272 = vmatpush1.msra.mxu0 0.0
    %1273 = vmatprep.subr.mxu0 0.0
    %1274 = vmatpush1.msra.mxu0 0.0
    %1275 = vmatprep.subr.mxu0 0.0
    %1276 = vmatpush1.msra.mxu0 0.0
    %1277 = vmatprep.subr.mxu0 0.0
    %1278 = vmatpush1.msra.mxu0 0.0
    %1279 = vmatprep.subr.mxu0 0.0
    %1280 = vmatpush1.msra.mxu0 0.0
    %1281 = vmatprep.subr.mxu0 0.0
    %1282 = vmatpush1.msra.mxu0 0.0
    %1283 = vmatprep.subr.mxu0 0.0
    %1284 = vmatpush1.msra.mxu0 0.0
    %1285 = vmatprep.subr.mxu0 0.0
    %1286 = vmatpush1.msra.mxu0 0.0
    %1287 = vmatprep.subr.mxu0 0.0
    %1288 = vmatpush1.msra.mxu0 0.0
    %1289 = vmatprep.subr.mxu0 0.0
    %1290 = vmatpush1.msra.mxu0 0.0
    %1291 = vmatprep.subr.mxu0 0.0
    %1292 = vmatpush1.msra.mxu0 0.0
    %1293 = vmatprep.subr.mxu0 0.0
    %1294 = vmatpush1.msra.mxu0 0.0
    %1295 = vmatprep.subr.mxu0 0.0
    %1296 = vmatpush1.msra.mxu0 0.0
    %1297 = vmatprep.subr.mxu0 0.0
    %1298 = vmatpush1.msra.mxu0 0.0
    %1299 = vmatprep.subr.mxu0 0.0
    %1300 = vmatpush1.msra.mxu0 0.0
    %1301 = vmatprep.subr.mxu0 0.0
    %1302 = vmatpush1.msra.mxu0 0.0
    %1303 = vmatprep.subr.mxu0 0.0
    %1304 = vmatpush1.msra.mxu0 0.0
    %1305 = vmatprep.subr.mxu0 0.0
    %1306 = vmatpush1.msra.mxu0 0.0
    %1307 = vmatprep.subr.mxu0 0.0
    %1308 = vmatpush1.msra.mxu0 0.0
    %1309 = vmatprep.subr.mxu0 0.0
    %1310 = vmatpush1.msra.mxu0 0.0
    %1311 = vmatprep.subr.mxu0 0.0
    %1312 = vmatpush1.msra.mxu0 0.0
    %1313 = vmatprep.subr.mxu0 0.0
    %1314 = vmatpush1.msra.mxu0 0.0
    %1315 = vmatprep.subr.mxu0 0.0
    %1316 = vmatpush1.msra.mxu0 0.0
    %1317 = vmatprep.subr.mxu0 0.0
    %1318 = vmatpush1.msra.mxu0 0.0
    %1319 = vmatprep.mubr.f32.mxu0 0.0
    %1320 = vmatmul.mubr.f32.gmra.mrb[0].mxu0 %v838
    %v1321 = vpop.f32.mrb[0].mxu0
    %v1322 = vadd.f32 %v1159, %v1321
    %v1323 = vpop.f32.mrb[0].mxu0
    %1324 = vmatprep.mubr.f32.mxu0 0.0
    %1325 = vmatmul.mubr.f32.gmra.mrb[0].mxu0 %v841
    %v1326 = vpop.f32.mrb[0].mxu0
    %v1327 = vadd.f32 %v1164, %v1326
    %v1328 = vpop.f32.mrb[0].mxu0
    %1329 = vmatprep.mubr.f32.mxu0 0.0
    %1330 = vmatmul.mubr.f32.gmra.mrb[0].mxu0 %v844
    %v1331 = vpop.f32.mrb[0].mxu0
    %v1332 = vadd.f32 %v1169, %v1331
    %v1333 = vpop.f32.mrb[0].mxu0
    %1334 = vdwg.mxu0
    %s1335 = scalar_lea.vmem %s1, 288
    %v1336 = vld [vmem:[%s1335] sm:$0xff]
    %v1337 = vld [vmem:[%s1335 + $0x8] sm:$0xff]
    %v1338 = vld [vmem:[%s1335 + $0x10] sm:$0xff]
    %v1339 = vld [vmem:[%s1335 + $0x18] sm:$0xff]
    %v1340 = vld [vmem:[%s1335 + $0x20] sm:$0xff]
    %v1341 = vld [vmem:[%s1335 + $0x28] sm:$0xff]
    %v1342 = vld [vmem:[%s1335 + $0x30] sm:$0xff]
    %v1343 = vld [vmem:[%s1335 + $0x38] sm:$0xff]
    %v1344 = vld [vmem:[%s1335 + $0x40] sm:$0xff]
    %v1345 = vld [vmem:[%s1335 + $0x48] sm:$0xff]
    %v1346 = vld [vmem:[%s1335 + $0x50] sm:$0xff]
    %v1347 = vld [vmem:[%s1335 + $0x58] sm:$0xff]
    %v1348 = vld [vmem:[%s1335 + $0x60] sm:$0xff]
    %v1349 = vld [vmem:[%s1335 + $0x68] sm:$0xff]
    %v1350 = vld [vmem:[%s1335 + $0x70] sm:$0xff]
    %v1351 = vld [vmem:[%s1335 + $0x78] sm:$0xff]
    %v1352 = vld [vmem:[%s1335 + $0x80] sm:$0xff]
    %v1353 = vld [vmem:[%s1335 + $0x88] sm:$0xff]
    %1354 = vmatprep.subr.mxu0 %v1337
    %1355 = vmatpush1.msra.mxu0 %v1336
    %1356 = vmatprep.subr.mxu0 %v1340
    %1357 = vmatpush1.msra.mxu0 %v1339
    %1358 = vmatprep.subr.mxu0 %v1343
    %1359 = vmatpush1.msra.mxu0 %v1342
    %1360 = vmatprep.subr.mxu0 %v1346
    %1361 = vmatpush1.msra.mxu0 %v1345
    %1362 = vmatprep.subr.mxu0 %v1349
    %1363 = vmatpush1.msra.mxu0 %v1348
    %1364 = vmatprep.subr.mxu0 %v1352
    %1365 = vmatpush1.msra.mxu0 %v1351
    %1366 = vmatprep.subr.mxu0 0.0
    %1367 = vmatpush1.msra.mxu0 0.0
    %1368 = vmatprep.subr.mxu0 0.0
    %1369 = vmatpush1.msra.mxu0 0.0
    %1370 = vmatprep.subr.mxu0 0.0
    %1371 = vmatpush1.msra.mxu0 0.0
    %1372 = vmatprep.subr.mxu0 0.0
    %1373 = vmatpush1.msra.mxu0 0.0
    %1374 = vmatprep.subr.mxu0 0.0
    %1375 = vmatpush1.msra.mxu0 0.0
    %1376 = vmatprep.subr.mxu0 0.0
    %1377 = vmatpush1.msra.mxu0 0.0
    %1378 = vmatprep.subr.mxu0 0.0
    %1379 = vmatpush1.msra.mxu0 0.0
    %1380 = vmatprep.subr.mxu0 0.0
    %1381 = vmatpush1.msra.mxu0 0.0
    %1382 = vmatprep.subr.mxu0 0.0
    %1383 = vmatpush1.msra.mxu0 0.0
    %1384 = vmatprep.subr.mxu0 0.0
    %1385 = vmatpush1.msra.mxu0 0.0
    %1386 = vmatprep.subr.mxu0 0.0
    %1387 = vmatpush1.msra.mxu0 0.0
    %1388 = vmatprep.subr.mxu0 0.0
    %1389 = vmatpush1.msra.mxu0 0.0
    %1390 = vmatprep.subr.mxu0 0.0
    %1391 = vmatpush1.msra.mxu0 0.0
    %1392 = vmatprep.subr.mxu0 0.0
    %1393 = vmatpush1.msra.mxu0 0.0
    %1394 = vmatprep.subr.mxu0 0.0
    %1395 = vmatpush1.msra.mxu0 0.0
    %1396 = vmatprep.subr.mxu0 0.0
    %1397 = vmatpush1.msra.mxu0 0.0
    %1398 = vmatprep.subr.mxu0 0.0
    %1399 = vmatpush1.msra.mxu0 0.0
    %1400 = vmatprep.subr.mxu0 0.0
    %1401 = vmatpush1.msra.mxu0 0.0
    %1402 = vmatprep.subr.mxu0 0.0
    %1403 = vmatpush1.msra.mxu0 0.0
    %1404 = vmatprep.subr.mxu0 0.0
    %1405 = vmatpush1.msra.mxu0 0.0
    %1406 = vmatprep.subr.mxu0 0.0
    %1407 = vmatpush1.msra.mxu0 0.0
    %1408 = vmatprep.subr.mxu0 0.0
    %1409 = vmatpush1.msra.mxu0 0.0
    %1410 = vmatprep.subr.mxu0 0.0
    %1411 = vmatpush1.msra.mxu0 0.0
    %1412 = vmatprep.subr.mxu0 0.0
    %1413 = vmatpush1.msra.mxu0 0.0
    %1414 = vmatprep.subr.mxu0 0.0
    %1415 = vmatpush1.msra.mxu0 0.0
    %1416 = vmatprep.subr.mxu0 0.0
    %1417 = vmatpush1.msra.mxu0 0.0
    %1418 = vmatprep.mubr.f32.mxu0 0.0
    %1419 = vmatmul.mubr.f32.gmra.mrb[0].mxu0 %v80
    %v1420 = vpop.f32.mrb[0].mxu0
    %v1421 = vadd.f32 0.0, %v1420
    %v1422 = vpop.f32.mrb[0].mxu0
    %v1423 = vadd.f32 0.0, %v1422
    %1424 = vmatprep.mubr.f32.mxu0 0.0
    %1425 = vmatmul.mubr.f32.gmra.mrb[0].mxu0 %v83
    %v1426 = vpop.f32.mrb[0].mxu0
    %v1427 = vadd.f32 0.0, %v1426
    %v1428 = vpop.f32.mrb[0].mxu0
    %v1429 = vadd.f32 0.0, %v1428
    %1430 = vmatprep.mubr.f32.mxu0 0.0
    %1431 = vmatmul.mubr.f32.gmra.mrb[0].mxu0 %v86
    %v1432 = vpop.f32.mrb[0].mxu0
    %v1433 = vadd.f32 0.0, %v1432
    %v1434 = vpop.f32.mrb[0].mxu0
    %v1435 = vadd.f32 0.0, %v1434
    %1436 = vmatprep.mubr.f32.mxu0 0.0
    %1437 = vmatmul.mubr.f32.gmra.mrb[0].mxu0 %v89
    %v1438 = vpop.f32.mrb[0].mxu0
    %v1439 = vadd.f32 0.0, %v1438
    %v1440 = vpop.f32.mrb[0].mxu0
    %v1441 = vadd.f32 0.0, %v1440
    %1442 = vmatprep.mubr.f32.mxu0 0.0
    %1443 = vmatmul.mubr.f32.gmra.mrb[0].mxu0 %v92
    %v1444 = vpop.f32.mrb[0].mxu0
    %v1445 = vadd.f32 0.0, %v1444
    %v1446 = vpop.f32.mrb[0].mxu0
    %v1447 = vadd.f32 0.0, %v1446
    %1448 = vmatprep.mubr.f32.mxu0 0.0
    %1449 = vmatmul.mubr.f32.gmra.mrb[0].mxu0 %v95
    %v1450 = vpop.f32.mrb[0].mxu0
    %v1451 = vadd.f32 0.0, %v1450
    %v1452 = vpop.f32.mrb[0].mxu0
    %v1453 = vadd.f32 0.0, %v1452
    %1454 = vmatprep.mubr.f32.mxu0 0.0
    %1455 = vmatmul.mubr.f32.gmra.mrb[0].mxu0 %v98
    %v1456 = vpop.f32.mrb[0].mxu0
    %v1457 = vadd.f32 0.0, %v1456
    %v1458 = vpop.f32.mrb[0].mxu0
    %v1459 = vadd.f32 0.0, %v1458
    %1460 = vmatprep.mubr.f32.mxu0 0.0
    %1461 = vmatmul.mubr.f32.gmra.mrb[0].mxu0 %v101
    %v1462 = vpop.f32.mrb[0].mxu0
    %v1463 = vadd.f32 0.0, %v1462
    %v1464 = vpop.f32.mrb[0].mxu0
    %v1465 = vadd.f32 0.0, %v1464
    %1466 = vmatprep.mubr.f32.mxu0 0.0
    %1467 = vmatmul.mubr.f32.gmra.mrb[0].mxu0 %v104
    %v1468 = vpop.f32.mrb[0].mxu0
    %v1469 = vadd.f32 0.0, %v1468
    %v1470 = vpop.f32.mrb[0].mxu0
    %v1471 = vadd.f32 0.0, %v1470
    %1472 = vmatprep.mubr.f32.mxu0 0.0
    %1473 = vmatmul.mubr.f32.gmra.mrb[0].mxu0 %v107
    %v1474 = vpop.f32.mrb[0].mxu0
    %v1475 = vadd.f32 0.0, %v1474
    %v1476 = vpop.f32.mrb[0].mxu0
    %v1477 = vadd.f32 0.0, %v1476
    %1478 = vmatprep.mubr.f32.mxu0 0.0
    %1479 = vmatmul.mubr.f32.gmra.mrb[0].mxu0 %v110
    %v1480 = vpop.f32.mrb[0].mxu0
    %v1481 = vadd.f32 0.0, %v1480
    %v1482 = vpop.f32.mrb[0].mxu0
    %v1483 = vadd.f32 0.0, %v1482
    %1484 = vmatprep.mubr.f32.mxu0 0.0
    %1485 = vmatmul.mubr.f32.gmra.mrb[0].mxu0 %v113
    %v1486 = vpop.f32.mrb[0].mxu0
    %v1487 = vadd.f32 0.0, %v1486
    %v1488 = vpop.f32.mrb[0].mxu0
    %v1489 = vadd.f32 0.0, %v1488
    %1490 = vdwg.mxu0
    %1491 = vmatprep.subr.mxu0 0.0
    %1492 = vmatpush1.msra.mxu0 %v1338
    %1493 = vmatprep.subr.mxu0 0.0
    %1494 = vmatpush1.msra.mxu0 %v1341
    %1495 = vmatprep.subr.mxu0 0.0
    %1496 = vmatpush1.msra.mxu0 %v1344
    %1497 = vmatprep.subr.mxu0 0.0
    %1498 = vmatpush1.msra.mxu0 %v1347
    %1499 = vmatprep.subr.mxu0 0.0
    %1500 = vmatpush1.msra.mxu0 %v1350
    %1501 = vmatprep.subr.mxu0 0.0
    %1502 = vmatpush1.msra.mxu0 %v1353
    %1503 = vmatprep.subr.mxu0 0.0
    %1504 = vmatpush1.msra.mxu0 0.0
    %1505 = vmatprep.subr.mxu0 0.0
    %1506 = vmatpush1.msra.mxu0 0.0
    %1507 = vmatprep.subr.mxu0 0.0
    %1508 = vmatpush1.msra.mxu0 0.0
    %1509 = vmatprep.subr.mxu0 0.0
    %1510 = vmatpush1.msra.mxu0 0.0
    %1511 = vmatprep.subr.mxu0 0.0
    %1512 = vmatpush1.msra.mxu0 0.0
    %1513 = vmatprep.subr.mxu0 0.0
    %1514 = vmatpush1.msra.mxu0 0.0
    %1515 = vmatprep.subr.mxu0 0.0
    %1516 = vmatpush1.msra.mxu0 0.0
    %1517 = vmatprep.subr.mxu0 0.0
    %1518 = vmatpush1.msra.mxu0 0.0
    %1519 = vmatprep.subr.mxu0 0.0
    %1520 = vmatpush1.msra.mxu0 0.0
    %1521 = vmatprep.subr.mxu0 0.0
    %1522 = vmatpush1.msra.mxu0 0.0
    %1523 = vmatprep.subr.mxu0 0.0
    %1524 = vmatpush1.msra.mxu0 0.0
    %1525 = vmatprep.subr.mxu0 0.0
    %1526 = vmatpush1.msra.mxu0 0.0
    %1527 = vmatprep.subr.mxu0 0.0
    %1528 = vmatpush1.msra.mxu0 0.0
    %1529 = vmatprep.subr.mxu0 0.0
    %1530 = vmatpush1.msra.mxu0 0.0
    %1531 = vmatprep.subr.mxu0 0.0
    %1532 = vmatpush1.msra.mxu0 0.0
    %1533 = vmatprep.subr.mxu0 0.0
    %1534 = vmatpush1.msra.mxu0 0.0
    %1535 = vmatprep.subr.mxu0 0.0
    %1536 = vmatpush1.msra.mxu0 0.0
    %1537 = vmatprep.subr.mxu0 0.0
    %1538 = vmatpush1.msra.mxu0 0.0
    %1539 = vmatprep.subr.mxu0 0.0
    %1540 = vmatpush1.msra.mxu0 0.0
    %1541 = vmatprep.subr.mxu0 0.0
    %1542 = vmatpush1.msra.mxu0 0.0
    %1543 = vmatprep.subr.mxu0 0.0
    %1544 = vmatpush1.msra.mxu0 0.0
    %1545 = vmatprep.subr.mxu0 0.0
    %1546 = vmatpush1.msra.mxu0 0.0
    %1547 = vmatprep.subr.mxu0 0.0
    %1548 = vmatpush1.msra.mxu0 0.0
    %1549 = vmatprep.subr.mxu0 0.0
    %1550 = vmatpush1.msra.mxu0 0.0
    %1551 = vmatprep.subr.mxu0 0.0
    %1552 = vmatpush1.msra.mxu0 0.0
    %1553 = vmatprep.subr.mxu0 0.0
    %1554 = vmatpush1.msra.mxu0 0.0
    %1555 = vmatprep.mubr.f32.mxu0 0.0
    %1556 = vmatmul.mubr.f32.gmra.mrb[0].mxu0 %v80
    %v1557 = vpop.f32.mrb[0].mxu0
    %v1558 = vadd.f32 0.0, %v1557
    %v1559 = vpop.f32.mrb[0].mxu0
    %1560 = vmatprep.mubr.f32.mxu0 0.0
    %1561 = vmatmul.mubr.f32.gmra.mrb[0].mxu0 %v83
    %v1562 = vpop.f32.mrb[0].mxu0
    %v1563 = vadd.f32 0.0, %v1562
    %v1564 = vpop.f32.mrb[0].mxu0
    %1565 = vmatprep.mubr.f32.mxu0 0.0
    %1566 = vmatmul.mubr.f32.gmra.mrb[0].mxu0 %v86
    %v1567 = vpop.f32.mrb[0].mxu0
    %v1568 = vadd.f32 0.0, %v1567
    %v1569 = vpop.f32.mrb[0].mxu0
    %1570 = vmatprep.mubr.f32.mxu0 0.0
    %1571 = vmatmul.mubr.f32.gmra.mrb[0].mxu0 %v89
    %v1572 = vpop.f32.mrb[0].mxu0
    %v1573 = vadd.f32 0.0, %v1572
    %v1574 = vpop.f32.mrb[0].mxu0
    %1575 = vmatprep.mubr.f32.mxu0 0.0
    %1576 = vmatmul.mubr.f32.gmra.mrb[0].mxu0 %v92
    %v1577 = vpop.f32.mrb[0].mxu0
    %v1578 = vadd.f32 0.0, %v1577
    %v1579 = vpop.f32.mrb[0].mxu0
    %1580 = vmatprep.mubr.f32.mxu0 0.0
    %1581 = vmatmul.mubr.f32.gmra.mrb[0].mxu0 %v95
    %v1582 = vpop.f32.mrb[0].mxu0
    %v1583 = vadd.f32 0.0, %v1582
    %v1584 = vpop.f32.mrb[0].mxu0
    %1585 = vmatprep.mubr.f32.mxu0 0.0
    %1586 = vmatmul.mubr.f32.gmra.mrb[0].mxu0 %v98
    %v1587 = vpop.f32.mrb[0].mxu0
    %v1588 = vadd.f32 0.0, %v1587
    %v1589 = vpop.f32.mrb[0].mxu0
    %1590 = vmatprep.mubr.f32.mxu0 0.0
    %1591 = vmatmul.mubr.f32.gmra.mrb[0].mxu0 %v101
    %v1592 = vpop.f32.mrb[0].mxu0
    %v1593 = vadd.f32 0.0, %v1592
    %v1594 = vpop.f32.mrb[0].mxu0
    %1595 = vmatprep.mubr.f32.mxu0 0.0
    %1596 = vmatmul.mubr.f32.gmra.mrb[0].mxu0 %v104
    %v1597 = vpop.f32.mrb[0].mxu0
    %v1598 = vadd.f32 0.0, %v1597
    %v1599 = vpop.f32.mrb[0].mxu0
    %1600 = vmatprep.mubr.f32.mxu0 0.0
    %1601 = vmatmul.mubr.f32.gmra.mrb[0].mxu0 %v107
    %v1602 = vpop.f32.mrb[0].mxu0
    %v1603 = vadd.f32 0.0, %v1602
    %v1604 = vpop.f32.mrb[0].mxu0
    %1605 = vmatprep.mubr.f32.mxu0 0.0
    %1606 = vmatmul.mubr.f32.gmra.mrb[0].mxu0 %v110
    %v1607 = vpop.f32.mrb[0].mxu0
    %v1608 = vadd.f32 0.0, %v1607
    %v1609 = vpop.f32.mrb[0].mxu0
    %1610 = vmatprep.mubr.f32.mxu0 0.0
    %1611 = vmatmul.mubr.f32.gmra.mrb[0].mxu0 %v113
    %v1612 = vpop.f32.mrb[0].mxu0
    %v1613 = vadd.f32 0.0, %v1612
    %v1614 = vpop.f32.mrb[0].mxu0
    %1615 = vdwg.mxu0
    %s1616 = scalar_lea.vmem %s2, 48
    %v1617 = vld [vmem:[%s1616] sm:$0xff]
    %v1618 = vld [vmem:[%s1616 + $0x8] sm:$0xff]
    %v1619 = vld [vmem:[%s1616 + $0x10] sm:$0xff]
    %v1621 = vsel %vm78, %v1617, 0
    %v1624 = vsel %vm78, %v1618, 0
    %v1627 = vsel %vm78, %v1619, 0
    %1629 = vmatprep.subr.mxu0 %v1423
    %1630 = vmatpush1.msra.mxu0 %v1421
    %1631 = vmatprep.subr.mxu0 %v1429
    %1632 = vmatpush1.msra.mxu0 %v1427
    %1633 = vmatprep.subr.mxu0 %v1435
    %1634 = vmatpush1.msra.mxu0 %v1433
    %1635 = vmatprep.subr.mxu0 %v1441
    %1636 = vmatpush1.msra.mxu0 %v1439
    %1637 = vmatprep.subr.mxu0 %v1447
    %1638 = vmatpush1.msra.mxu0 %v1445
    %1639 = vmatprep.subr.mxu0 %v1453
    %1640 = vmatpush1.msra.mxu0 %v1451
    %1641 = vmatprep.subr.mxu0 0.0
    %1642 = vmatpush1.msra.mxu0 0.0
    %1643 = vmatprep.subr.mxu0 0.0
    %1644 = vmatpush1.msra.mxu0 0.0
    %1645 = vmatprep.subr.mxu0 0.0
    %1646 = vmatpush1.msra.mxu0 0.0
    %1647 = vmatprep.subr.mxu0 0.0
    %1648 = vmatpush1.msra.mxu0 0.0
    %1649 = vmatprep.subr.mxu0 0.0
    %1650 = vmatpush1.msra.mxu0 0.0
    %1651 = vmatprep.subr.mxu0 0.0
    %1652 = vmatpush1.msra.mxu0 0.0
    %1653 = vmatprep.subr.mxu0 0.0
    %1654 = vmatpush1.msra.mxu0 0.0
    %1655 = vmatprep.subr.mxu0 0.0
    %1656 = vmatpush1.msra.mxu0 0.0
    %1657 = vmatprep.subr.mxu0 0.0
    %1658 = vmatpush1.msra.mxu0 0.0
    %1659 = vmatprep.subr.mxu0 0.0
    %1660 = vmatpush1.msra.mxu0 0.0
    %1661 = vmatprep.subr.mxu0 0.0
    %1662 = vmatpush1.msra.mxu0 0.0
    %1663 = vmatprep.subr.mxu0 0.0
    %1664 = vmatpush1.msra.mxu0 0.0
    %1665 = vmatprep.subr.mxu0 0.0
    %1666 = vmatpush1.msra.mxu0 0.0
    %1667 = vmatprep.subr.mxu0 0.0
    %1668 = vmatpush1.msra.mxu0 0.0
    %1669 = vmatprep.subr.mxu0 0.0
    %1670 = vmatpush1.msra.mxu0 0.0
    %1671 = vmatprep.subr.mxu0 0.0
    %1672 = vmatpush1.msra.mxu0 0.0
    %1673 = vmatprep.subr.mxu0 0.0
    %1674 = vmatpush1.msra.mxu0 0.0
    %1675 = vmatprep.subr.mxu0 0.0
    %1676 = vmatpush1.msra.mxu0 0.0
    %1677 = vmatprep.subr.mxu0 0.0
    %1678 = vmatpush1.msra.mxu0 0.0
    %1679 = vmatprep.subr.mxu0 0.0
    %1680 = vmatpush1.msra.mxu0 0.0
    %1681 = vmatprep.subr.mxu0 0.0
    %1682 = vmatpush1.msra.mxu0 0.0
    %1683 = vmatprep.subr.mxu0 0.0
    %1684 = vmatpush1.msra.mxu0 0.0
    %1685 = vmatprep.subr.mxu0 0.0
    %1686 = vmatpush1.msra.mxu0 0.0
    %1687 = vmatprep.subr.mxu0 0.0
    %1688 = vmatpush1.msra.mxu0 0.0
    %1689 = vmatprep.subr.mxu0 0.0
    %1690 = vmatpush1.msra.mxu0 0.0
    %1691 = vmatprep.subr.mxu0 0.0
    %1692 = vmatpush1.msra.mxu0 0.0
    %1693 = vmatprep.mubr.f32.mxu0 0.0
    %1694 = vmatmul.mubr.f32.gmra.mrb[0].mxu0 %v1621
    %v1695 = vpop.f32.mrb[0].mxu0
    %v1696 = vadd.f32 0.0, %v1695
    %v1697 = vpop.f32.mrb[0].mxu0
    %v1698 = vadd.f32 0.0, %v1697
    %1699 = vmatprep.mubr.f32.mxu0 0.0
    %1700 = vmatmul.mubr.f32.gmra.mrb[0].mxu0 %v1624
    %v1701 = vpop.f32.mrb[0].mxu0
    %v1702 = vadd.f32 0.0, %v1701
    %v1703 = vpop.f32.mrb[0].mxu0
    %v1704 = vadd.f32 0.0, %v1703
    %1705 = vmatprep.mubr.f32.mxu0 0.0
    %1706 = vmatmul.mubr.f32.gmra.mrb[0].mxu0 %v1627
    %v1707 = vpop.f32.mrb[0].mxu0
    %v1708 = vadd.f32 0.0, %v1707
    %v1709 = vpop.f32.mrb[0].mxu0
    %v1710 = vadd.f32 0.0, %v1709
    %1711 = vdwg.mxu0
    %1712 = vmatprep.subr.mxu0 0.0
    %1713 = vmatpush1.msra.mxu0 %v1558
    %1714 = vmatprep.subr.mxu0 0.0
    %1715 = vmatpush1.msra.mxu0 %v1563
    %1716 = vmatprep.subr.mxu0 0.0
    %1717 = vmatpush1.msra.mxu0 %v1568
    %1718 = vmatprep.subr.mxu0 0.0
    %1719 = vmatpush1.msra.mxu0 %v1573
    %1720 = vmatprep.subr.mxu0 0.0
    %1721 = vmatpush1.msra.mxu0 %v1578
    %1722 = vmatprep.subr.mxu0 0.0
    %1723 = vmatpush1.msra.mxu0 %v1583
    %1724 = vmatprep.subr.mxu0 0.0
    %1725 = vmatpush1.msra.mxu0 0.0
    %1726 = vmatprep.subr.mxu0 0.0
    %1727 = vmatpush1.msra.mxu0 0.0
    %1728 = vmatprep.subr.mxu0 0.0
    %1729 = vmatpush1.msra.mxu0 0.0
    %1730 = vmatprep.subr.mxu0 0.0
    %1731 = vmatpush1.msra.mxu0 0.0
    %1732 = vmatprep.subr.mxu0 0.0
    %1733 = vmatpush1.msra.mxu0 0.0
    %1734 = vmatprep.subr.mxu0 0.0
    %1735 = vmatpush1.msra.mxu0 0.0
    %1736 = vmatprep.subr.mxu0 0.0
    %1737 = vmatpush1.msra.mxu0 0.0
    %1738 = vmatprep.subr.mxu0 0.0
    %1739 = vmatpush1.msra.mxu0 0.0
    %1740 = vmatprep.subr.mxu0 0.0
    %1741 = vmatpush1.msra.mxu0 0.0
    %1742 = vmatprep.subr.mxu0 0.0
    %1743 = vmatpush1.msra.mxu0 0.0
    %1744 = vmatprep.subr.mxu0 0.0
    %1745 = vmatpush1.msra.mxu0 0.0
    %1746 = vmatprep.subr.mxu0 0.0
    %1747 = vmatpush1.msra.mxu0 0.0
    %1748 = vmatprep.subr.mxu0 0.0
    %1749 = vmatpush1.msra.mxu0 0.0
    %1750 = vmatprep.subr.mxu0 0.0
    %1751 = vmatpush1.msra.mxu0 0.0
    %1752 = vmatprep.subr.mxu0 0.0
    %1753 = vmatpush1.msra.mxu0 0.0
    %1754 = vmatprep.subr.mxu0 0.0
    %1755 = vmatpush1.msra.mxu0 0.0
    %1756 = vmatprep.subr.mxu0 0.0
    %1757 = vmatpush1.msra.mxu0 0.0
    %1758 = vmatprep.subr.mxu0 0.0
    %1759 = vmatpush1.msra.mxu0 0.0
    %1760 = vmatprep.subr.mxu0 0.0
    %1761 = vmatpush1.msra.mxu0 0.0
    %1762 = vmatprep.subr.mxu0 0.0
    %1763 = vmatpush1.msra.mxu0 0.0
    %1764 = vmatprep.subr.mxu0 0.0
    %1765 = vmatpush1.msra.mxu0 0.0
    %1766 = vmatprep.subr.mxu0 0.0
    %1767 = vmatpush1.msra.mxu0 0.0
    %1768 = vmatprep.subr.mxu0 0.0
    %1769 = vmatpush1.msra.mxu0 0.0
    %1770 = vmatprep.subr.mxu0 0.0
    %1771 = vmatpush1.msra.mxu0 0.0
    %1772 = vmatprep.subr.mxu0 0.0
    %1773 = vmatpush1.msra.mxu0 0.0
    %1774 = vmatprep.subr.mxu0 0.0
    %1775 = vmatpush1.msra.mxu0 0.0
    %1776 = vmatprep.mubr.f32.mxu0 0.0
    %1777 = vmatmul.mubr.f32.gmra.mrb[0].mxu0 %v1621
    %v1778 = vpop.f32.mrb[0].mxu0
    %v1779 = vadd.f32 0.0, %v1778
    %v1780 = vpop.f32.mrb[0].mxu0
    %1781 = vmatprep.mubr.f32.mxu0 0.0
    %1782 = vmatmul.mubr.f32.gmra.mrb[0].mxu0 %v1624
    %v1783 = vpop.f32.mrb[0].mxu0
    %v1784 = vadd.f32 0.0, %v1783
    %v1785 = vpop.f32.mrb[0].mxu0
    %1786 = vmatprep.mubr.f32.mxu0 0.0
    %1787 = vmatmul.mubr.f32.gmra.mrb[0].mxu0 %v1627
    %v1788 = vpop.f32.mrb[0].mxu0
    %v1789 = vadd.f32 0.0, %v1788
    %v1790 = vpop.f32.mrb[0].mxu0
    %1791 = vdwg.mxu0
    %v1792 = vadd.f32 %v913, %v1696
    %v1793 = vadd.f32 %v915, %v1698
    %v1794 = vadd.f32 %v996, %v1779
    %v1795 = vadd.f32 %v919, %v1702
    %v1796 = vadd.f32 %v921, %v1704
    %v1797 = vadd.f32 %v1001, %v1784
    %v1798 = vadd.f32 %v925, %v1708
    %v1799 = vadd.f32 %v927, %v1710
    %v1800 = vadd.f32 %v1006, %v1789
    %1801 = vmatprep.subr.mxu0 %v1459
    %1802 = vmatpush1.msra.mxu0 %v1457
    %1803 = vmatprep.subr.mxu0 %v1465
    %1804 = vmatpush1.msra.mxu0 %v1463
    %1805 = vmatprep.subr.mxu0 %v1471
    %1806 = vmatpush1.msra.mxu0 %v1469
    %1807 = vmatprep.subr.mxu0 %v1477
    %1808 = vmatpush1.msra.mxu0 %v1475
    %1809 = vmatprep.subr.mxu0 %v1483
    %1810 = vmatpush1.msra.mxu0 %v1481
    %1811 = vmatprep.subr.mxu0 %v1489
    %1812 = vmatpush1.msra.mxu0 %v1487
    %1813 = vmatprep.subr.mxu0 0.0
    %1814 = vmatpush1.msra.mxu0 0.0
    %1815 = vmatprep.subr.mxu0 0.0
    %1816 = vmatpush1.msra.mxu0 0.0
    %1817 = vmatprep.subr.mxu0 0.0
    %1818 = vmatpush1.msra.mxu0 0.0
    %1819 = vmatprep.subr.mxu0 0.0
    %1820 = vmatpush1.msra.mxu0 0.0
    %1821 = vmatprep.subr.mxu0 0.0
    %1822 = vmatpush1.msra.mxu0 0.0
    %1823 = vmatprep.subr.mxu0 0.0
    %1824 = vmatpush1.msra.mxu0 0.0
    %1825 = vmatprep.subr.mxu0 0.0
    %1826 = vmatpush1.msra.mxu0 0.0
    %1827 = vmatprep.subr.mxu0 0.0
    %1828 = vmatpush1.msra.mxu0 0.0
    %1829 = vmatprep.subr.mxu0 0.0
    %1830 = vmatpush1.msra.mxu0 0.0
    %1831 = vmatprep.subr.mxu0 0.0
    %1832 = vmatpush1.msra.mxu0 0.0
    %1833 = vmatprep.subr.mxu0 0.0
    %1834 = vmatpush1.msra.mxu0 0.0
    %1835 = vmatprep.subr.mxu0 0.0
    %1836 = vmatpush1.msra.mxu0 0.0
    %1837 = vmatprep.subr.mxu0 0.0
    %1838 = vmatpush1.msra.mxu0 0.0
    %1839 = vmatprep.subr.mxu0 0.0
    %1840 = vmatpush1.msra.mxu0 0.0
    %1841 = vmatprep.subr.mxu0 0.0
    %1842 = vmatpush1.msra.mxu0 0.0
    %1843 = vmatprep.subr.mxu0 0.0
    %1844 = vmatpush1.msra.mxu0 0.0
    %1845 = vmatprep.subr.mxu0 0.0
    %1846 = vmatpush1.msra.mxu0 0.0
    %1847 = vmatprep.subr.mxu0 0.0
    %1848 = vmatpush1.msra.mxu0 0.0
    %1849 = vmatprep.subr.mxu0 0.0
    %1850 = vmatpush1.msra.mxu0 0.0
    %1851 = vmatprep.subr.mxu0 0.0
    %1852 = vmatpush1.msra.mxu0 0.0
    %1853 = vmatprep.subr.mxu0 0.0
    %1854 = vmatpush1.msra.mxu0 0.0
    %1855 = vmatprep.subr.mxu0 0.0
    %1856 = vmatpush1.msra.mxu0 0.0
    %1857 = vmatprep.subr.mxu0 0.0
    %1858 = vmatpush1.msra.mxu0 0.0
    %1859 = vmatprep.subr.mxu0 0.0
    %1860 = vmatpush1.msra.mxu0 0.0
    %1861 = vmatprep.subr.mxu0 0.0
    %1862 = vmatpush1.msra.mxu0 0.0
    %1863 = vmatprep.subr.mxu0 0.0
    %1864 = vmatpush1.msra.mxu0 0.0
    %1865 = vmatprep.mubr.f32.mxu0 0.0
    %1866 = vmatmul.mubr.f32.gmra.mrb[0].mxu0 %v1621
    %v1867 = vpop.f32.mrb[0].mxu0
    %v1868 = vadd.f32 0.0, %v1867
    %v1869 = vpop.f32.mrb[0].mxu0
    %v1870 = vadd.f32 0.0, %v1869
    %1871 = vmatprep.mubr.f32.mxu0 0.0
    %1872 = vmatmul.mubr.f32.gmra.mrb[0].mxu0 %v1624
    %v1873 = vpop.f32.mrb[0].mxu0
    %v1874 = vadd.f32 0.0, %v1873
    %v1875 = vpop.f32.mrb[0].mxu0
    %v1876 = vadd.f32 0.0, %v1875
    %1877 = vmatprep.mubr.f32.mxu0 0.0
    %1878 = vmatmul.mubr.f32.gmra.mrb[0].mxu0 %v1627
    %v1879 = vpop.f32.mrb[0].mxu0
    %v1880 = vadd.f32 0.0, %v1879
    %v1881 = vpop.f32.mrb[0].mxu0
    %v1882 = vadd.f32 0.0, %v1881
    %1883 = vdwg.mxu0
    %1884 = vmatprep.subr.mxu0 0.0
    %1885 = vmatpush1.msra.mxu0 %v1588
    %1886 = vmatprep.subr.mxu0 0.0
    %1887 = vmatpush1.msra.mxu0 %v1593
    %1888 = vmatprep.subr.mxu0 0.0
    %1889 = vmatpush1.msra.mxu0 %v1598
    %1890 = vmatprep.subr.mxu0 0.0
    %1891 = vmatpush1.msra.mxu0 %v1603
    %1892 = vmatprep.subr.mxu0 0.0
    %1893 = vmatpush1.msra.mxu0 %v1608
    %1894 = vmatprep.subr.mxu0 0.0
    %1895 = vmatpush1.msra.mxu0 %v1613
    %1896 = vmatprep.subr.mxu0 0.0
    %1897 = vmatpush1.msra.mxu0 0.0
    %1898 = vmatprep.subr.mxu0 0.0
    %1899 = vmatpush1.msra.mxu0 0.0
    %1900 = vmatprep.subr.mxu0 0.0
    %1901 = vmatpush1.msra.mxu0 0.0
    %1902 = vmatprep.subr.mxu0 0.0
    %1903 = vmatpush1.msra.mxu0 0.0
    %1904 = vmatprep.subr.mxu0 0.0
    %1905 = vmatpush1.msra.mxu0 0.0
    %1906 = vmatprep.subr.mxu0 0.0
    %1907 = vmatpush1.msra.mxu0 0.0
    %1908 = vmatprep.subr.mxu0 0.0
    %1909 = vmatpush1.msra.mxu0 0.0
    %1910 = vmatprep.subr.mxu0 0.0
    %1911 = vmatpush1.msra.mxu0 0.0
    %1912 = vmatprep.subr.mxu0 0.0
    %1913 = vmatpush1.msra.mxu0 0.0
    %1914 = vmatprep.subr.mxu0 0.0
    %1915 = vmatpush1.msra.mxu0 0.0
    %1916 = vmatprep.subr.mxu0 0.0
    %1917 = vmatpush1.msra.mxu0 0.0
    %1918 = vmatprep.subr.mxu0 0.0
    %1919 = vmatpush1.msra.mxu0 0.0
    %1920 = vmatprep.subr.mxu0 0.0
    %1921 = vmatpush1.msra.mxu0 0.0
    %1922 = vmatprep.subr.mxu0 0.0
    %1923 = vmatpush1.msra.mxu0 0.0
    %1924 = vmatprep.subr.mxu0 0.0
    %1925 = vmatpush1.msra.mxu0 0.0
    %1926 = vmatprep.subr.mxu0 0.0
    %1927 = vmatpush1.msra.mxu0 0.0
    %1928 = vmatprep.subr.mxu0 0.0
    %1929 = vmatpush1.msra.mxu0 0.0
    %1930 = vmatprep.subr.mxu0 0.0
    %1931 = vmatpush1.msra.mxu0 0.0
    %1932 = vmatprep.subr.mxu0 0.0
    %1933 = vmatpush1.msra.mxu0 0.0
    %1934 = vmatprep.subr.mxu0 0.0
    %1935 = vmatpush1.msra.mxu0 0.0
    %1936 = vmatprep.subr.mxu0 0.0
    %1937 = vmatpush1.msra.mxu0 0.0
    %1938 = vmatprep.subr.mxu0 0.0
    %1939 = vmatpush1.msra.mxu0 0.0
    %1940 = vmatprep.subr.mxu0 0.0
    %1941 = vmatpush1.msra.mxu0 0.0
    %1942 = vmatprep.subr.mxu0 0.0
    %1943 = vmatpush1.msra.mxu0 0.0
    %1944 = vmatprep.subr.mxu0 0.0
    %1945 = vmatpush1.msra.mxu0 0.0
    %1946 = vmatprep.subr.mxu0 0.0
    %1947 = vmatpush1.msra.mxu0 0.0
    %1948 = vmatprep.mubr.f32.mxu0 0.0
    %1949 = vmatmul.mubr.f32.gmra.mrb[0].mxu0 %v1621
    %v1950 = vpop.f32.mrb[0].mxu0
    %v1951 = vadd.f32 0.0, %v1950
    %v1952 = vpop.f32.mrb[0].mxu0
    %1953 = vmatprep.mubr.f32.mxu0 0.0
    %1954 = vmatmul.mubr.f32.gmra.mrb[0].mxu0 %v1624
    %v1955 = vpop.f32.mrb[0].mxu0
    %v1956 = vadd.f32 0.0, %v1955
    %v1957 = vpop.f32.mrb[0].mxu0
    %1958 = vmatprep.mubr.f32.mxu0 0.0
    %1959 = vmatmul.mubr.f32.gmra.mrb[0].mxu0 %v1627
    %v1960 = vpop.f32.mrb[0].mxu0
    %v1961 = vadd.f32 0.0, %v1960
    %v1962 = vpop.f32.mrb[0].mxu0
    %1963 = vdwg.mxu0
    %v1964 = vadd.f32 %v1239, %v1868
    %v1965 = vadd.f32 %v1241, %v1870
    %v1966 = vadd.f32 %v1322, %v1951
    %v1967 = vadd.f32 %v1245, %v1874
    %v1968 = vadd.f32 %v1247, %v1876
    %v1969 = vadd.f32 %v1327, %v1956
    %v1970 = vadd.f32 %v1251, %v1880
    %v1971 = vadd.f32 %v1253, %v1882
    %v1972 = vadd.f32 %v1332, %v1961
    %s1973 = scalar_lea.vmem %s1, 432
    %v1974 = vld [vmem:[%s1973] sm:$0xff]
    %v1975 = vld [vmem:[%s1973 + $0x8] sm:$0xff]
    %v1976 = vld [vmem:[%s1973 + $0x10] sm:$0xff]
    %v1977 = vld [vmem:[%s1973 + $0x18] sm:$0xff]
    %v1978 = vld [vmem:[%s1973 + $0x20] sm:$0xff]
    %v1979 = vld [vmem:[%s1973 + $0x28] sm:$0xff]
    %v1980 = vld [vmem:[%s1973 + $0x30] sm:$0xff]
    %v1981 = vld [vmem:[%s1973 + $0x38] sm:$0xff]
    %v1982 = vld [vmem:[%s1973 + $0x40] sm:$0xff]
    %v1983 = vld [vmem:[%s1973 + $0x48] sm:$0xff]
    %v1984 = vld [vmem:[%s1973 + $0x50] sm:$0xff]
    %v1985 = vld [vmem:[%s1973 + $0x58] sm:$0xff]
    %v1986 = vld [vmem:[%s1973 + $0x60] sm:$0xff]
    %v1987 = vld [vmem:[%s1973 + $0x68] sm:$0xff]
    %v1988 = vld [vmem:[%s1973 + $0x70] sm:$0xff]
    %v1989 = vld [vmem:[%s1973 + $0x78] sm:$0xff]
    %v1990 = vld [vmem:[%s1973 + $0x80] sm:$0xff]
    %v1991 = vld [vmem:[%s1973 + $0x88] sm:$0xff]
    %1992 = vmatprep.subr.mxu0 %v1975
    %1993 = vmatpush1.msra.mxu0 %v1974
    %1994 = vmatprep.subr.mxu0 %v1978
    %1995 = vmatpush1.msra.mxu0 %v1977
    %1996 = vmatprep.subr.mxu0 %v1981
    %1997 = vmatpush1.msra.mxu0 %v1980
    %1998 = vmatprep.subr.mxu0 %v1984
    %1999 = vmatpush1.msra.mxu0 %v1983
    %2000 = vmatprep.subr.mxu0 %v1987
    %2001 = vmatpush1.msra.mxu0 %v1986
    %2002 = vmatprep.subr.mxu0 %v1990
    %2003 = vmatpush1.msra.mxu0 %v1989
    %2004 = vmatprep.subr.mxu0 0.0
    %2005 = vmatpush1.msra.mxu0 0.0
    %2006 = vmatprep.subr.mxu0 0.0
    %2007 = vmatpush1.msra.mxu0 0.0
    %2008 = vmatprep.subr.mxu0 0.0
    %2009 = vmatpush1.msra.mxu0 0.0
    %2010 = vmatprep.subr.mxu0 0.0
    %2011 = vmatpush1.msra.mxu0 0.0
    %2012 = vmatprep.subr.mxu0 0.0
    %2013 = vmatpush1.msra.mxu0 0.0
    %2014 = vmatprep.subr.mxu0 0.0
    %2015 = vmatpush1.msra.mxu0 0.0
    %2016 = vmatprep.subr.mxu0 0.0
    %2017 = vmatpush1.msra.mxu0 0.0
    %2018 = vmatprep.subr.mxu0 0.0
    %2019 = vmatpush1.msra.mxu0 0.0
    %2020 = vmatprep.subr.mxu0 0.0
    %2021 = vmatpush1.msra.mxu0 0.0
    %2022 = vmatprep.subr.mxu0 0.0
    %2023 = vmatpush1.msra.mxu0 0.0
    %2024 = vmatprep.subr.mxu0 0.0
    %2025 = vmatpush1.msra.mxu0 0.0
    %2026 = vmatprep.subr.mxu0 0.0
    %2027 = vmatpush1.msra.mxu0 0.0
    %2028 = vmatprep.subr.mxu0 0.0
    %2029 = vmatpush1.msra.mxu0 0.0
    %2030 = vmatprep.subr.mxu0 0.0
    %2031 = vmatpush1.msra.mxu0 0.0
    %2032 = vmatprep.subr.mxu0 0.0
    %2033 = vmatpush1.msra.mxu0 0.0
    %2034 = vmatprep.subr.mxu0 0.0
    %2035 = vmatpush1.msra.mxu0 0.0
    %2036 = vmatprep.subr.mxu0 0.0
    %2037 = vmatpush1.msra.mxu0 0.0
    %2038 = vmatprep.subr.mxu0 0.0
    %2039 = vmatpush1.msra.mxu0 0.0
    %2040 = vmatprep.subr.mxu0 0.0
    %2041 = vmatpush1.msra.mxu0 0.0
    %2042 = vmatprep.subr.mxu0 0.0
    %2043 = vmatpush1.msra.mxu0 0.0
    %2044 = vmatprep.subr.mxu0 0.0
    %2045 = vmatpush1.msra.mxu0 0.0
    %2046 = vmatprep.subr.mxu0 0.0
    %2047 = vmatpush1.msra.mxu0 0.0
    %2048 = vmatprep.subr.mxu0 0.0
    %2049 = vmatpush1.msra.mxu0 0.0
    %2050 = vmatprep.subr.mxu0 0.0
    %2051 = vmatpush1.msra.mxu0 0.0
    %2052 = vmatprep.subr.mxu0 0.0
    %2053 = vmatpush1.msra.mxu0 0.0
    %2054 = vmatprep.subr.mxu0 0.0
    %2055 = vmatpush1.msra.mxu0 0.0
    %2056 = vmatprep.mubr.f32.mxu0 0.0
    %2057 = vmatmul.mubr.f32.gmra.mrb[0].mxu0 %v80
    %v2058 = vpop.f32.mrb[0].mxu0
    %v2059 = vadd.f32 0.0, %v2058
    %v2060 = vpop.f32.mrb[0].mxu0
    %v2061 = vadd.f32 0.0, %v2060
    %2062 = vmatprep.mubr.f32.mxu0 0.0
    %2063 = vmatmul.mubr.f32.gmra.mrb[0].mxu0 %v83
    %v2064 = vpop.f32.mrb[0].mxu0
    %v2065 = vadd.f32 0.0, %v2064
    %v2066 = vpop.f32.mrb[0].mxu0
    %v2067 = vadd.f32 0.0, %v2066
    %2068 = vmatprep.mubr.f32.mxu0 0.0
    %2069 = vmatmul.mubr.f32.gmra.mrb[0].mxu0 %v86
    %v2070 = vpop.f32.mrb[0].mxu0
    %v2071 = vadd.f32 0.0, %v2070
    %v2072 = vpop.f32.mrb[0].mxu0
    %v2073 = vadd.f32 0.0, %v2072
    %2074 = vmatprep.mubr.f32.mxu0 0.0
    %2075 = vmatmul.mubr.f32.gmra.mrb[0].mxu0 %v89
    %v2076 = vpop.f32.mrb[0].mxu0
    %v2077 = vadd.f32 0.0, %v2076
    %v2078 = vpop.f32.mrb[0].mxu0
    %v2079 = vadd.f32 0.0, %v2078
    %2080 = vmatprep.mubr.f32.mxu0 0.0
    %2081 = vmatmul.mubr.f32.gmra.mrb[0].mxu0 %v92
    %v2082 = vpop.f32.mrb[0].mxu0
    %v2083 = vadd.f32 0.0, %v2082
    %v2084 = vpop.f32.mrb[0].mxu0
    %v2085 = vadd.f32 0.0, %v2084
    %2086 = vmatprep.mubr.f32.mxu0 0.0
    %2087 = vmatmul.mubr.f32.gmra.mrb[0].mxu0 %v95
    %v2088 = vpop.f32.mrb[0].mxu0
    %v2089 = vadd.f32 0.0, %v2088
    %v2090 = vpop.f32.mrb[0].mxu0
    %v2091 = vadd.f32 0.0, %v2090
    %2092 = vmatprep.mubr.f32.mxu0 0.0
    %2093 = vmatmul.mubr.f32.gmra.mrb[0].mxu0 %v98
    %v2094 = vpop.f32.mrb[0].mxu0
    %v2095 = vadd.f32 0.0, %v2094
    %v2096 = vpop.f32.mrb[0].mxu0
    %v2097 = vadd.f32 0.0, %v2096
    %2098 = vmatprep.mubr.f32.mxu0 0.0
    %2099 = vmatmul.mubr.f32.gmra.mrb[0].mxu0 %v101
    %v2100 = vpop.f32.mrb[0].mxu0
    %v2101 = vadd.f32 0.0, %v2100
    %v2102 = vpop.f32.mrb[0].mxu0
    %v2103 = vadd.f32 0.0, %v2102
    %2104 = vmatprep.mubr.f32.mxu0 0.0
    %2105 = vmatmul.mubr.f32.gmra.mrb[0].mxu0 %v104
    %v2106 = vpop.f32.mrb[0].mxu0
    %v2107 = vadd.f32 0.0, %v2106
    %v2108 = vpop.f32.mrb[0].mxu0
    %v2109 = vadd.f32 0.0, %v2108
    %2110 = vmatprep.mubr.f32.mxu0 0.0
    %2111 = vmatmul.mubr.f32.gmra.mrb[0].mxu0 %v107
    %v2112 = vpop.f32.mrb[0].mxu0
    %v2113 = vadd.f32 0.0, %v2112
    %v2114 = vpop.f32.mrb[0].mxu0
    %v2115 = vadd.f32 0.0, %v2114
    %2116 = vmatprep.mubr.f32.mxu0 0.0
    %2117 = vmatmul.mubr.f32.gmra.mrb[0].mxu0 %v110
    %v2118 = vpop.f32.mrb[0].mxu0
    %v2119 = vadd.f32 0.0, %v2118
    %v2120 = vpop.f32.mrb[0].mxu0
    %v2121 = vadd.f32 0.0, %v2120
    %2122 = vmatprep.mubr.f32.mxu0 0.0
    %2123 = vmatmul.mubr.f32.gmra.mrb[0].mxu0 %v113
    %v2124 = vpop.f32.mrb[0].mxu0
    %v2125 = vadd.f32 0.0, %v2124
    %v2126 = vpop.f32.mrb[0].mxu0
    %v2127 = vadd.f32 0.0, %v2126
    %2128 = vdwg.mxu0
    %2129 = vmatprep.subr.mxu0 0.0
    %2130 = vmatpush1.msra.mxu0 %v1976
    %2131 = vmatprep.subr.mxu0 0.0
    %2132 = vmatpush1.msra.mxu0 %v1979
    %2133 = vmatprep.subr.mxu0 0.0
    %2134 = vmatpush1.msra.mxu0 %v1982
    %2135 = vmatprep.subr.mxu0 0.0
    %2136 = vmatpush1.msra.mxu0 %v1985
    %2137 = vmatprep.subr.mxu0 0.0
    %2138 = vmatpush1.msra.mxu0 %v1988
    %2139 = vmatprep.subr.mxu0 0.0
    %2140 = vmatpush1.msra.mxu0 %v1991
    %2141 = vmatprep.subr.mxu0 0.0
    %2142 = vmatpush1.msra.mxu0 0.0
    %2143 = vmatprep.subr.mxu0 0.0
    %2144 = vmatpush1.msra.mxu0 0.0
    %2145 = vmatprep.subr.mxu0 0.0
    %2146 = vmatpush1.msra.mxu0 0.0
    %2147 = vmatprep.subr.mxu0 0.0
    %2148 = vmatpush1.msra.mxu0 0.0
    %2149 = vmatprep.subr.mxu0 0.0
    %2150 = vmatpush1.msra.mxu0 0.0
    %2151 = vmatprep.subr.mxu0 0.0
    %2152 = vmatpush1.msra.mxu0 0.0
    %2153 = vmatprep.subr.mxu0 0.0
    %2154 = vmatpush1.msra.mxu0 0.0
    %2155 = vmatprep.subr.mxu0 0.0
    %2156 = vmatpush1.msra.mxu0 0.0
    %2157 = vmatprep.subr.mxu0 0.0
    %2158 = vmatpush1.msra.mxu0 0.0
    %2159 = vmatprep.subr.mxu0 0.0
    %2160 = vmatpush1.msra.mxu0 0.0
    %2161 = vmatprep.subr.mxu0 0.0
    %2162 = vmatpush1.msra.mxu0 0.0
    %2163 = vmatprep.subr.mxu0 0.0
    %2164 = vmatpush1.msra.mxu0 0.0
    %2165 = vmatprep.subr.mxu0 0.0
    %2166 = vmatpush1.msra.mxu0 0.0
    %2167 = vmatprep.subr.mxu0 0.0
    %2168 = vmatpush1.msra.mxu0 0.0
    %2169 = vmatprep.subr.mxu0 0.0
    %2170 = vmatpush1.msra.mxu0 0.0
    %2171 = vmatprep.subr.mxu0 0.0
    %2172 = vmatpush1.msra.mxu0 0.0
    %2173 = vmatprep.subr.mxu0 0.0
    %2174 = vmatpush1.msra.mxu0 0.0
    %2175 = vmatprep.subr.mxu0 0.0
    %2176 = vmatpush1.msra.mxu0 0.0
    %2177 = vmatprep.subr.mxu0 0.0
    %2178 = vmatpush1.msra.mxu0 0.0
    %2179 = vmatprep.subr.mxu0 0.0
    %2180 = vmatpush1.msra.mxu0 0.0
    %2181 = vmatprep.subr.mxu0 0.0
    %2182 = vmatpush1.msra.mxu0 0.0
    %2183 = vmatprep.subr.mxu0 0.0
    %2184 = vmatpush1.msra.mxu0 0.0
    %2185 = vmatprep.subr.mxu0 0.0
    %2186 = vmatpush1.msra.mxu0 0.0
    %2187 = vmatprep.subr.mxu0 0.0
    %2188 = vmatpush1.msra.mxu0 0.0
    %2189 = vmatprep.subr.mxu0 0.0
    %2190 = vmatpush1.msra.mxu0 0.0
    %2191 = vmatprep.subr.mxu0 0.0
    %2192 = vmatpush1.msra.mxu0 0.0
    %2193 = vmatprep.mubr.f32.mxu0 0.0
    %2194 = vmatmul.mubr.f32.gmra.mrb[0].mxu0 %v80
    %v2195 = vpop.f32.mrb[0].mxu0
    %v2196 = vadd.f32 0.0, %v2195
    %v2197 = vpop.f32.mrb[0].mxu0
    %2198 = vmatprep.mubr.f32.mxu0 0.0
    %2199 = vmatmul.mubr.f32.gmra.mrb[0].mxu0 %v83
    %v2200 = vpop.f32.mrb[0].mxu0
    %v2201 = vadd.f32 0.0, %v2200
    %v2202 = vpop.f32.mrb[0].mxu0
    %2203 = vmatprep.mubr.f32.mxu0 0.0
    %2204 = vmatmul.mubr.f32.gmra.mrb[0].mxu0 %v86
    %v2205 = vpop.f32.mrb[0].mxu0
    %v2206 = vadd.f32 0.0, %v2205
    %v2207 = vpop.f32.mrb[0].mxu0
    %2208 = vmatprep.mubr.f32.mxu0 0.0
    %2209 = vmatmul.mubr.f32.gmra.mrb[0].mxu0 %v89
    %v2210 = vpop.f32.mrb[0].mxu0
    %v2211 = vadd.f32 0.0, %v2210
    %v2212 = vpop.f32.mrb[0].mxu0
    %2213 = vmatprep.mubr.f32.mxu0 0.0
    %2214 = vmatmul.mubr.f32.gmra.mrb[0].mxu0 %v92
    %v2215 = vpop.f32.mrb[0].mxu0
    %v2216 = vadd.f32 0.0, %v2215
    %v2217 = vpop.f32.mrb[0].mxu0
    %2218 = vmatprep.mubr.f32.mxu0 0.0
    %2219 = vmatmul.mubr.f32.gmra.mrb[0].mxu0 %v95
    %v2220 = vpop.f32.mrb[0].mxu0
    %v2221 = vadd.f32 0.0, %v2220
    %v2222 = vpop.f32.mrb[0].mxu0
    %2223 = vmatprep.mubr.f32.mxu0 0.0
    %2224 = vmatmul.mubr.f32.gmra.mrb[0].mxu0 %v98
    %v2225 = vpop.f32.mrb[0].mxu0
    %v2226 = vadd.f32 0.0, %v2225
    %v2227 = vpop.f32.mrb[0].mxu0
    %2228 = vmatprep.mubr.f32.mxu0 0.0
    %2229 = vmatmul.mubr.f32.gmra.mrb[0].mxu0 %v101
    %v2230 = vpop.f32.mrb[0].mxu0
    %v2231 = vadd.f32 0.0, %v2230
    %v2232 = vpop.f32.mrb[0].mxu0
    %2233 = vmatprep.mubr.f32.mxu0 0.0
    %2234 = vmatmul.mubr.f32.gmra.mrb[0].mxu0 %v104
    %v2235 = vpop.f32.mrb[0].mxu0
    %v2236 = vadd.f32 0.0, %v2235
    %v2237 = vpop.f32.mrb[0].mxu0
    %2238 = vmatprep.mubr.f32.mxu0 0.0
    %2239 = vmatmul.mubr.f32.gmra.mrb[0].mxu0 %v107
    %v2240 = vpop.f32.mrb[0].mxu0
    %v2241 = vadd.f32 0.0, %v2240
    %v2242 = vpop.f32.mrb[0].mxu0
    %2243 = vmatprep.mubr.f32.mxu0 0.0
    %2244 = vmatmul.mubr.f32.gmra.mrb[0].mxu0 %v110
    %v2245 = vpop.f32.mrb[0].mxu0
    %v2246 = vadd.f32 0.0, %v2245
    %v2247 = vpop.f32.mrb[0].mxu0
    %2248 = vmatprep.mubr.f32.mxu0 0.0
    %2249 = vmatmul.mubr.f32.gmra.mrb[0].mxu0 %v113
    %v2250 = vpop.f32.mrb[0].mxu0
    %v2251 = vadd.f32 0.0, %v2250
    %v2252 = vpop.f32.mrb[0].mxu0
    %2253 = vdwg.mxu0
    %s2254 = scalar_lea.vmem %s2, 72
    %v2255 = vld [vmem:[%s2254] sm:$0xff]
    %v2256 = vld [vmem:[%s2254 + $0x8] sm:$0xff]
    %v2257 = vld [vmem:[%s2254 + $0x10] sm:$0xff]
    %v2259 = vsel %vm78, %v2255, 0
    %v2262 = vsel %vm78, %v2256, 0
    %v2265 = vsel %vm78, %v2257, 0
    %2267 = vmatprep.subr.mxu0 %v2061
    %2268 = vmatpush1.msra.mxu0 %v2059
    %2269 = vmatprep.subr.mxu0 %v2067
    %2270 = vmatpush1.msra.mxu0 %v2065
    %2271 = vmatprep.subr.mxu0 %v2073
    %2272 = vmatpush1.msra.mxu0 %v2071
    %2273 = vmatprep.subr.mxu0 %v2079
    %2274 = vmatpush1.msra.mxu0 %v2077
    %2275 = vmatprep.subr.mxu0 %v2085
    %2276 = vmatpush1.msra.mxu0 %v2083
    %2277 = vmatprep.subr.mxu0 %v2091
    %2278 = vmatpush1.msra.mxu0 %v2089
    %2279 = vmatprep.subr.mxu0 0.0
    %2280 = vmatpush1.msra.mxu0 0.0
    %2281 = vmatprep.subr.mxu0 0.0
    %2282 = vmatpush1.msra.mxu0 0.0
    %2283 = vmatprep.subr.mxu0 0.0
    %2284 = vmatpush1.msra.mxu0 0.0
    %2285 = vmatprep.subr.mxu0 0.0
    %2286 = vmatpush1.msra.mxu0 0.0
    %2287 = vmatprep.subr.mxu0 0.0
    %2288 = vmatpush1.msra.mxu0 0.0
    %2289 = vmatprep.subr.mxu0 0.0
    %2290 = vmatpush1.msra.mxu0 0.0
    %2291 = vmatprep.subr.mxu0 0.0
    %2292 = vmatpush1.msra.mxu0 0.0
    %2293 = vmatprep.subr.mxu0 0.0
    %2294 = vmatpush1.msra.mxu0 0.0
    %2295 = vmatprep.subr.mxu0 0.0
    %2296 = vmatpush1.msra.mxu0 0.0
    %2297 = vmatprep.subr.mxu0 0.0
    %2298 = vmatpush1.msra.mxu0 0.0
    %2299 = vmatprep.subr.mxu0 0.0
    %2300 = vmatpush1.msra.mxu0 0.0
    %2301 = vmatprep.subr.mxu0 0.0
    %2302 = vmatpush1.msra.mxu0 0.0
    %2303 = vmatprep.subr.mxu0 0.0
    %2304 = vmatpush1.msra.mxu0 0.0
    %2305 = vmatprep.subr.mxu0 0.0
    %2306 = vmatpush1.msra.mxu0 0.0
    %2307 = vmatprep.subr.mxu0 0.0
    %2308 = vmatpush1.msra.mxu0 0.0
    %2309 = vmatprep.subr.mxu0 0.0
    %2310 = vmatpush1.msra.mxu0 0.0
    %2311 = vmatprep.subr.mxu0 0.0
    %2312 = vmatpush1.msra.mxu0 0.0
    %2313 = vmatprep.subr.mxu0 0.0
    %2314 = vmatpush1.msra.mxu0 0.0
    %2315 = vmatprep.subr.mxu0 0.0
    %2316 = vmatpush1.msra.mxu0 0.0
    %2317 = vmatprep.subr.mxu0 0.0
    %2318 = vmatpush1.msra.mxu0 0.0
    %2319 = vmatprep.subr.mxu0 0.0
    %2320 = vmatpush1.msra.mxu0 0.0
    %2321 = vmatprep.subr.mxu0 0.0
    %2322 = vmatpush1.msra.mxu0 0.0
    %2323 = vmatprep.subr.mxu0 0.0
    %2324 = vmatpush1.msra.mxu0 0.0
    %2325 = vmatprep.subr.mxu0 0.0
    %2326 = vmatpush1.msra.mxu0 0.0
    %2327 = vmatprep.subr.mxu0 0.0
    %2328 = vmatpush1.msra.mxu0 0.0
    %2329 = vmatprep.subr.mxu0 0.0
    %2330 = vmatpush1.msra.mxu0 0.0
    %2331 = vmatprep.mubr.f32.mxu0 0.0
    %2332 = vmatmul.mubr.f32.gmra.mrb[0].mxu0 %v2259
    %v2333 = vpop.f32.mrb[0].mxu0
    %v2334 = vadd.f32 0.0, %v2333
    %v2335 = vpop.f32.mrb[0].mxu0
    %v2336 = vadd.f32 0.0, %v2335
    %2337 = vmatprep.mubr.f32.mxu0 0.0
    %2338 = vmatmul.mubr.f32.gmra.mrb[0].mxu0 %v2262
    %v2339 = vpop.f32.mrb[0].mxu0
    %v2340 = vadd.f32 0.0, %v2339
    %v2341 = vpop.f32.mrb[0].mxu0
    %v2342 = vadd.f32 0.0, %v2341
    %2343 = vmatprep.mubr.f32.mxu0 0.0
    %2344 = vmatmul.mubr.f32.gmra.mrb[0].mxu0 %v2265
    %v2345 = vpop.f32.mrb[0].mxu0
    %v2346 = vadd.f32 0.0, %v2345
    %v2347 = vpop.f32.mrb[0].mxu0
    %v2348 = vadd.f32 0.0, %v2347
    %2349 = vdwg.mxu0
    %2350 = vmatprep.subr.mxu0 0.0
    %2351 = vmatpush1.msra.mxu0 %v2196
    %2352 = vmatprep.subr.mxu0 0.0
    %2353 = vmatpush1.msra.mxu0 %v2201
    %2354 = vmatprep.subr.mxu0 0.0
    %2355 = vmatpush1.msra.mxu0 %v2206
    %2356 = vmatprep.subr.mxu0 0.0
    %2357 = vmatpush1.msra.mxu0 %v2211
    %2358 = vmatprep.subr.mxu0 0.0
    %2359 = vmatpush1.msra.mxu0 %v2216
    %2360 = vmatprep.subr.mxu0 0.0
    %2361 = vmatpush1.msra.mxu0 %v2221
    %2362 = vmatprep.subr.mxu0 0.0
    %2363 = vmatpush1.msra.mxu0 0.0
    %2364 = vmatprep.subr.mxu0 0.0
    %2365 = vmatpush1.msra.mxu0 0.0
    %2366 = vmatprep.subr.mxu0 0.0
    %2367 = vmatpush1.msra.mxu0 0.0
    %2368 = vmatprep.subr.mxu0 0.0
    %2369 = vmatpush1.msra.mxu0 0.0
    %2370 = vmatprep.subr.mxu0 0.0
    %2371 = vmatpush1.msra.mxu0 0.0
    %2372 = vmatprep.subr.mxu0 0.0
    %2373 = vmatpush1.msra.mxu0 0.0
    %2374 = vmatprep.subr.mxu0 0.0
    %2375 = vmatpush1.msra.mxu0 0.0
    %2376 = vmatprep.subr.mxu0 0.0
    %2377 = vmatpush1.msra.mxu0 0.0
    %2378 = vmatprep.subr.mxu0 0.0
    %2379 = vmatpush1.msra.mxu0 0.0
    %2380 = vmatprep.subr.mxu0 0.0
    %2381 = vmatpush1.msra.mxu0 0.0
    %2382 = vmatprep.subr.mxu0 0.0
    %2383 = vmatpush1.msra.mxu0 0.0
    %2384 = vmatprep.subr.mxu0 0.0
    %2385 = vmatpush1.msra.mxu0 0.0
    %2386 = vmatprep.subr.mxu0 0.0
    %2387 = vmatpush1.msra.mxu0 0.0
    %2388 = vmatprep.subr.mxu0 0.0
    %2389 = vmatpush1.msra.mxu0 0.0
    %2390 = vmatprep.subr.mxu0 0.0
    %2391 = vmatpush1.msra.mxu0 0.0
    %2392 = vmatprep.subr.mxu0 0.0
    %2393 = vmatpush1.msra.mxu0 0.0
    %2394 = vmatprep.subr.mxu0 0.0
    %2395 = vmatpush1.msra.mxu0 0.0
    %2396 = vmatprep.subr.mxu0 0.0
    %2397 = vmatpush1.msra.mxu0 0.0
    %2398 = vmatprep.subr.mxu0 0.0
    %2399 = vmatpush1.msra.mxu0 0.0
    %2400 = vmatprep.subr.mxu0 0.0
    %2401 = vmatpush1.msra.mxu0 0.0
    %2402 = vmatprep.subr.mxu0 0.0
    %2403 = vmatpush1.msra.mxu0 0.0
    %2404 = vmatprep.subr.mxu0 0.0
    %2405 = vmatpush1.msra.mxu0 0.0
    %2406 = vmatprep.subr.mxu0 0.0
    %2407 = vmatpush1.msra.mxu0 0.0
    %2408 = vmatprep.subr.mxu0 0.0
    %2409 = vmatpush1.msra.mxu0 0.0
    %2410 = vmatprep.subr.mxu0 0.0
    %2411 = vmatpush1.msra.mxu0 0.0
    %2412 = vmatprep.subr.mxu0 0.0
    %2413 = vmatpush1.msra.mxu0 0.0
    %2414 = vmatprep.mubr.f32.mxu0 0.0
    %2415 = vmatmul.mubr.f32.gmra.mrb[0].mxu0 %v2259
    %v2416 = vpop.f32.mrb[0].mxu0
    %v2417 = vadd.f32 0.0, %v2416
    %v2418 = vpop.f32.mrb[0].mxu0
    %2419 = vmatprep.mubr.f32.mxu0 0.0
    %2420 = vmatmul.mubr.f32.gmra.mrb[0].mxu0 %v2262
    %v2421 = vpop.f32.mrb[0].mxu0
    %v2422 = vadd.f32 0.0, %v2421
    %v2423 = vpop.f32.mrb[0].mxu0
    %2424 = vmatprep.mubr.f32.mxu0 0.0
    %2425 = vmatmul.mubr.f32.gmra.mrb[0].mxu0 %v2265
    %v2426 = vpop.f32.mrb[0].mxu0
    %v2427 = vadd.f32 0.0, %v2426
    %v2428 = vpop.f32.mrb[0].mxu0
    %2429 = vdwg.mxu0
    %v2430 = vadd.f32 %v1792, %v2334
    %v2431 = vadd.f32 %v1793, %v2336
    %v2432 = vadd.f32 %v1794, %v2417
    %v2433 = vadd.f32 %v1795, %v2340
    %v2434 = vadd.f32 %v1796, %v2342
    %v2435 = vadd.f32 %v1797, %v2422
    %v2436 = vadd.f32 %v1798, %v2346
    %v2437 = vadd.f32 %v1799, %v2348
    %v2438 = vadd.f32 %v1800, %v2427
    %2439 = vmatprep.subr.mxu0 %v2097
    %2440 = vmatpush1.msra.mxu0 %v2095
    %2441 = vmatprep.subr.mxu0 %v2103
    %2442 = vmatpush1.msra.mxu0 %v2101
    %2443 = vmatprep.subr.mxu0 %v2109
    %2444 = vmatpush1.msra.mxu0 %v2107
    %2445 = vmatprep.subr.mxu0 %v2115
    %2446 = vmatpush1.msra.mxu0 %v2113
    %2447 = vmatprep.subr.mxu0 %v2121
    %2448 = vmatpush1.msra.mxu0 %v2119
    %2449 = vmatprep.subr.mxu0 %v2127
    %2450 = vmatpush1.msra.mxu0 %v2125
    %2451 = vmatprep.subr.mxu0 0.0
    %2452 = vmatpush1.msra.mxu0 0.0
    %2453 = vmatprep.subr.mxu0 0.0
    %2454 = vmatpush1.msra.mxu0 0.0
    %2455 = vmatprep.subr.mxu0 0.0
    %2456 = vmatpush1.msra.mxu0 0.0
    %2457 = vmatprep.subr.mxu0 0.0
    %2458 = vmatpush1.msra.mxu0 0.0
    %2459 = vmatprep.subr.mxu0 0.0
    %2460 = vmatpush1.msra.mxu0 0.0
    %2461 = vmatprep.subr.mxu0 0.0
    %2462 = vmatpush1.msra.mxu0 0.0
    %2463 = vmatprep.subr.mxu0 0.0
    %2464 = vmatpush1.msra.mxu0 0.0
    %2465 = vmatprep.subr.mxu0 0.0
    %2466 = vmatpush1.msra.mxu0 0.0
    %2467 = vmatprep.subr.mxu0 0.0
    %2468 = vmatpush1.msra.mxu0 0.0
    %2469 = vmatprep.subr.mxu0 0.0
    %2470 = vmatpush1.msra.mxu0 0.0
    %2471 = vmatprep.subr.mxu0 0.0
    %2472 = vmatpush1.msra.mxu0 0.0
    %2473 = vmatprep.subr.mxu0 0.0
    %2474 = vmatpush1.msra.mxu0 0.0
    %2475 = vmatprep.subr.mxu0 0.0
    %2476 = vmatpush1.msra.mxu0 0.0
    %2477 = vmatprep.subr.mxu0 0.0
    %2478 = vmatpush1.msra.mxu0 0.0
    %2479 = vmatprep.subr.mxu0 0.0
    %2480 = vmatpush1.msra.mxu0 0.0
    %2481 = vmatprep.subr.mxu0 0.0
    %2482 = vmatpush1.msra.mxu0 0.0
    %2483 = vmatprep.subr.mxu0 0.0
    %2484 = vmatpush1.msra.mxu0 0.0
    %2485 = vmatprep.subr.mxu0 0.0
    %2486 = vmatpush1.msra.mxu0 0.0
    %2487 = vmatprep.subr.mxu0 0.0
    %2488 = vmatpush1.msra.mxu0 0.0
    %2489 = vmatprep.subr.mxu0 0.0
    %2490 = vmatpush1.msra.mxu0 0.0
    %2491 = vmatprep.subr.mxu0 0.0
    %2492 = vmatpush1.msra.mxu0 0.0
    %2493 = vmatprep.subr.mxu0 0.0
    %2494 = vmatpush1.msra.mxu0 0.0
    %2495 = vmatprep.subr.mxu0 0.0
    %2496 = vmatpush1.msra.mxu0 0.0
    %2497 = vmatprep.subr.mxu0 0.0
    %2498 = vmatpush1.msra.mxu0 0.0
    %2499 = vmatprep.subr.mxu0 0.0
    %2500 = vmatpush1.msra.mxu0 0.0
    %2501 = vmatprep.subr.mxu0 0.0
    %2502 = vmatpush1.msra.mxu0 0.0
    %2503 = vmatprep.mubr.f32.mxu0 0.0
    %2504 = vmatmul.mubr.f32.gmra.mrb[0].mxu0 %v2259
    %v2505 = vpop.f32.mrb[0].mxu0
    %v2506 = vadd.f32 0.0, %v2505
    %v2507 = vpop.f32.mrb[0].mxu0
    %v2508 = vadd.f32 0.0, %v2507
    %2509 = vmatprep.mubr.f32.mxu0 0.0
    %2510 = vmatmul.mubr.f32.gmra.mrb[0].mxu0 %v2262
    %v2511 = vpop.f32.mrb[0].mxu0
    %v2512 = vadd.f32 0.0, %v2511
    %v2513 = vpop.f32.mrb[0].mxu0
    %v2514 = vadd.f32 0.0, %v2513
    %2515 = vmatprep.mubr.f32.mxu0 0.0
    %2516 = vmatmul.mubr.f32.gmra.mrb[0].mxu0 %v2265
    %v2517 = vpop.f32.mrb[0].mxu0
    %v2518 = vadd.f32 0.0, %v2517
    %v2519 = vpop.f32.mrb[0].mxu0
    %v2520 = vadd.f32 0.0, %v2519
    %2521 = vdwg.mxu0
    %2522 = vmatprep.subr.mxu0 0.0
    %2523 = vmatpush1.msra.mxu0 %v2226
    %2524 = vmatprep.subr.mxu0 0.0
    %2525 = vmatpush1.msra.mxu0 %v2231
    %2526 = vmatprep.subr.mxu0 0.0
    %2527 = vmatpush1.msra.mxu0 %v2236
    %2528 = vmatprep.subr.mxu0 0.0
    %2529 = vmatpush1.msra.mxu0 %v2241
    %2530 = vmatprep.subr.mxu0 0.0
    %2531 = vmatpush1.msra.mxu0 %v2246
    %2532 = vmatprep.subr.mxu0 0.0
    %2533 = vmatpush1.msra.mxu0 %v2251
    %2534 = vmatprep.subr.mxu0 0.0
    %2535 = vmatpush1.msra.mxu0 0.0
    %2536 = vmatprep.subr.mxu0 0.0
    %2537 = vmatpush1.msra.mxu0 0.0
    %2538 = vmatprep.subr.mxu0 0.0
    %2539 = vmatpush1.msra.mxu0 0.0
    %2540 = vmatprep.subr.mxu0 0.0
    %2541 = vmatpush1.msra.mxu0 0.0
    %2542 = vmatprep.subr.mxu0 0.0
    %2543 = vmatpush1.msra.mxu0 0.0
    %2544 = vmatprep.subr.mxu0 0.0
    %2545 = vmatpush1.msra.mxu0 0.0
    %2546 = vmatprep.subr.mxu0 0.0
    %2547 = vmatpush1.msra.mxu0 0.0
    %2548 = vmatprep.subr.mxu0 0.0
    %2549 = vmatpush1.msra.mxu0 0.0
    %2550 = vmatprep.subr.mxu0 0.0
    %2551 = vmatpush1.msra.mxu0 0.0
    %2552 = vmatprep.subr.mxu0 0.0
    %2553 = vmatpush1.msra.mxu0 0.0
    %2554 = vmatprep.subr.mxu0 0.0
    %2555 = vmatpush1.msra.mxu0 0.0
    %2556 = vmatprep.subr.mxu0 0.0
    %2557 = vmatpush1.msra.mxu0 0.0
    %2558 = vmatprep.subr.mxu0 0.0
    %2559 = vmatpush1.msra.mxu0 0.0
    %2560 = vmatprep.subr.mxu0 0.0
    %2561 = vmatpush1.msra.mxu0 0.0
    %2562 = vmatprep.subr.mxu0 0.0
    %2563 = vmatpush1.msra.mxu0 0.0
    %2564 = vmatprep.subr.mxu0 0.0
    %2565 = vmatpush1.msra.mxu0 0.0
    %2566 = vmatprep.subr.mxu0 0.0
    %2567 = vmatpush1.msra.mxu0 0.0
    %2568 = vmatprep.subr.mxu0 0.0
    %2569 = vmatpush1.msra.mxu0 0.0
    %2570 = vmatprep.subr.mxu0 0.0
    %2571 = vmatpush1.msra.mxu0 0.0
    %2572 = vmatprep.subr.mxu0 0.0
    %2573 = vmatpush1.msra.mxu0 0.0
    %2574 = vmatprep.subr.mxu0 0.0
    %2575 = vmatpush1.msra.mxu0 0.0
    %2576 = vmatprep.subr.mxu0 0.0
    %2577 = vmatpush1.msra.mxu0 0.0
    %2578 = vmatprep.subr.mxu0 0.0
    %2579 = vmatpush1.msra.mxu0 0.0
    %2580 = vmatprep.subr.mxu0 0.0
    %2581 = vmatpush1.msra.mxu0 0.0
    %2582 = vmatprep.subr.mxu0 0.0
    %2583 = vmatpush1.msra.mxu0 0.0
    %2584 = vmatprep.subr.mxu0 0.0
    %2585 = vmatpush1.msra.mxu0 0.0
    %2586 = vmatprep.mubr.f32.mxu0 0.0
    %2587 = vmatmul.mubr.f32.gmra.mrb[0].mxu0 %v2259
    %v2588 = vpop.f32.mrb[0].mxu0
    %v2589 = vadd.f32 0.0, %v2588
    %v2590 = vpop.f32.mrb[0].mxu0
    %2591 = vmatprep.mubr.f32.mxu0 0.0
    %2592 = vmatmul.mubr.f32.gmra.mrb[0].mxu0 %v2262
    %v2593 = vpop.f32.mrb[0].mxu0
    %v2594 = vadd.f32 0.0, %v2593
    %v2595 = vpop.f32.mrb[0].mxu0
    %2596 = vmatprep.mubr.f32.mxu0 0.0
    %2597 = vmatmul.mubr.f32.gmra.mrb[0].mxu0 %v2265
    %v2598 = vpop.f32.mrb[0].mxu0
    %v2599 = vadd.f32 0.0, %v2598
    %v2600 = vpop.f32.mrb[0].mxu0
    %2601 = vdwg.mxu0
    %v2602 = vadd.f32 %v1964, %v2506
    %v2603 = vadd.f32 %v1965, %v2508
    %v2604 = vadd.f32 %v1966, %v2589
    %v2605 = vadd.f32 %v1967, %v2512
    %v2606 = vadd.f32 %v1968, %v2514
    %v2607 = vadd.f32 %v1969, %v2594
    %v2608 = vadd.f32 %v1970, %v2518
    %v2609 = vadd.f32 %v1971, %v2520
    %v2610 = vadd.f32 %v1972, %v2599
    %s2611 = scalar_lea.vmem %s1, 576
    %v2612 = vld [vmem:[%s2611] sm:$0xff]
    %v2613 = vld [vmem:[%s2611 + $0x8] sm:$0xff]
    %v2614 = vld [vmem:[%s2611 + $0x10] sm:$0xff]
    %v2615 = vld [vmem:[%s2611 + $0x18] sm:$0xff]
    %v2616 = vld [vmem:[%s2611 + $0x20] sm:$0xff]
    %v2617 = vld [vmem:[%s2611 + $0x28] sm:$0xff]
    %v2618 = vld [vmem:[%s2611 + $0x30] sm:$0xff]
    %v2619 = vld [vmem:[%s2611 + $0x38] sm:$0xff]
    %v2620 = vld [vmem:[%s2611 + $0x40] sm:$0xff]
    %v2621 = vld [vmem:[%s2611 + $0x48] sm:$0xff]
    %v2622 = vld [vmem:[%s2611 + $0x50] sm:$0xff]
    %v2623 = vld [vmem:[%s2611 + $0x58] sm:$0xff]
    %v2624 = vld [vmem:[%s2611 + $0x60] sm:$0xff]
    %v2625 = vld [vmem:[%s2611 + $0x68] sm:$0xff]
    %v2626 = vld [vmem:[%s2611 + $0x70] sm:$0xff]
    %v2627 = vld [vmem:[%s2611 + $0x78] sm:$0xff]
    %v2628 = vld [vmem:[%s2611 + $0x80] sm:$0xff]
    %v2629 = vld [vmem:[%s2611 + $0x88] sm:$0xff]
    %2630 = vmatprep.subr.mxu0 %v2613
    %2631 = vmatpush1.msra.mxu0 %v2612
    %2632 = vmatprep.subr.mxu0 %v2616
    %2633 = vmatpush1.msra.mxu0 %v2615
    %2634 = vmatprep.subr.mxu0 %v2619
    %2635 = vmatpush1.msra.mxu0 %v2618
    %2636 = vmatprep.subr.mxu0 %v2622
    %2637 = vmatpush1.msra.mxu0 %v2621
    %2638 = vmatprep.subr.mxu0 %v2625
    %2639 = vmatpush1.msra.mxu0 %v2624
    %2640 = vmatprep.subr.mxu0 %v2628
    %2641 = vmatpush1.msra.mxu0 %v2627
    %2642 = vmatprep.subr.mxu0 0.0
    %2643 = vmatpush1.msra.mxu0 0.0
    %2644 = vmatprep.subr.mxu0 0.0
    %2645 = vmatpush1.msra.mxu0 0.0
    %2646 = vmatprep.subr.mxu0 0.0
    %2647 = vmatpush1.msra.mxu0 0.0
    %2648 = vmatprep.subr.mxu0 0.0
    %2649 = vmatpush1.msra.mxu0 0.0
    %2650 = vmatprep.subr.mxu0 0.0
    %2651 = vmatpush1.msra.mxu0 0.0
    %2652 = vmatprep.subr.mxu0 0.0
    %2653 = vmatpush1.msra.mxu0 0.0
    %2654 = vmatprep.subr.mxu0 0.0
    %2655 = vmatpush1.msra.mxu0 0.0
    %2656 = vmatprep.subr.mxu0 0.0
    %2657 = vmatpush1.msra.mxu0 0.0
    %2658 = vmatprep.subr.mxu0 0.0
    %2659 = vmatpush1.msra.mxu0 0.0
    %2660 = vmatprep.subr.mxu0 0.0
    %2661 = vmatpush1.msra.mxu0 0.0
    %2662 = vmatprep.subr.mxu0 0.0
    %2663 = vmatpush1.msra.mxu0 0.0
    %2664 = vmatprep.subr.mxu0 0.0
    %2665 = vmatpush1.msra.mxu0 0.0
    %2666 = vmatprep.subr.mxu0 0.0
    %2667 = vmatpush1.msra.mxu0 0.0
    %2668 = vmatprep.subr.mxu0 0.0
    %2669 = vmatpush1.msra.mxu0 0.0
    %2670 = vmatprep.subr.mxu0 0.0
    %2671 = vmatpush1.msra.mxu0 0.0
    %2672 = vmatprep.subr.mxu0 0.0
    %2673 = vmatpush1.msra.mxu0 0.0
    %2674 = vmatprep.subr.mxu0 0.0
    %2675 = vmatpush1.msra.mxu0 0.0
    %2676 = vmatprep.subr.mxu0 0.0
    %2677 = vmatpush1.msra.mxu0 0.0
    %2678 = vmatprep.subr.mxu0 0.0
    %2679 = vmatpush1.msra.mxu0 0.0
    %2680 = vmatprep.subr.mxu0 0.0
    %2681 = vmatpush1.msra.mxu0 0.0
    %2682 = vmatprep.subr.mxu0 0.0
    %2683 = vmatpush1.msra.mxu0 0.0
    %2684 = vmatprep.subr.mxu0 0.0
    %2685 = vmatpush1.msra.mxu0 0.0
    %2686 = vmatprep.subr.mxu0 0.0
    %2687 = vmatpush1.msra.mxu0 0.0
    %2688 = vmatprep.subr.mxu0 0.0
    %2689 = vmatpush1.msra.mxu0 0.0
    %2690 = vmatprep.subr.mxu0 0.0
    %2691 = vmatpush1.msra.mxu0 0.0
    %2692 = vmatprep.subr.mxu0 0.0
    %2693 = vmatpush1.msra.mxu0 0.0
    %2694 = vmatprep.mubr.f32.mxu0 0.0
    %2695 = vmatmul.mubr.f32.gmra.mrb[0].mxu0 %v80
    %v2696 = vpop.f32.mrb[0].mxu0
    %v2697 = vadd.f32 0.0, %v2696
    %v2698 = vpop.f32.mrb[0].mxu0
    %v2699 = vadd.f32 0.0, %v2698
    %2700 = vmatprep.mubr.f32.mxu0 0.0
    %2701 = vmatmul.mubr.f32.gmra.mrb[0].mxu0 %v83
    %v2702 = vpop.f32.mrb[0].mxu0
    %v2703 = vadd.f32 0.0, %v2702
    %v2704 = vpop.f32.mrb[0].mxu0
    %v2705 = vadd.f32 0.0, %v2704
    %2706 = vmatprep.mubr.f32.mxu0 0.0
    %2707 = vmatmul.mubr.f32.gmra.mrb[0].mxu0 %v86
    %v2708 = vpop.f32.mrb[0].mxu0
    %v2709 = vadd.f32 0.0, %v2708
    %v2710 = vpop.f32.mrb[0].mxu0
    %v2711 = vadd.f32 0.0, %v2710
    %2712 = vmatprep.mubr.f32.mxu0 0.0
    %2713 = vmatmul.mubr.f32.gmra.mrb[0].mxu0 %v89
    %v2714 = vpop.f32.mrb[0].mxu0
    %v2715 = vadd.f32 0.0, %v2714
    %v2716 = vpop.f32.mrb[0].mxu0
    %v2717 = vadd.f32 0.0, %v2716
    %2718 = vmatprep.mubr.f32.mxu0 0.0
    %2719 = vmatmul.mubr.f32.gmra.mrb[0].mxu0 %v92
    %v2720 = vpop.f32.mrb[0].mxu0
    %v2721 = vadd.f32 0.0, %v2720
    %v2722 = vpop.f32.mrb[0].mxu0
    %v2723 = vadd.f32 0.0, %v2722
    %2724 = vmatprep.mubr.f32.mxu0 0.0
    %2725 = vmatmul.mubr.f32.gmra.mrb[0].mxu0 %v95
    %v2726 = vpop.f32.mrb[0].mxu0
    %v2727 = vadd.f32 0.0, %v2726
    %v2728 = vpop.f32.mrb[0].mxu0
    %v2729 = vadd.f32 0.0, %v2728
    %2730 = vmatprep.mubr.f32.mxu0 0.0
    %2731 = vmatmul.mubr.f32.gmra.mrb[0].mxu0 %v98
    %v2732 = vpop.f32.mrb[0].mxu0
    %v2733 = vadd.f32 0.0, %v2732
    %v2734 = vpop.f32.mrb[0].mxu0
    %v2735 = vadd.f32 0.0, %v2734
    %2736 = vmatprep.mubr.f32.mxu0 0.0
    %2737 = vmatmul.mubr.f32.gmra.mrb[0].mxu0 %v101
    %v2738 = vpop.f32.mrb[0].mxu0
    %v2739 = vadd.f32 0.0, %v2738
    %v2740 = vpop.f32.mrb[0].mxu0
    %v2741 = vadd.f32 0.0, %v2740
    %2742 = vmatprep.mubr.f32.mxu0 0.0
    %2743 = vmatmul.mubr.f32.gmra.mrb[0].mxu0 %v104
    %v2744 = vpop.f32.mrb[0].mxu0
    %v2745 = vadd.f32 0.0, %v2744
    %v2746 = vpop.f32.mrb[0].mxu0
    %v2747 = vadd.f32 0.0, %v2746
    %2748 = vmatprep.mubr.f32.mxu0 0.0
    %2749 = vmatmul.mubr.f32.gmra.mrb[0].mxu0 %v107
    %v2750 = vpop.f32.mrb[0].mxu0
    %v2751 = vadd.f32 0.0, %v2750
    %v2752 = vpop.f32.mrb[0].mxu0
    %v2753 = vadd.f32 0.0, %v2752
    %2754 = vmatprep.mubr.f32.mxu0 0.0
    %2755 = vmatmul.mubr.f32.gmra.mrb[0].mxu0 %v110
    %v2756 = vpop.f32.mrb[0].mxu0
    %v2757 = vadd.f32 0.0, %v2756
    %v2758 = vpop.f32.mrb[0].mxu0
    %v2759 = vadd.f32 0.0, %v2758
    %2760 = vmatprep.mubr.f32.mxu0 0.0
    %2761 = vmatmul.mubr.f32.gmra.mrb[0].mxu0 %v113
    %v2762 = vpop.f32.mrb[0].mxu0
    %v2763 = vadd.f32 0.0, %v2762
    %v2764 = vpop.f32.mrb[0].mxu0
    %v2765 = vadd.f32 0.0, %v2764
    %2766 = vdwg.mxu0
    %2767 = vmatprep.subr.mxu0 0.0
    %2768 = vmatpush1.msra.mxu0 %v2614
    %2769 = vmatprep.subr.mxu0 0.0
    %2770 = vmatpush1.msra.mxu0 %v2617
    %2771 = vmatprep.subr.mxu0 0.0
    %2772 = vmatpush1.msra.mxu0 %v2620
    %2773 = vmatprep.subr.mxu0 0.0
    %2774 = vmatpush1.msra.mxu0 %v2623
    %2775 = vmatprep.subr.mxu0 0.0
    %2776 = vmatpush1.msra.mxu0 %v2626
    %2777 = vmatprep.subr.mxu0 0.0
    %2778 = vmatpush1.msra.mxu0 %v2629
    %2779 = vmatprep.subr.mxu0 0.0
    %2780 = vmatpush1.msra.mxu0 0.0
    %2781 = vmatprep.subr.mxu0 0.0
    %2782 = vmatpush1.msra.mxu0 0.0
    %2783 = vmatprep.subr.mxu0 0.0
    %2784 = vmatpush1.msra.mxu0 0.0
    %2785 = vmatprep.subr.mxu0 0.0
    %2786 = vmatpush1.msra.mxu0 0.0
    %2787 = vmatprep.subr.mxu0 0.0
    %2788 = vmatpush1.msra.mxu0 0.0
    %2789 = vmatprep.subr.mxu0 0.0
    %2790 = vmatpush1.msra.mxu0 0.0
    %2791 = vmatprep.subr.mxu0 0.0
    %2792 = vmatpush1.msra.mxu0 0.0
    %2793 = vmatprep.subr.mxu0 0.0
    %2794 = vmatpush1.msra.mxu0 0.0
    %2795 = vmatprep.subr.mxu0 0.0
    %2796 = vmatpush1.msra.mxu0 0.0
    %2797 = vmatprep.subr.mxu0 0.0
    %2798 = vmatpush1.msra.mxu0 0.0
    %2799 = vmatprep.subr.mxu0 0.0
    %2800 = vmatpush1.msra.mxu0 0.0
    %2801 = vmatprep.subr.mxu0 0.0
    %2802 = vmatpush1.msra.mxu0 0.0
    %2803 = vmatprep.subr.mxu0 0.0
    %2804 = vmatpush1.msra.mxu0 0.0
    %2805 = vmatprep.subr.mxu0 0.0
    %2806 = vmatpush1.msra.mxu0 0.0
    %2807 = vmatprep.subr.mxu0 0.0
    %2808 = vmatpush1.msra.mxu0 0.0
    %2809 = vmatprep.subr.mxu0 0.0
    %2810 = vmatpush1.msra.mxu0 0.0
    %2811 = vmatprep.subr.mxu0 0.0
    %2812 = vmatpush1.msra.mxu0 0.0
    %2813 = vmatprep.subr.mxu0 0.0
    %2814 = vmatpush1.msra.mxu0 0.0
    %2815 = vmatprep.subr.mxu0 0.0
    %2816 = vmatpush1.msra.mxu0 0.0
    %2817 = vmatprep.subr.mxu0 0.0
    %2818 = vmatpush1.msra.mxu0 0.0
    %2819 = vmatprep.subr.mxu0 0.0
    %2820 = vmatpush1.msra.mxu0 0.0
    %2821 = vmatprep.subr.mxu0 0.0
    %2822 = vmatpush1.msra.mxu0 0.0
    %2823 = vmatprep.subr.mxu0 0.0
    %2824 = vmatpush1.msra.mxu0 0.0
    %2825 = vmatprep.subr.mxu0 0.0
    %2826 = vmatpush1.msra.mxu0 0.0
    %2827 = vmatprep.subr.mxu0 0.0
    %2828 = vmatpush1.msra.mxu0 0.0
    %2829 = vmatprep.subr.mxu0 0.0
    %2830 = vmatpush1.msra.mxu0 0.0
    %2831 = vmatprep.mubr.f32.mxu0 0.0
    %2832 = vmatmul.mubr.f32.gmra.mrb[0].mxu0 %v80
    %v2833 = vpop.f32.mrb[0].mxu0
    %v2834 = vadd.f32 0.0, %v2833
    %v2835 = vpop.f32.mrb[0].mxu0
    %2836 = vmatprep.mubr.f32.mxu0 0.0
    %2837 = vmatmul.mubr.f32.gmra.mrb[0].mxu0 %v83
    %v2838 = vpop.f32.mrb[0].mxu0
    %v2839 = vadd.f32 0.0, %v2838
    %v2840 = vpop.f32.mrb[0].mxu0
    %2841 = vmatprep.mubr.f32.mxu0 0.0
    %2842 = vmatmul.mubr.f32.gmra.mrb[0].mxu0 %v86
    %v2843 = vpop.f32.mrb[0].mxu0
    %v2844 = vadd.f32 0.0, %v2843
    %v2845 = vpop.f32.mrb[0].mxu0
    %2846 = vmatprep.mubr.f32.mxu0 0.0
    %2847 = vmatmul.mubr.f32.gmra.mrb[0].mxu0 %v89
    %v2848 = vpop.f32.mrb[0].mxu0
    %v2849 = vadd.f32 0.0, %v2848
    %v2850 = vpop.f32.mrb[0].mxu0
    %2851 = vmatprep.mubr.f32.mxu0 0.0
    %2852 = vmatmul.mubr.f32.gmra.mrb[0].mxu0 %v92
    %v2853 = vpop.f32.mrb[0].mxu0
    %v2854 = vadd.f32 0.0, %v2853
    %v2855 = vpop.f32.mrb[0].mxu0
    %2856 = vmatprep.mubr.f32.mxu0 0.0
    %2857 = vmatmul.mubr.f32.gmra.mrb[0].mxu0 %v95
    %v2858 = vpop.f32.mrb[0].mxu0
    %v2859 = vadd.f32 0.0, %v2858
    %v2860 = vpop.f32.mrb[0].mxu0
    %2861 = vmatprep.mubr.f32.mxu0 0.0
    %2862 = vmatmul.mubr.f32.gmra.mrb[0].mxu0 %v98
    %v2863 = vpop.f32.mrb[0].mxu0
    %v2864 = vadd.f32 0.0, %v2863
    %v2865 = vpop.f32.mrb[0].mxu0
    %2866 = vmatprep.mubr.f32.mxu0 0.0
    %2867 = vmatmul.mubr.f32.gmra.mrb[0].mxu0 %v101
    %v2868 = vpop.f32.mrb[0].mxu0
    %v2869 = vadd.f32 0.0, %v2868
    %v2870 = vpop.f32.mrb[0].mxu0
    %2871 = vmatprep.mubr.f32.mxu0 0.0
    %2872 = vmatmul.mubr.f32.gmra.mrb[0].mxu0 %v104
    %v2873 = vpop.f32.mrb[0].mxu0
    %v2874 = vadd.f32 0.0, %v2873
    %v2875 = vpop.f32.mrb[0].mxu0
    %2876 = vmatprep.mubr.f32.mxu0 0.0
    %2877 = vmatmul.mubr.f32.gmra.mrb[0].mxu0 %v107
    %v2878 = vpop.f32.mrb[0].mxu0
    %v2879 = vadd.f32 0.0, %v2878
    %v2880 = vpop.f32.mrb[0].mxu0
    %2881 = vmatprep.mubr.f32.mxu0 0.0
    %2882 = vmatmul.mubr.f32.gmra.mrb[0].mxu0 %v110
    %v2883 = vpop.f32.mrb[0].mxu0
    %v2884 = vadd.f32 0.0, %v2883
    %v2885 = vpop.f32.mrb[0].mxu0
    %2886 = vmatprep.mubr.f32.mxu0 0.0
    %2887 = vmatmul.mubr.f32.gmra.mrb[0].mxu0 %v113
    %v2888 = vpop.f32.mrb[0].mxu0
    %v2889 = vadd.f32 0.0, %v2888
    %v2890 = vpop.f32.mrb[0].mxu0
    %2891 = vdwg.mxu0
    %s2892 = scalar_lea.vmem %s2, 96
    %v2893 = vld [vmem:[%s2892] sm:$0xff]
    %v2894 = vld [vmem:[%s2892 + $0x8] sm:$0xff]
    %v2895 = vld [vmem:[%s2892 + $0x10] sm:$0xff]
    %v2897 = vsel %vm78, %v2893, 0
    %v2900 = vsel %vm78, %v2894, 0
    %v2903 = vsel %vm78, %v2895, 0
    %2905 = vmatprep.subr.mxu0 %v2699
    %2906 = vmatpush1.msra.mxu0 %v2697
    %2907 = vmatprep.subr.mxu0 %v2705
    %2908 = vmatpush1.msra.mxu0 %v2703
    %2909 = vmatprep.subr.mxu0 %v2711
    %2910 = vmatpush1.msra.mxu0 %v2709
    %2911 = vmatprep.subr.mxu0 %v2717
    %2912 = vmatpush1.msra.mxu0 %v2715
    %2913 = vmatprep.subr.mxu0 %v2723
    %2914 = vmatpush1.msra.mxu0 %v2721
    %2915 = vmatprep.subr.mxu0 %v2729
    %2916 = vmatpush1.msra.mxu0 %v2727
    %2917 = vmatprep.subr.mxu0 0.0
    %2918 = vmatpush1.msra.mxu0 0.0
    %2919 = vmatprep.subr.mxu0 0.0
    %2920 = vmatpush1.msra.mxu0 0.0
    %2921 = vmatprep.subr.mxu0 0.0
    %2922 = vmatpush1.msra.mxu0 0.0
    %2923 = vmatprep.subr.mxu0 0.0
    %2924 = vmatpush1.msra.mxu0 0.0
    %2925 = vmatprep.subr.mxu0 0.0
    %2926 = vmatpush1.msra.mxu0 0.0
    %2927 = vmatprep.subr.mxu0 0.0
    %2928 = vmatpush1.msra.mxu0 0.0
    %2929 = vmatprep.subr.mxu0 0.0
    %2930 = vmatpush1.msra.mxu0 0.0
    %2931 = vmatprep.subr.mxu0 0.0
    %2932 = vmatpush1.msra.mxu0 0.0
    %2933 = vmatprep.subr.mxu0 0.0
    %2934 = vmatpush1.msra.mxu0 0.0
    %2935 = vmatprep.subr.mxu0 0.0
    %2936 = vmatpush1.msra.mxu0 0.0
    %2937 = vmatprep.subr.mxu0 0.0
    %2938 = vmatpush1.msra.mxu0 0.0
    %2939 = vmatprep.subr.mxu0 0.0
    %2940 = vmatpush1.msra.mxu0 0.0
    %2941 = vmatprep.subr.mxu0 0.0
    %2942 = vmatpush1.msra.mxu0 0.0
    %2943 = vmatprep.subr.mxu0 0.0
    %2944 = vmatpush1.msra.mxu0 0.0
    %2945 = vmatprep.subr.mxu0 0.0
    %2946 = vmatpush1.msra.mxu0 0.0
    %2947 = vmatprep.subr.mxu0 0.0
    %2948 = vmatpush1.msra.mxu0 0.0
    %2949 = vmatprep.subr.mxu0 0.0
    %2950 = vmatpush1.msra.mxu0 0.0
    %2951 = vmatprep.subr.mxu0 0.0
    %2952 = vmatpush1.msra.mxu0 0.0
    %2953 = vmatprep.subr.mxu0 0.0
    %2954 = vmatpush1.msra.mxu0 0.0
    %2955 = vmatprep.subr.mxu0 0.0
    %2956 = vmatpush1.msra.mxu0 0.0
    %2957 = vmatprep.subr.mxu0 0.0
    %2958 = vmatpush1.msra.mxu0 0.0
    %2959 = vmatprep.subr.mxu0 0.0
    %2960 = vmatpush1.msra.mxu0 0.0
    %2961 = vmatprep.subr.mxu0 0.0
    %2962 = vmatpush1.msra.mxu0 0.0
    %2963 = vmatprep.subr.mxu0 0.0
    %2964 = vmatpush1.msra.mxu0 0.0
    %2965 = vmatprep.subr.mxu0 0.0
    %2966 = vmatpush1.msra.mxu0 0.0
    %2967 = vmatprep.subr.mxu0 0.0
    %2968 = vmatpush1.msra.mxu0 0.0
    %2969 = vmatprep.mubr.f32.mxu0 0.0
    %2970 = vmatmul.mubr.f32.gmra.mrb[0].mxu0 %v2897
    %v2971 = vpop.f32.mrb[0].mxu0
    %v2972 = vadd.f32 0.0, %v2971
    %v2973 = vpop.f32.mrb[0].mxu0
    %v2974 = vadd.f32 0.0, %v2973
    %2975 = vmatprep.mubr.f32.mxu0 0.0
    %2976 = vmatmul.mubr.f32.gmra.mrb[0].mxu0 %v2900
    %v2977 = vpop.f32.mrb[0].mxu0
    %v2978 = vadd.f32 0.0, %v2977
    %v2979 = vpop.f32.mrb[0].mxu0
    %v2980 = vadd.f32 0.0, %v2979
    %2981 = vmatprep.mubr.f32.mxu0 0.0
    %2982 = vmatmul.mubr.f32.gmra.mrb[0].mxu0 %v2903
    %v2983 = vpop.f32.mrb[0].mxu0
    %v2984 = vadd.f32 0.0, %v2983
    %v2985 = vpop.f32.mrb[0].mxu0
    %v2986 = vadd.f32 0.0, %v2985
    %2987 = vdwg.mxu0
    %2988 = vmatprep.subr.mxu0 0.0
    %2989 = vmatpush1.msra.mxu0 %v2834
    %2990 = vmatprep.subr.mxu0 0.0
    %2991 = vmatpush1.msra.mxu0 %v2839
    %2992 = vmatprep.subr.mxu0 0.0
    %2993 = vmatpush1.msra.mxu0 %v2844
    %2994 = vmatprep.subr.mxu0 0.0
    %2995 = vmatpush1.msra.mxu0 %v2849
    %2996 = vmatprep.subr.mxu0 0.0
    %2997 = vmatpush1.msra.mxu0 %v2854
    %2998 = vmatprep.subr.mxu0 0.0
    %2999 = vmatpush1.msra.mxu0 %v2859
    %3000 = vmatprep.subr.mxu0 0.0
    %3001 = vmatpush1.msra.mxu0 0.0
    %3002 = vmatprep.subr.mxu0 0.0
    %3003 = vmatpush1.msra.mxu0 0.0
    %3004 = vmatprep.subr.mxu0 0.0
    %3005 = vmatpush1.msra.mxu0 0.0
    %3006 = vmatprep.subr.mxu0 0.0
    %3007 = vmatpush1.msra.mxu0 0.0
    %3008 = vmatprep.subr.mxu0 0.0
    %3009 = vmatpush1.msra.mxu0 0.0
    %3010 = vmatprep.subr.mxu0 0.0
    %3011 = vmatpush1.msra.mxu0 0.0
    %3012 = vmatprep.subr.mxu0 0.0
    %3013 = vmatpush1.msra.mxu0 0.0
    %3014 = vmatprep.subr.mxu0 0.0
    %3015 = vmatpush1.msra.mxu0 0.0
    %3016 = vmatprep.subr.mxu0 0.0
    %3017 = vmatpush1.msra.mxu0 0.0
    %3018 = vmatprep.subr.mxu0 0.0
    %3019 = vmatpush1.msra.mxu0 0.0
    %3020 = vmatprep.subr.mxu0 0.0
    %3021 = vmatpush1.msra.mxu0 0.0
    %3022 = vmatprep.subr.mxu0 0.0
    %3023 = vmatpush1.msra.mxu0 0.0
    %3024 = vmatprep.subr.mxu0 0.0
    %3025 = vmatpush1.msra.mxu0 0.0
    %3026 = vmatprep.subr.mxu0 0.0
    %3027 = vmatpush1.msra.mxu0 0.0
    %3028 = vmatprep.subr.mxu0 0.0
    %3029 = vmatpush1.msra.mxu0 0.0
    %3030 = vmatprep.subr.mxu0 0.0
    %3031 = vmatpush1.msra.mxu0 0.0
    %3032 = vmatprep.subr.mxu0 0.0
    %3033 = vmatpush1.msra.mxu0 0.0
    %3034 = vmatprep.subr.mxu0 0.0
    %3035 = vmatpush1.msra.mxu0 0.0
    %3036 = vmatprep.subr.mxu0 0.0
    %3037 = vmatpush1.msra.mxu0 0.0
    %3038 = vmatprep.subr.mxu0 0.0
    %3039 = vmatpush1.msra.mxu0 0.0
    %3040 = vmatprep.subr.mxu0 0.0
    %3041 = vmatpush1.msra.mxu0 0.0
    %3042 = vmatprep.subr.mxu0 0.0
    %3043 = vmatpush1.msra.mxu0 0.0
    %3044 = vmatprep.subr.mxu0 0.0
    %3045 = vmatpush1.msra.mxu0 0.0
    %3046 = vmatprep.subr.mxu0 0.0
    %3047 = vmatpush1.msra.mxu0 0.0
    %3048 = vmatprep.subr.mxu0 0.0
    %3049 = vmatpush1.msra.mxu0 0.0
    %3050 = vmatprep.subr.mxu0 0.0
    %3051 = vmatpush1.msra.mxu0 0.0
    %3052 = vmatprep.mubr.f32.mxu0 0.0
    %3053 = vmatmul.mubr.f32.gmra.mrb[0].mxu0 %v2897
    %v3054 = vpop.f32.mrb[0].mxu0
    %v3055 = vadd.f32 0.0, %v3054
    %v3056 = vpop.f32.mrb[0].mxu0
    %3057 = vmatprep.mubr.f32.mxu0 0.0
    %3058 = vmatmul.mubr.f32.gmra.mrb[0].mxu0 %v2900
    %v3059 = vpop.f32.mrb[0].mxu0
    %v3060 = vadd.f32 0.0, %v3059
    %v3061 = vpop.f32.mrb[0].mxu0
    %3062 = vmatprep.mubr.f32.mxu0 0.0
    %3063 = vmatmul.mubr.f32.gmra.mrb[0].mxu0 %v2903
    %v3064 = vpop.f32.mrb[0].mxu0
    %v3065 = vadd.f32 0.0, %v3064
    %v3066 = vpop.f32.mrb[0].mxu0
    %3067 = vdwg.mxu0
    %v3068 = vadd.f32 %v2430, %v2972
    %v3069 = vadd.f32 %v2431, %v2974
    %v3070 = vadd.f32 %v2432, %v3055
    %v3071 = vadd.f32 %v2433, %v2978
    %v3072 = vadd.f32 %v2434, %v2980
    %v3073 = vadd.f32 %v2435, %v3060
    %v3074 = vadd.f32 %v2436, %v2984
    %v3075 = vadd.f32 %v2437, %v2986
    %v3076 = vadd.f32 %v2438, %v3065
    %3077 = vmatprep.subr.mxu0 %v2735
    %3078 = vmatpush1.msra.mxu0 %v2733
    %3079 = vmatprep.subr.mxu0 %v2741
    %3080 = vmatpush1.msra.mxu0 %v2739
    %3081 = vmatprep.subr.mxu0 %v2747
    %3082 = vmatpush1.msra.mxu0 %v2745
    %3083 = vmatprep.subr.mxu0 %v2753
    %3084 = vmatpush1.msra.mxu0 %v2751
    %3085 = vmatprep.subr.mxu0 %v2759
    %3086 = vmatpush1.msra.mxu0 %v2757
    %3087 = vmatprep.subr.mxu0 %v2765
    %3088 = vmatpush1.msra.mxu0 %v2763
    %3089 = vmatprep.subr.mxu0 0.0
    %3090 = vmatpush1.msra.mxu0 0.0
    %3091 = vmatprep.subr.mxu0 0.0
    %3092 = vmatpush1.msra.mxu0 0.0
    %3093 = vmatprep.subr.mxu0 0.0
    %3094 = vmatpush1.msra.mxu0 0.0
    %3095 = vmatprep.subr.mxu0 0.0
    %3096 = vmatpush1.msra.mxu0 0.0
    %3097 = vmatprep.subr.mxu0 0.0
    %3098 = vmatpush1.msra.mxu0 0.0
    %3099 = vmatprep.subr.mxu0 0.0
    %3100 = vmatpush1.msra.mxu0 0.0
    %3101 = vmatprep.subr.mxu0 0.0
    %3102 = vmatpush1.msra.mxu0 0.0
    %3103 = vmatprep.subr.mxu0 0.0
    %3104 = vmatpush1.msra.mxu0 0.0
    %3105 = vmatprep.subr.mxu0 0.0
    %3106 = vmatpush1.msra.mxu0 0.0
    %3107 = vmatprep.subr.mxu0 0.0
    %3108 = vmatpush1.msra.mxu0 0.0
    %3109 = vmatprep.subr.mxu0 0.0
    %3110 = vmatpush1.msra.mxu0 0.0
    %3111 = vmatprep.subr.mxu0 0.0
    %3112 = vmatpush1.msra.mxu0 0.0
    %3113 = vmatprep.subr.mxu0 0.0
    %3114 = vmatpush1.msra.mxu0 0.0
    %3115 = vmatprep.subr.mxu0 0.0
    %3116 = vmatpush1.msra.mxu0 0.0
    %3117 = vmatprep.subr.mxu0 0.0
    %3118 = vmatpush1.msra.mxu0 0.0
    %3119 = vmatprep.subr.mxu0 0.0
    %3120 = vmatpush1.msra.mxu0 0.0
    %3121 = vmatprep.subr.mxu0 0.0
    %3122 = vmatpush1.msra.mxu0 0.0
    %3123 = vmatprep.subr.mxu0 0.0
    %3124 = vmatpush1.msra.mxu0 0.0
    %3125 = vmatprep.subr.mxu0 0.0
    %3126 = vmatpush1.msra.mxu0 0.0
    %3127 = vmatprep.subr.mxu0 0.0
    %3128 = vmatpush1.msra.mxu0 0.0
    %3129 = vmatprep.subr.mxu0 0.0
    %3130 = vmatpush1.msra.mxu0 0.0
    %3131 = vmatprep.subr.mxu0 0.0
    %3132 = vmatpush1.msra.mxu0 0.0
    %3133 = vmatprep.subr.mxu0 0.0
    %3134 = vmatpush1.msra.mxu0 0.0
    %3135 = vmatprep.subr.mxu0 0.0
    %3136 = vmatpush1.msra.mxu0 0.0
    %3137 = vmatprep.subr.mxu0 0.0
    %3138 = vmatpush1.msra.mxu0 0.0
    %3139 = vmatprep.subr.mxu0 0.0
    %3140 = vmatpush1.msra.mxu0 0.0
    %3141 = vmatprep.mubr.f32.mxu0 0.0
    %3142 = vmatmul.mubr.f32.gmra.mrb[0].mxu0 %v2897
    %v3143 = vpop.f32.mrb[0].mxu0
    %v3144 = vadd.f32 0.0, %v3143
    %v3145 = vpop.f32.mrb[0].mxu0
    %v3146 = vadd.f32 0.0, %v3145
    %3147 = vmatprep.mubr.f32.mxu0 0.0
    %3148 = vmatmul.mubr.f32.gmra.mrb[0].mxu0 %v2900
    %v3149 = vpop.f32.mrb[0].mxu0
    %v3150 = vadd.f32 0.0, %v3149
    %v3151 = vpop.f32.mrb[0].mxu0
    %v3152 = vadd.f32 0.0, %v3151
    %3153 = vmatprep.mubr.f32.mxu0 0.0
    %3154 = vmatmul.mubr.f32.gmra.mrb[0].mxu0 %v2903
    %v3155 = vpop.f32.mrb[0].mxu0
    %v3156 = vadd.f32 0.0, %v3155
    %v3157 = vpop.f32.mrb[0].mxu0
    %v3158 = vadd.f32 0.0, %v3157
    %3159 = vdwg.mxu0
    %3160 = vmatprep.subr.mxu0 0.0
    %3161 = vmatpush1.msra.mxu0 %v2864
    %3162 = vmatprep.subr.mxu0 0.0
    %3163 = vmatpush1.msra.mxu0 %v2869
    %3164 = vmatprep.subr.mxu0 0.0
    %3165 = vmatpush1.msra.mxu0 %v2874
    %3166 = vmatprep.subr.mxu0 0.0
    %3167 = vmatpush1.msra.mxu0 %v2879
    %3168 = vmatprep.subr.mxu0 0.0
    %3169 = vmatpush1.msra.mxu0 %v2884
    %3170 = vmatprep.subr.mxu0 0.0
    %3171 = vmatpush1.msra.mxu0 %v2889
    %3172 = vmatprep.subr.mxu0 0.0
    %3173 = vmatpush1.msra.mxu0 0.0
    %3174 = vmatprep.subr.mxu0 0.0
    %3175 = vmatpush1.msra.mxu0 0.0
    %3176 = vmatprep.subr.mxu0 0.0
    %3177 = vmatpush1.msra.mxu0 0.0
    %3178 = vmatprep.subr.mxu0 0.0
    %3179 = vmatpush1.msra.mxu0 0.0
    %3180 = vmatprep.subr.mxu0 0.0
    %3181 = vmatpush1.msra.mxu0 0.0
    %3182 = vmatprep.subr.mxu0 0.0
    %3183 = vmatpush1.msra.mxu0 0.0
    %3184 = vmatprep.subr.mxu0 0.0
    %3185 = vmatpush1.msra.mxu0 0.0
    %3186 = vmatprep.subr.mxu0 0.0
    %3187 = vmatpush1.msra.mxu0 0.0
    %3188 = vmatprep.subr.mxu0 0.0
    %3189 = vmatpush1.msra.mxu0 0.0
    %3190 = vmatprep.subr.mxu0 0.0
    %3191 = vmatpush1.msra.mxu0 0.0
    %3192 = vmatprep.subr.mxu0 0.0
    %3193 = vmatpush1.msra.mxu0 0.0
    %3194 = vmatprep.subr.mxu0 0.0
    %3195 = vmatpush1.msra.mxu0 0.0
    %3196 = vmatprep.subr.mxu0 0.0
    %3197 = vmatpush1.msra.mxu0 0.0
    %3198 = vmatprep.subr.mxu0 0.0
    %3199 = vmatpush1.msra.mxu0 0.0
    %3200 = vmatprep.subr.mxu0 0.0
    %3201 = vmatpush1.msra.mxu0 0.0
    %3202 = vmatprep.subr.mxu0 0.0
    %3203 = vmatpush1.msra.mxu0 0.0
    %3204 = vmatprep.subr.mxu0 0.0
    %3205 = vmatpush1.msra.mxu0 0.0
    %3206 = vmatprep.subr.mxu0 0.0
    %3207 = vmatpush1.msra.mxu0 0.0
    %3208 = vmatprep.subr.mxu0 0.0
    %3209 = vmatpush1.msra.mxu0 0.0
    %3210 = vmatprep.subr.mxu0 0.0
    %3211 = vmatpush1.msra.mxu0 0.0
    %3212 = vmatprep.subr.mxu0 0.0
    %3213 = vmatpush1.msra.mxu0 0.0
    %3214 = vmatprep.subr.mxu0 0.0
    %3215 = vmatpush1.msra.mxu0 0.0
    %3216 = vmatprep.subr.mxu0 0.0
    %3217 = vmatpush1.msra.mxu0 0.0
    %3218 = vmatprep.subr.mxu0 0.0
    %3219 = vmatpush1.msra.mxu0 0.0
    %3220 = vmatprep.subr.mxu0 0.0
    %3221 = vmatpush1.msra.mxu0 0.0
    %3222 = vmatprep.subr.mxu0 0.0
    %3223 = vmatpush1.msra.mxu0 0.0
    %3224 = vmatprep.mubr.f32.mxu0 0.0
    %3225 = vmatmul.mubr.f32.gmra.mrb[0].mxu0 %v2897
    %v3226 = vpop.f32.mrb[0].mxu0
    %v3227 = vadd.f32 0.0, %v3226
    %v3228 = vpop.f32.mrb[0].mxu0
    %3229 = vmatprep.mubr.f32.mxu0 0.0
    %3230 = vmatmul.mubr.f32.gmra.mrb[0].mxu0 %v2900
    %v3231 = vpop.f32.mrb[0].mxu0
    %v3232 = vadd.f32 0.0, %v3231
    %v3233 = vpop.f32.mrb[0].mxu0
    %3234 = vmatprep.mubr.f32.mxu0 0.0
    %3235 = vmatmul.mubr.f32.gmra.mrb[0].mxu0 %v2903
    %v3236 = vpop.f32.mrb[0].mxu0
    %v3237 = vadd.f32 0.0, %v3236
    %v3238 = vpop.f32.mrb[0].mxu0
    %3239 = vdwg.mxu0
    %v3240 = vadd.f32 %v2602, %v3144
    %v3241 = vadd.f32 %v2603, %v3146
    %v3242 = vadd.f32 %v2604, %v3227
    %v3243 = vadd.f32 %v2605, %v3150
    %v3244 = vadd.f32 %v2606, %v3152
    %v3245 = vadd.f32 %v2607, %v3232
    %v3246 = vadd.f32 %v2608, %v3156
    %v3247 = vadd.f32 %v2609, %v3158
    %v3248 = vadd.f32 %v2610, %v3237
    %v3249 = vld [vmem:[%s3] sm:$0x7]
    %v3251 = vlaneseq
    %v3252 = vshrl.u32 %v3251, 7
    %v3253 = vsub.s32 0, %v3252
    %v3254 = vrot.slane %v3249, %v3253
    %v3255 = vlaneseq
    %v3256 = vshrl.u32 %v3255, 7
    %v3257 = vsub.s32 1, %v3256
    %v3258 = vrot.slane %v3249, %v3257
    %v3259 = vlaneseq
    %v3260 = vshrl.u32 %v3259, 7
    %v3261 = vsub.s32 2, %v3260
    %v3262 = vrot.slane %v3249, %v3261
    %v3266 = vadd.f32 %v3068, %v3254
    %v3267 = vadd.f32 %v3069, %v3258
    %v3268 = vadd.f32 %v3070, %v3262
    %v3269 = vadd.f32 %v3071, %v3254
    %v3270 = vadd.f32 %v3072, %v3258
    %v3271 = vadd.f32 %v3073, %v3262
    %v3272 = vadd.f32 %v3074, %v3254
    %v3273 = vadd.f32 %v3075, %v3258
    %v3274 = vadd.f32 %v3076, %v3262
    %v3275 = vadd.f32 %v3266, %v3267
    %vm3276 = vcmask 261120
    %v3277 = vsel %vm3276, %v3268, 0.0
    %v3278 = vadd.f32 %v3275, %v3277
    %v3279 = vadd.f32 %v3278, %v3269
    %v3280 = vadd.f32 %v3279, %v3270
    %v3281 = vsel %vm3276, %v3271, 0.0
    %v3282 = vadd.f32 %v3280, %v3281
    %v3283 = vadd.f32 %v3282, %v3272
    %v3284 = vadd.f32 %v3283, %v3273
    %v3285 = vsel %vm3276, %v3274, 0.0
    %v3286 = vadd.f32 %v3284, %v3285
    %3287 = vadd.xlane.f32.xlu0 %v3286
    %v3288 = vpop.xlane.xlu0 %3287
    %v3289 = vrot.slane %v3288, 4
    %v3290 = vadd.f32 %v3288, %v3289
    %v3291 = vrot.slane %v3290, 2
    %v3292 = vadd.f32 %v3290, %v3291
    %v3293 = vrot.slane %v3292, 1
    %v3294 = vadd.f32 %v3292, %v3293
    %s3295 = vtos %v3294
    %v3296 = vstv %s3295
    %v3297 = vrcp.pop 6912.0
    %v3298 = vmul.f32 %v3296, %v3297
    %v3299 = vsub.f32 %v3266, %v3298
    %v3300 = vsub.f32 %v3267, %v3298
    %v3301 = vsub.f32 %v3268, %v3298
    %v3302 = vsub.f32 %v3269, %v3298
    %v3303 = vsub.f32 %v3270, %v3298
    %v3304 = vsub.f32 %v3271, %v3298
    %v3305 = vsub.f32 %v3272, %v3298
    %v3306 = vsub.f32 %v3273, %v3298
    %v3307 = vsub.f32 %v3274, %v3298
    %v3308 = vmul.f32 %v3299, %v3299
    %v3309 = vmul.f32 %v3300, %v3300
    %v3310 = vmul.f32 %v3301, %v3301
    %v3311 = vmul.f32 %v3302, %v3302
    %v3312 = vmul.f32 %v3303, %v3303
    %v3313 = vmul.f32 %v3304, %v3304
    %v3314 = vmul.f32 %v3305, %v3305
    %v3315 = vmul.f32 %v3306, %v3306
    %v3316 = vmul.f32 %v3307, %v3307
    %v3317 = vadd.f32 %v3308, %v3309
    %v3318 = vsel %vm3276, %v3310, 0.0
    %v3319 = vadd.f32 %v3317, %v3318
    %v3320 = vadd.f32 %v3319, %v3311
    %v3321 = vadd.f32 %v3320, %v3312
    %v3322 = vsel %vm3276, %v3313, 0.0
    %v3323 = vadd.f32 %v3321, %v3322
    %v3324 = vadd.f32 %v3323, %v3314
    %v3325 = vadd.f32 %v3324, %v3315
    %v3326 = vsel %vm3276, %v3316, 0.0
    %v3327 = vadd.f32 %v3325, %v3326
    %3328 = vadd.xlane.f32.xlu0 %v3327
    %v3329 = vpop.xlane.xlu0 %3328
    %v3330 = vrot.slane %v3329, 4
    %v3331 = vadd.f32 %v3329, %v3330
    %v3332 = vrot.slane %v3331, 2
    %v3333 = vadd.f32 %v3331, %v3332
    %v3334 = vrot.slane %v3333, 1
    %v3335 = vadd.f32 %v3333, %v3334
    %s3336 = vtos %v3335
    %v3337 = vstv %s3336
    %v3338 = vrcp.pop 6911.0
    %v3339 = vmul.f32 %v3337, %v3338
    %v3340 = vld [vmem:[%s4] sm:$0x7]
    %v3341 = vrsqrt.pop %v3339
    %v3342 = vmul.f32 %v3299, %v3341
    %v3343 = vmul.f32 %v3300, %v3341
    %v3344 = vmul.f32 %v3301, %v3341
    %v3345 = vmul.f32 %v3302, %v3341
    %v3346 = vmul.f32 %v3303, %v3341
    %v3347 = vmul.f32 %v3304, %v3341
    %v3348 = vmul.f32 %v3305, %v3341
    %v3349 = vmul.f32 %v3306, %v3341
    %v3350 = vmul.f32 %v3307, %v3341
    %v3352 = vlaneseq
    %v3353 = vshrl.u32 %v3352, 7
    %v3354 = vsub.s32 0, %v3353
    %v3355 = vrot.slane %v3340, %v3354
    %v3356 = vlaneseq
    %v3357 = vshrl.u32 %v3356, 7
    %v3358 = vsub.s32 1, %v3357
    %v3359 = vrot.slane %v3340, %v3358
    %v3360 = vlaneseq
    %v3361 = vshrl.u32 %v3360, 7
    %v3362 = vsub.s32 2, %v3361
    %v3363 = vrot.slane %v3340, %v3362
    %v3367 = vmul.f32 %v3355, %v3342
    %v3368 = vmul.f32 %v3359, %v3343
    %v3369 = vmul.f32 %v3363, %v3344
    %v3370 = vmul.f32 %v3355, %v3345
    %v3371 = vmul.f32 %v3359, %v3346
    %v3372 = vmul.f32 %v3363, %v3347
    %v3373 = vmul.f32 %v3355, %v3348
    %v3374 = vmul.f32 %v3359, %v3349
    %v3375 = vmul.f32 %v3363, %v3350
    %v3376 = vld [vmem:[%s5] sm:$0x7]
    %v3378 = vlaneseq
    %v3379 = vshrl.u32 %v3378, 7
    %v3380 = vsub.s32 0, %v3379
    %v3381 = vrot.slane %v3376, %v3380
    %v3382 = vlaneseq
    %v3383 = vshrl.u32 %v3382, 7
    %v3384 = vsub.s32 1, %v3383
    %v3385 = vrot.slane %v3376, %v3384
    %v3386 = vlaneseq
    %v3387 = vshrl.u32 %v3386, 7
    %v3388 = vsub.s32 2, %v3387
    %v3389 = vrot.slane %v3376, %v3388
    %v3393 = vadd.f32 %v3367, %v3381
    %v3394 = vadd.f32 %v3368, %v3385
    %v3395 = vadd.f32 %v3369, %v3389
    %v3396 = vadd.f32 %v3370, %v3381
    %v3397 = vadd.f32 %v3371, %v3385
    %v3398 = vadd.f32 %v3372, %v3389
    %v3399 = vadd.f32 %v3373, %v3381
    %v3400 = vadd.f32 %v3374, %v3385
    %v3401 = vadd.f32 %v3375, %v3389
    %v3402 = vmax.f32 %v3393, 0.0
    %v3403 = vmax.f32 %v3394, 0.0
    %v3404 = vmax.f32 %v3395, 0.0
    %v3405 = vmax.f32 %v3396, 0.0
    %v3406 = vmax.f32 %v3397, 0.0
    %v3407 = vmax.f32 %v3398, 0.0
    %v3408 = vmax.f32 %v3399, 0.0
    %v3409 = vmax.f32 %v3400, 0.0
    %v3410 = vmax.f32 %v3401, 0.0
    %vm3420 = vcmask 1046528
    %v3421 = vrot.slane %v3402, 1
    %v3422 = vrot.slane %v3405, 1
    %v3423 = vsel %vm3420, %v3421, %v3422
    %v3424 = vrot.slane %v3403, 1
    %v3425 = vrot.slane %v3406, 1
    %v3426 = vsel %vm3420, %v3424, %v3425
    %v3427 = vrot.slane %v3404, 1
    %v3428 = vrot.slane %v3407, 1
    %v3429 = vsel %vm3420, %v3427, %v3428
    %v3430 = vrot.slane %v3408, 1
    %v3431 = vsel %vm3420, %v3422, %v3430
    %v3432 = vrot.slane %v3409, 1
    %v3433 = vsel %vm3420, %v3425, %v3432
    %v3434 = vrot.slane %v3410, 1
    %v3435 = vsel %vm3420, %v3428, %v3434
    %v3445 = vmax.f32 %v3402, %v3423
    %v3446 = vmax.f32 %v3403, %v3426
    %v3447 = vmax.f32 %v3404, %v3429
    %v3448 = vmax.f32 %v3405, %v3431
    %v3449 = vmax.f32 %v3406, %v3433
    %v3450 = vmax.f32 %v3407, %v3435
    %v3451 = vmax.f32 %v3408, %v3430
    %v3452 = vmax.f32 %v3409, %v3432
    %v3453 = vmax.f32 %v3410, %v3434
    %3463 = vrot.lane.b32.xlu0 %v3445, 116
    %v3464 = vpop.permute.xlu0 %3463
    %3465 = vrot.lane.b32.xlu0 %v3446, 116
    %v3466 = vpop.permute.xlu0 %3465
    %3467 = vrot.lane.b32.xlu0 %v3447, 116
    %v3468 = vpop.permute.xlu0 %3467
    %3469 = vrot.lane.b32.xlu0 %v3448, 116
    %v3470 = vpop.permute.xlu0 %3469
    %3471 = vrot.lane.b32.xlu0 %v3449, 116
    %v3472 = vpop.permute.xlu0 %3471
    %3473 = vrot.lane.b32.xlu0 %v3450, 116
    %v3474 = vpop.permute.xlu0 %3473
    %3475 = vrot.lane.b32.xlu0 %v3451, 116
    %v3476 = vpop.permute.xlu0 %3475
    %3477 = vrot.lane.b32.xlu0 %v3452, 116
    %v3478 = vpop.permute.xlu0 %3477
    %3479 = vrot.lane.b32.xlu0 %v3453, 116
    %v3480 = vpop.permute.xlu0 %3479
    %vm3481 = vcmask 949248
    %v3482 = vsel %vm3481, %v3464, %v3466
    %v3483 = vsel %vm3481, %v3466, %v3468
    %v3484 = vsel %vm3481, %v3470, %v3472
    %v3485 = vsel %vm3481, %v3472, %v3474
    %v3486 = vsel %vm3481, %v3476, %v3478
    %v3487 = vsel %vm3481, %v3478, %v3480
    %v3497 = vmax.f32 %v3445, %v3482
    %v3498 = vmax.f32 %v3446, %v3483
    %v3499 = vmax.f32 %v3447, %v3468
    %v3500 = vmax.f32 %v3448, %v3484
    %v3501 = vmax.f32 %v3449, %v3485
    %v3502 = vmax.f32 %v3450, %v3474
    %v3503 = vmax.f32 %v3451, %v3486
    %v3504 = vmax.f32 %v3452, %v3487
    %v3505 = vmax.f32 %v3453, %v3480
    %v3506 = vld [vmem:[%s6] sm:$0xff]
    %v3507 = vld [vmem:[%s6 + $0x8] sm:$0xff]
    %v3508 = vld [vmem:[%s6 + $0x10] sm:$0xff]
    %v3509 = vld [vmem:[%s6 + $0x18] sm:$0xff]
    %v3510 = vld [vmem:[%s6 + $0x20] sm:$0xff]
    %v3511 = vld [vmem:[%s6 + $0x28] sm:$0xff]
    %v3512 = vld [vmem:[%s6 + $0x30] sm:$0xff]
    %v3513 = vld [vmem:[%s6 + $0x38] sm:$0xff]
    %v3514 = vld [vmem:[%s6 + $0x40] sm:$0xff]
    %v3515 = vld [vmem:[%s6 + $0x48] sm:$0xff]
    %v3516 = vld [vmem:[%s6 + $0x50] sm:$0xff]
    %v3517 = vld [vmem:[%s6 + $0x58] sm:$0xff]
    %v3518 = vld [vmem:[%s6 + $0x60] sm:$0xff]
    %v3519 = vld [vmem:[%s6 + $0x68] sm:$0xff]
    %v3520 = vld [vmem:[%s6 + $0x70] sm:$0xff]
    %v3521 = vld [vmem:[%s6 + $0x78] sm:$0xff]
    %v3522 = vld [vmem:[%s6 + $0x80] sm:$0xff]
    %v3523 = vld [vmem:[%s6 + $0x88] sm:$0xff]
    %v3524 = vld [vmem:[%s6 + $0x90] sm:$0xff]
    %v3525 = vld [vmem:[%s6 + $0x98] sm:$0xff]
    %v3526 = vld [vmem:[%s6 + $0xa0] sm:$0xff]
    %v3527 = vld [vmem:[%s6 + $0xa8] sm:$0xff]
    %v3528 = vld [vmem:[%s6 + $0xb0] sm:$0xff]
    %v3529 = vld [vmem:[%s6 + $0xb8] sm:$0xff]
    %v3530 = vld [vmem:[%s6 + $0xc0] sm:$0xff]
    %v3531 = vld [vmem:[%s6 + $0xc8] sm:$0xff]
    %v3532 = vld [vmem:[%s6 + $0xd0] sm:$0xff]
    %v3533 = vld [vmem:[%s6 + $0xd8] sm:$0xff]
    %v3534 = vld [vmem:[%s6 + $0xe0] sm:$0xff]
    %v3535 = vld [vmem:[%s6 + $0xe8] sm:$0xff]
    %v3536 = vld [vmem:[%s6 + $0xf0] sm:$0xff]
    %v3537 = vld [vmem:[%s6 + $0xf8] sm:$0xff]
    %v3538 = vld [vmem:[%s6 + $0x100] sm:$0xff]
    %v3539 = vld [vmem:[%s6 + $0x108] sm:$0xff]
    %v3540 = vld [vmem:[%s6 + $0x110] sm:$0xf]
    %vm3541 = vcmask 162816
    %v3543 = vsel %vm3541, %v3499, 0
    %v3546 = vsel %vm3541, %v3502, 0
    %v3549 = vsel %vm3541, %v3505, 0
    %vm3551 = vcmask 1043456
    %v3553 = vsel %vm3551, %v3540, 0
    %3555 = vmatprep.subr.mxu0 0.0
    %3556 = vmatpush1.msra.mxu0 %v3506
    %3557 = vmatprep.subr.mxu0 0.0
    %3558 = vmatpush1.msra.mxu0 %v3507
    %3559 = vmatprep.subr.mxu0 0.0
    %3560 = vmatpush1.msra.mxu0 %v3508
    %3561 = vmatprep.subr.mxu0 0.0
    %3562 = vmatpush1.msra.mxu0 %v3509
    %3563 = vmatprep.subr.mxu0 0.0
    %3564 = vmatpush1.msra.mxu0 %v3510
    %3565 = vmatprep.subr.mxu0 0.0
    %3566 = vmatpush1.msra.mxu0 %v3511
    %3567 = vmatprep.subr.mxu0 0.0
    %3568 = vmatpush1.msra.mxu0 %v3512
    %3569 = vmatprep.subr.mxu0 0.0
    %3570 = vmatpush1.msra.mxu0 %v3513
    %3571 = vmatprep.subr.mxu0 0.0
    %3572 = vmatpush1.msra.mxu0 %v3514
    %3573 = vmatprep.subr.mxu0 0.0
    %3574 = vmatpush1.msra.mxu0 %v3515
    %3575 = vmatprep.subr.mxu0 0.0
    %3576 = vmatpush1.msra.mxu0 %v3516
    %3577 = vmatprep.subr.mxu0 0.0
    %3578 = vmatpush1.msra.mxu0 %v3517
    %3579 = vmatprep.subr.mxu0 0.0
    %3580 = vmatpush1.msra.mxu0 %v3518
    %3581 = vmatprep.subr.mxu0 0.0
    %3582 = vmatpush1.msra.mxu0 %v3519
    %3583 = vmatprep.subr.mxu0 0.0
    %3584 = vmatpush1.msra.mxu0 %v3520
    %3585 = vmatprep.subr.mxu0 0.0
    %3586 = vmatpush1.msra.mxu0 %v3521
    %3587 = vmatprep.subr.mxu0 0.0
    %3588 = vmatpush1.msra.mxu0 %v3522
    %3589 = vmatprep.subr.mxu0 0.0
    %3590 = vmatpush1.msra.mxu0 %v3523
    %3591 = vmatprep.subr.mxu0 0.0
    %3592 = vmatpush1.msra.mxu0 %v3524
    %3593 = vmatprep.subr.mxu0 0.0
    %3594 = vmatpush1.msra.mxu0 %v3525
    %3595 = vmatprep.subr.mxu0 0.0
    %3596 = vmatpush1.msra.mxu0 %v3526
    %3597 = vmatprep.subr.mxu0 0.0
    %3598 = vmatpush1.msra.mxu0 %v3527
    %3599 = vmatprep.subr.mxu0 0.0
    %3600 = vmatpush1.msra.mxu0 %v3528
    %3601 = vmatprep.subr.mxu0 0.0
    %3602 = vmatpush1.msra.mxu0 %v3529
    %3603 = vmatprep.subr.mxu0 0.0
    %3604 = vmatpush1.msra.mxu0 %v3530
    %3605 = vmatprep.subr.mxu0 0.0
    %3606 = vmatpush1.msra.mxu0 %v3531
    %3607 = vmatprep.subr.mxu0 0.0
    %3608 = vmatpush1.msra.mxu0 %v3532
    %3609 = vmatprep.subr.mxu0 0.0
    %3610 = vmatpush1.msra.mxu0 %v3533
    %3611 = vmatprep.subr.mxu0 0.0
    %3612 = vmatpush1.msra.mxu0 %v3534
    %3613 = vmatprep.subr.mxu0 0.0
    %3614 = vmatpush1.msra.mxu0 %v3535
    %3615 = vmatprep.subr.mxu0 0.0
    %3616 = vmatpush1.msra.mxu0 %v3536
    %3617 = vmatprep.subr.mxu0 0.0
    %3618 = vmatpush1.msra.mxu0 %v3537
    %3619 = vmatprep.mubr.f32.mxu0 %v3498
    %3620 = vmatmul.mubr.f32.gmra.mrb[0].mxu0 %v3497
    %v3621 = vpop.f32.mrb[0].mxu0
    %v3622 = vadd.f32 0.0, %v3621
    %v3623 = vpop.f32.mrb[0].mxu0
    %3624 = vmatprep.mubr.f32.mxu0 %v3501
    %3625 = vmatmul.mubr.f32.gmra.mrb[0].mxu0 %v3500
    %v3626 = vpop.f32.mrb[0].mxu0
    %v3627 = vadd.f32 0.0, %v3626
    %v3628 = vpop.f32.mrb[0].mxu0
    %3629 = vmatprep.mubr.f32.mxu0 %v3504
    %3630 = vmatmul.mubr.f32.gmra.mrb[0].mxu0 %v3503
    %v3631 = vpop.f32.mrb[0].mxu0
    %v3632 = vadd.f32 0.0, %v3631
    %v3633 = vpop.f32.mrb[0].mxu0
    %3634 = vdwg.mxu0
    %3635 = vmatprep.subr.mxu0 0.0
    %3636 = vmatpush1.msra.mxu0 %v3538
    %3637 = vmatprep.subr.mxu0 0.0
    %3638 = vmatpush1.msra.mxu0 %v3539
    %3639 = vmatprep.subr.mxu0 0.0
    %3640 = vmatpush1.msra.mxu0 %v3553
    %3641 = vmatprep.subr.mxu0 0.0
    %3642 = vmatpush1.msra.mxu0 0.0
    %3643 = vmatprep.subr.mxu0 0.0
    %3644 = vmatpush1.msra.mxu0 0.0
    %3645 = vmatprep.subr.mxu0 0.0
    %3646 = vmatpush1.msra.mxu0 0.0
    %3647 = vmatprep.subr.mxu0 0.0
    %3648 = vmatpush1.msra.mxu0 0.0
    %3649 = vmatprep.subr.mxu0 0.0
    %3650 = vmatpush1.msra.mxu0 0.0
    %3651 = vmatprep.subr.mxu0 0.0
    %3652 = vmatpush1.msra.mxu0 0.0
    %3653 = vmatprep.subr.mxu0 0.0
    %3654 = vmatpush1.msra.mxu0 0.0
    %3655 = vmatprep.subr.mxu0 0.0
    %3656 = vmatpush1.msra.mxu0 0.0
    %3657 = vmatprep.subr.mxu0 0.0
    %3658 = vmatpush1.msra.mxu0 0.0
    %3659 = vmatprep.subr.mxu0 0.0
    %3660 = vmatpush1.msra.mxu0 0.0
    %3661 = vmatprep.subr.mxu0 0.0
    %3662 = vmatpush1.msra.mxu0 0.0
    %3663 = vmatprep.subr.mxu0 0.0
    %3664 = vmatpush1.msra.mxu0 0.0
    %3665 = vmatprep.subr.mxu0 0.0
    %3666 = vmatpush1.msra.mxu0 0.0
    %3667 = vmatprep.subr.mxu0 0.0
    %3668 = vmatpush1.msra.mxu0 0.0
    %3669 = vmatprep.subr.mxu0 0.0
    %3670 = vmatpush1.msra.mxu0 0.0
    %3671 = vmatprep.subr.mxu0 0.0
    %3672 = vmatpush1.msra.mxu0 0.0
    %3673 = vmatprep.subr.mxu0 0.0
    %3674 = vmatpush1.msra.mxu0 0.0
    %3675 = vmatprep.subr.mxu0 0.0
    %3676 = vmatpush1.msra.mxu0 0.0
    %3677 = vmatprep.subr.mxu0 0.0
    %3678 = vmatpush1.msra.mxu0 0.0
    %3679 = vmatprep.subr.mxu0 0.0
    %3680 = vmatpush1.msra.mxu0 0.0
    %3681 = vmatprep.subr.mxu0 0.0
    %3682 = vmatpush1.msra.mxu0 0.0
    %3683 = vmatprep.subr.mxu0 0.0
    %3684 = vmatpush1.msra.mxu0 0.0
    %3685 = vmatprep.subr.mxu0 0.0
    %3686 = vmatpush1.msra.mxu0 0.0
    %3687 = vmatprep.subr.mxu0 0.0
    %3688 = vmatpush1.msra.mxu0 0.0
    %3689 = vmatprep.subr.mxu0 0.0
    %3690 = vmatpush1.msra.mxu0 0.0
    %3691 = vmatprep.subr.mxu0 0.0
    %3692 = vmatpush1.msra.mxu0 0.0
    %3693 = vmatprep.subr.mxu0 0.0
    %3694 = vmatpush1.msra.mxu0 0.0
    %3695 = vmatprep.subr.mxu0 0.0
    %3696 = vmatpush1.msra.mxu0 0.0
    %3697 = vmatprep.subr.mxu0 0.0
    %3698 = vmatpush1.msra.mxu0 0.0
    %3699 = vmatprep.mubr.f32.mxu0 0.0
    %3700 = vmatmul.mubr.f32.gmra.mrb[0].mxu0 %v3543
    %v3701 = vpop.f32.mrb[0].mxu0
    %v3702 = vadd.f32 %v3622, %v3701
    %v3703 = vpop.f32.mrb[0].mxu0
    %3704 = vmatprep.mubr.f32.mxu0 0.0
    %3705 = vmatmul.mubr.f32.gmra.mrb[0].mxu0 %v3546
    %v3706 = vpop.f32.mrb[0].mxu0
    %v3707 = vadd.f32 %v3627, %v3706
    %v3708 = vpop.f32.mrb[0].mxu0
    %3709 = vmatprep.mubr.f32.mxu0 0.0
    %3710 = vmatmul.mubr.f32.gmra.mrb[0].mxu0 %v3549
    %v3711 = vpop.f32.mrb[0].mxu0
    %v3712 = vadd.f32 %v3632, %v3711
    %v3713 = vpop.f32.mrb[0].mxu0
    %3714 = vdwg.mxu0
    %v3715 = vld [vmem:[%s7] sm:$0x3f]
    %s3716 = scalar_lea.vmem %s6, 280
    %v3717 = vld [vmem:[%s3716] sm:$0xff]
    %v3718 = vld [vmem:[%s3716 + $0x8] sm:$0xff]
    %v3719 = vld [vmem:[%s3716 + $0x10] sm:$0xff]
    %v3720 = vld [vmem:[%s3716 + $0x18] sm:$0xff]
    %v3721 = vld [vmem:[%s3716 + $0x20] sm:$0xff]
    %v3722 = vld [vmem:[%s3716 + $0x28] sm:$0xff]
    %v3723 = vld [vmem:[%s3716 + $0x30] sm:$0xff]
    %v3724 = vld [vmem:[%s3716 + $0x38] sm:$0xff]
    %v3725 = vld [vmem:[%s3716 + $0x40] sm:$0xff]
    %v3726 = vld [vmem:[%s3716 + $0x48] sm:$0xff]
    %v3727 = vld [vmem:[%s3716 + $0x50] sm:$0xff]
    %v3728 = vld [vmem:[%s3716 + $0x58] sm:$0xff]
    %v3729 = vld [vmem:[%s3716 + $0x60] sm:$0xff]
    %v3730 = vld [vmem:[%s3716 + $0x68] sm:$0xff]
    %v3731 = vld [vmem:[%s3716 + $0x70] sm:$0xff]
    %v3732 = vld [vmem:[%s3716 + $0x78] sm:$0xff]
    %v3733 = vld [vmem:[%s3716 + $0x80] sm:$0xff]
    %v3734 = vld [vmem:[%s3716 + $0x88] sm:$0xff]
    %v3735 = vld [vmem:[%s3716 + $0x90] sm:$0xff]
    %v3736 = vld [vmem:[%s3716 + $0x98] sm:$0xff]
    %v3737 = vld [vmem:[%s3716 + $0xa0] sm:$0xff]
    %v3738 = vld [vmem:[%s3716 + $0xa8] sm:$0xff]
    %v3739 = vld [vmem:[%s3716 + $0xb0] sm:$0xff]
    %v3740 = vld [vmem:[%s3716 + $0xb8] sm:$0xff]
    %v3741 = vld [vmem:[%s3716 + $0xc0] sm:$0xff]
    %v3742 = vld [vmem:[%s3716 + $0xc8] sm:$0xff]
    %v3743 = vld [vmem:[%s3716 + $0xd0] sm:$0xff]
    %v3744 = vld [vmem:[%s3716 + $0xd8] sm:$0xff]
    %v3745 = vld [vmem:[%s3716 + $0xe0] sm:$0xff]
    %v3746 = vld [vmem:[%s3716 + $0xe8] sm:$0xff]
    %v3747 = vld [vmem:[%s3716 + $0xf0] sm:$0xff]
    %v3748 = vld [vmem:[%s3716 + $0xf8] sm:$0xff]
    %v3749 = vld [vmem:[%s3716 + $0x100] sm:$0xff]
    %v3750 = vld [vmem:[%s3716 + $0x108] sm:$0xff]
    %v3751 = vld [vmem:[%s3716 + $0x110] sm:$0xf]
    %v3753 = vsel %vm3551, %v3751, 0
    %3755 = vmatprep.subr.mxu0 0.0
    %3756 = vmatpush1.msra.mxu0 %v3717
    %3757 = vmatprep.subr.mxu0 0.0
    %3758 = vmatpush1.msra.mxu0 %v3718
    %3759 = vmatprep.subr.mxu0 0.0
    %3760 = vmatpush1.msra.mxu0 %v3719
    %3761 = vmatprep.subr.mxu0 0.0
    %3762 = vmatpush1.msra.mxu0 %v3720
    %3763 = vmatprep.subr.mxu0 0.0
    %3764 = vmatpush1.msra.mxu0 %v3721
    %3765 = vmatprep.subr.mxu0 0.0
    %3766 = vmatpush1.msra.mxu0 %v3722
    %3767 = vmatprep.subr.mxu0 0.0
    %3768 = vmatpush1.msra.mxu0 %v3723
    %3769 = vmatprep.subr.mxu0 0.0
    %3770 = vmatpush1.msra.mxu0 %v3724
    %3771 = vmatprep.subr.mxu0 0.0
    %3772 = vmatpush1.msra.mxu0 %v3725
    %3773 = vmatprep.subr.mxu0 0.0
    %3774 = vmatpush1.msra.mxu0 %v3726
    %3775 = vmatprep.subr.mxu0 0.0
    %3776 = vmatpush1.msra.mxu0 %v3727
    %3777 = vmatprep.subr.mxu0 0.0
    %3778 = vmatpush1.msra.mxu0 %v3728
    %3779 = vmatprep.subr.mxu0 0.0
    %3780 = vmatpush1.msra.mxu0 %v3729
    %3781 = vmatprep.subr.mxu0 0.0
    %3782 = vmatpush1.msra.mxu0 %v3730
    %3783 = vmatprep.subr.mxu0 0.0
    %3784 = vmatpush1.msra.mxu0 %v3731
    %3785 = vmatprep.subr.mxu0 0.0
    %3786 = vmatpush1.msra.mxu0 %v3732
    %3787 = vmatprep.subr.mxu0 0.0
    %3788 = vmatpush1.msra.mxu0 %v3733
    %3789 = vmatprep.subr.mxu0 0.0
    %3790 = vmatpush1.msra.mxu0 %v3734
    %3791 = vmatprep.subr.mxu0 0.0
    %3792 = vmatpush1.msra.mxu0 %v3735
    %3793 = vmatprep.subr.mxu0 0.0
    %3794 = vmatpush1.msra.mxu0 %v3736
    %3795 = vmatprep.subr.mxu0 0.0
    %3796 = vmatpush1.msra.mxu0 %v3737
    %3797 = vmatprep.subr.mxu0 0.0
    %3798 = vmatpush1.msra.mxu0 %v3738
    %3799 = vmatprep.subr.mxu0 0.0
    %3800 = vmatpush1.msra.mxu0 %v3739
    %3801 = vmatprep.subr.mxu0 0.0
    %3802 = vmatpush1.msra.mxu0 %v3740
    %3803 = vmatprep.subr.mxu0 0.0
    %3804 = vmatpush1.msra.mxu0 %v3741
    %3805 = vmatprep.subr.mxu0 0.0
    %3806 = vmatpush1.msra.mxu0 %v3742
    %3807 = vmatprep.subr.mxu0 0.0
    %3808 = vmatpush1.msra.mxu0 %v3743
    %3809 = vmatprep.subr.mxu0 0.0
    %3810 = vmatpush1.msra.mxu0 %v3744
    %3811 = vmatprep.subr.mxu0 0.0
    %3812 = vmatpush1.msra.mxu0 %v3745
    %3813 = vmatprep.subr.mxu0 0.0
    %3814 = vmatpush1.msra.mxu0 %v3746
    %3815 = vmatprep.subr.mxu0 0.0
    %3816 = vmatpush1.msra.mxu0 %v3747
    %3817 = vmatprep.subr.mxu0 0.0
    %3818 = vmatpush1.msra.mxu0 %v3748
    %3819 = vmatprep.mubr.f32.mxu0 %v3498
    %3820 = vmatmul.mubr.f32.gmra.mrb[0].mxu0 %v3497
    %v3821 = vpop.f32.mrb[0].mxu0
    %v3822 = vadd.f32 0.0, %v3821
    %v3823 = vpop.f32.mrb[0].mxu0
    %3824 = vmatprep.mubr.f32.mxu0 %v3501
    %3825 = vmatmul.mubr.f32.gmra.mrb[0].mxu0 %v3500
    %v3826 = vpop.f32.mrb[0].mxu0
    %v3827 = vadd.f32 0.0, %v3826
    %v3828 = vpop.f32.mrb[0].mxu0
    %3829 = vmatprep.mubr.f32.mxu0 %v3504
    %3830 = vmatmul.mubr.f32.gmra.mrb[0].mxu0 %v3503
    %v3831 = vpop.f32.mrb[0].mxu0
    %v3832 = vadd.f32 0.0, %v3831
    %v3833 = vpop.f32.mrb[0].mxu0
    %3834 = vdwg.mxu0
    %3835 = vmatprep.subr.mxu0 0.0
    %3836 = vmatpush1.msra.mxu0 %v3749
    %3837 = vmatprep.subr.mxu0 0.0
    %3838 = vmatpush1.msra.mxu0 %v3750
    %3839 = vmatprep.subr.mxu0 0.0
    %3840 = vmatpush1.msra.mxu0 %v3753
    %3841 = vmatprep.subr.mxu0 0.0
    %3842 = vmatpush1.msra.mxu0 0.0
    %3843 = vmatprep.subr.mxu0 0.0
    %3844 = vmatpush1.msra.mxu0 0.0
    %3845 = vmatprep.subr.mxu0 0.0
    %3846 = vmatpush1.msra.mxu0 0.0
    %3847 = vmatprep.subr.mxu0 0.0
    %3848 = vmatpush1.msra.mxu0 0.0
    %3849 = vmatprep.subr.mxu0 0.0
    %3850 = vmatpush1.msra.mxu0 0.0
    %3851 = vmatprep.subr.mxu0 0.0
    %3852 = vmatpush1.msra.mxu0 0.0
    %3853 = vmatprep.subr.mxu0 0.0
    %3854 = vmatpush1.msra.mxu0 0.0
    %3855 = vmatprep.subr.mxu0 0.0
    %3856 = vmatpush1.msra.mxu0 0.0
    %3857 = vmatprep.subr.mxu0 0.0
    %3858 = vmatpush1.msra.mxu0 0.0
    %3859 = vmatprep.subr.mxu0 0.0
    %3860 = vmatpush1.msra.mxu0 0.0
    %3861 = vmatprep.subr.mxu0 0.0
    %3862 = vmatpush1.msra.mxu0 0.0
    %3863 = vmatprep.subr.mxu0 0.0
    %3864 = vmatpush1.msra.mxu0 0.0
    %3865 = vmatprep.subr.mxu0 0.0
    %3866 = vmatpush1.msra.mxu0 0.0
    %3867 = vmatprep.subr.mxu0 0.0
    %3868 = vmatpush1.msra.mxu0 0.0
    %3869 = vmatprep.subr.mxu0 0.0
    %3870 = vmatpush1.msra.mxu0 0.0
    %3871 = vmatprep.subr.mxu0 0.0
    %3872 = vmatpush1.msra.mxu0 0.0
    %3873 = vmatprep.subr.mxu0 0.0
    %3874 = vmatpush1.msra.mxu0 0.0
    %3875 = vmatprep.subr.mxu0 0.0
    %3876 = vmatpush1.msra.mxu0 0.0
    %3877 = vmatprep.subr.mxu0 0.0
    %3878 = vmatpush1.msra.mxu0 0.0
    %3879 = vmatprep.subr.mxu0 0.0
    %3880 = vmatpush1.msra.mxu0 0.0
    %3881 = vmatprep.subr.mxu0 0.0
    %3882 = vmatpush1.msra.mxu0 0.0
    %3883 = vmatprep.subr.mxu0 0.0
    %3884 = vmatpush1.msra.mxu0 0.0
    %3885 = vmatprep.subr.mxu0 0.0
    %3886 = vmatpush1.msra.mxu0 0.0
    %3887 = vmatprep.subr.mxu0 0.0
    %3888 = vmatpush1.msra.mxu0 0.0
    %3889 = vmatprep.subr.mxu0 0.0
    %3890 = vmatpush1.msra.mxu0 0.0
    %3891 = vmatprep.subr.mxu0 0.0
    %3892 = vmatpush1.msra.mxu0 0.0
    %3893 = vmatprep.subr.mxu0 0.0
    %3894 = vmatpush1.msra.mxu0 0.0
    %3895 = vmatprep.subr.mxu0 0.0
    %3896 = vmatpush1.msra.mxu0 0.0
    %3897 = vmatprep.subr.mxu0 0.0
    %3898 = vmatpush1.msra.mxu0 0.0
    %3899 = vmatprep.mubr.f32.mxu0 0.0
    %3900 = vmatmul.mubr.f32.gmra.mrb[0].mxu0 %v3543
    %v3901 = vpop.f32.mrb[0].mxu0
    %v3902 = vadd.f32 %v3822, %v3901
    %v3903 = vpop.f32.mrb[0].mxu0
    %3904 = vmatprep.mubr.f32.mxu0 0.0
    %3905 = vmatmul.mubr.f32.gmra.mrb[0].mxu0 %v3546
    %v3906 = vpop.f32.mrb[0].mxu0
    %v3907 = vadd.f32 %v3827, %v3906
    %v3908 = vpop.f32.mrb[0].mxu0
    %3909 = vmatprep.mubr.f32.mxu0 0.0
    %3910 = vmatmul.mubr.f32.gmra.mrb[0].mxu0 %v3549
    %v3911 = vpop.f32.mrb[0].mxu0
    %v3912 = vadd.f32 %v3832, %v3911
    %v3913 = vpop.f32.mrb[0].mxu0
    %3914 = vdwg.mxu0
    %s3915 = scalar_lea.vmem %s7, 8
    %v3916 = vld [vmem:[%s3915] sm:$0x3f]
    %vm3917 = vcmask 187392
    %v3919 = vsel %vm3917, %v3916, 0
    %v3922 = vsel %vm3420, %v3912, 0
    %3924 = vmatprep.subr.mxu0 0.0
    %3925 = vmatpush1.msra.mxu0 %v3902
    %3926 = vmatprep.subr.mxu0 0.0
    %3927 = vmatpush1.msra.mxu0 %v3907
    %3928 = vmatprep.subr.mxu0 0.0
    %3929 = vmatpush1.msra.mxu0 %v3922
    %3930 = vmatprep.subr.mxu0 0.0
    %3931 = vmatpush1.msra.mxu0 0.0
    %3932 = vmatprep.subr.mxu0 0.0
    %3933 = vmatpush1.msra.mxu0 0.0
    %3934 = vmatprep.subr.mxu0 0.0
    %3935 = vmatpush1.msra.mxu0 0.0
    %3936 = vmatprep.subr.mxu0 0.0
    %3937 = vmatpush1.msra.mxu0 0.0
    %3938 = vmatprep.subr.mxu0 0.0
    %3939 = vmatpush1.msra.mxu0 0.0
    %3940 = vmatprep.subr.mxu0 0.0
    %3941 = vmatpush1.msra.mxu0 0.0
    %3942 = vmatprep.subr.mxu0 0.0
    %3943 = vmatpush1.msra.mxu0 0.0
    %3944 = vmatprep.subr.mxu0 0.0
    %3945 = vmatpush1.msra.mxu0 0.0
    %3946 = vmatprep.subr.mxu0 0.0
    %3947 = vmatpush1.msra.mxu0 0.0
    %3948 = vmatprep.subr.mxu0 0.0
    %3949 = vmatpush1.msra.mxu0 0.0
    %3950 = vmatprep.subr.mxu0 0.0
    %3951 = vmatpush1.msra.mxu0 0.0
    %3952 = vmatprep.subr.mxu0 0.0
    %3953 = vmatpush1.msra.mxu0 0.0
    %3954 = vmatprep.subr.mxu0 0.0
    %3955 = vmatpush1.msra.mxu0 0.0
    %3956 = vmatprep.subr.mxu0 0.0
    %3957 = vmatpush1.msra.mxu0 0.0
    %3958 = vmatprep.subr.mxu0 0.0
    %3959 = vmatpush1.msra.mxu0 0.0
    %3960 = vmatprep.subr.mxu0 0.0
    %3961 = vmatpush1.msra.mxu0 0.0
    %3962 = vmatprep.subr.mxu0 0.0
    %3963 = vmatpush1.msra.mxu0 0.0
    %3964 = vmatprep.subr.mxu0 0.0
    %3965 = vmatpush1.msra.mxu0 0.0
    %3966 = vmatprep.subr.mxu0 0.0
    %3967 = vmatpush1.msra.mxu0 0.0
    %3968 = vmatprep.subr.mxu0 0.0
    %3969 = vmatpush1.msra.mxu0 0.0
    %3970 = vmatprep.subr.mxu0 0.0
    %3971 = vmatpush1.msra.mxu0 0.0
    %3972 = vmatprep.subr.mxu0 0.0
    %3973 = vmatpush1.msra.mxu0 0.0
    %3974 = vmatprep.subr.mxu0 0.0
    %3975 = vmatpush1.msra.mxu0 0.0
    %3976 = vmatprep.subr.mxu0 0.0
    %3977 = vmatpush1.msra.mxu0 0.0
    %3978 = vmatprep.subr.mxu0 0.0
    %3979 = vmatpush1.msra.mxu0 0.0
    %3980 = vmatprep.subr.mxu0 0.0
    %3981 = vmatpush1.msra.mxu0 0.0
    %3982 = vmatprep.subr.mxu0 0.0
    %3983 = vmatpush1.msra.mxu0 0.0
    %3984 = vmatprep.subr.mxu0 0.0
    %3985 = vmatpush1.msra.mxu0 0.0
    %3986 = vmatprep.subr.mxu0 0.0
    %3987 = vmatpush1.msra.mxu0 0.0
    %3988 = vmatprep.mubr.f32.mxu0 0.0
    %3989 = vmatmul.mubr.f32.gmra.mrb[0].mxu0 %v3919
    %v3990 = vpop.f32.mrb[0].mxu0
    %v3991 = vadd.f32 0.0, %v3990
    %v3992 = vpop.f32.mrb[0].mxu0
    %3993 = vdwg.mxu0
    %v3995 = vsel %vm3917, %v3715, 0
    %v3998 = vsel %vm3420, %v3712, 0
    %4000 = vmatprep.subr.mxu0 0.0
    %4001 = vmatpush1.msra.mxu0 %v3702
    %4002 = vmatprep.subr.mxu0 0.0
    %4003 = vmatpush1.msra.mxu0 %v3707
    %4004 = vmatprep.subr.mxu0 0.0
    %4005 = vmatpush1.msra.mxu0 %v3998
    %4006 = vmatprep.subr.mxu0 0.0
    %4007 = vmatpush1.msra.mxu0 0.0
    %4008 = vmatprep.subr.mxu0 0.0
    %4009 = vmatpush1.msra.mxu0 0.0
    %4010 = vmatprep.subr.mxu0 0.0
    %4011 = vmatpush1.msra.mxu0 0.0
    %4012 = vmatprep.subr.mxu0 0.0
    %4013 = vmatpush1.msra.mxu0 0.0
    %4014 = vmatprep.subr.mxu0 0.0
    %4015 = vmatpush1.msra.mxu0 0.0
    %4016 = vmatprep.subr.mxu0 0.0
    %4017 = vmatpush1.msra.mxu0 0.0
    %4018 = vmatprep.subr.mxu0 0.0
    %4019 = vmatpush1.msra.mxu0 0.0
    %4020 = vmatprep.subr.mxu0 0.0
    %4021 = vmatpush1.msra.mxu0 0.0
    %4022 = vmatprep.subr.mxu0 0.0
    %4023 = vmatpush1.msra.mxu0 0.0
    %4024 = vmatprep.subr.mxu0 0.0
    %4025 = vmatpush1.msra.mxu0 0.0
    %4026 = vmatprep.subr.mxu0 0.0
    %4027 = vmatpush1.msra.mxu0 0.0
    %4028 = vmatprep.subr.mxu0 0.0
    %4029 = vmatpush1.msra.mxu0 0.0
    %4030 = vmatprep.subr.mxu0 0.0
    %4031 = vmatpush1.msra.mxu0 0.0
    %4032 = vmatprep.subr.mxu0 0.0
    %4033 = vmatpush1.msra.mxu0 0.0
    %4034 = vmatprep.subr.mxu0 0.0
    %4035 = vmatpush1.msra.mxu0 0.0
    %4036 = vmatprep.subr.mxu0 0.0
    %4037 = vmatpush1.msra.mxu0 0.0
    %4038 = vmatprep.subr.mxu0 0.0
    %4039 = vmatpush1.msra.mxu0 0.0
    %4040 = vmatprep.subr.mxu0 0.0
    %4041 = vmatpush1.msra.mxu0 0.0
    %4042 = vmatprep.subr.mxu0 0.0
    %4043 = vmatpush1.msra.mxu0 0.0
    %4044 = vmatprep.subr.mxu0 0.0
    %4045 = vmatpush1.msra.mxu0 0.0
    %4046 = vmatprep.subr.mxu0 0.0
    %4047 = vmatpush1.msra.mxu0 0.0
    %4048 = vmatprep.subr.mxu0 0.0
    %4049 = vmatpush1.msra.mxu0 0.0
    %4050 = vmatprep.subr.mxu0 0.0
    %4051 = vmatpush1.msra.mxu0 0.0
    %4052 = vmatprep.subr.mxu0 0.0
    %4053 = vmatpush1.msra.mxu0 0.0
    %4054 = vmatprep.subr.mxu0 0.0
    %4055 = vmatpush1.msra.mxu0 0.0
    %4056 = vmatprep.subr.mxu0 0.0
    %4057 = vmatpush1.msra.mxu0 0.0
    %4058 = vmatprep.subr.mxu0 0.0
    %4059 = vmatpush1.msra.mxu0 0.0
    %4060 = vmatprep.subr.mxu0 0.0
    %4061 = vmatpush1.msra.mxu0 0.0
    %4062 = vmatprep.subr.mxu0 0.0
    %4063 = vmatpush1.msra.mxu0 0.0
    %4064 = vmatprep.mubr.f32.mxu0 0.0
    %4065 = vmatmul.mubr.f32.gmra.mrb[0].mxu0 %v3995
    %v4066 = vpop.f32.mrb[0].mxu0
    %v4067 = vadd.f32 %v3991, %v4066
    %v4068 = vpop.f32.mrb[0].mxu0
    %4069 = vdwg.mxu0
    %s4070 = scalar_lea.vmem %s6, 560
    %v4071 = vld [vmem:[%s4070] sm:$0xff]
    %v4072 = vld [vmem:[%s4070 + $0x8] sm:$0xff]
    %v4073 = vld [vmem:[%s4070 + $0x10] sm:$0xff]
    %v4074 = vld [vmem:[%s4070 + $0x18] sm:$0xff]
    %v4075 = vld [vmem:[%s4070 + $0x20] sm:$0xff]
    %v4076 = vld [vmem:[%s4070 + $0x28] sm:$0xff]
    %v4077 = vld [vmem:[%s4070 + $0x30] sm:$0xff]
    %v4078 = vld [vmem:[%s4070 + $0x38] sm:$0xff]
    %v4079 = vld [vmem:[%s4070 + $0x40] sm:$0xff]
    %v4080 = vld [vmem:[%s4070 + $0x48] sm:$0xff]
    %v4081 = vld [vmem:[%s4070 + $0x50] sm:$0xff]
    %v4082 = vld [vmem:[%s4070 + $0x58] sm:$0xff]
    %v4083 = vld [vmem:[%s4070 + $0x60] sm:$0xff]
    %v4084 = vld [vmem:[%s4070 + $0x68] sm:$0xff]
    %v4085 = vld [vmem:[%s4070 + $0x70] sm:$0xff]
    %v4086 = vld [vmem:[%s4070 + $0x78] sm:$0xff]
    %v4087 = vld [vmem:[%s4070 + $0x80] sm:$0xff]
    %v4088 = vld [vmem:[%s4070 + $0x88] sm:$0xff]
    %v4089 = vld [vmem:[%s4070 + $0x90] sm:$0xff]
    %v4090 = vld [vmem:[%s4070 + $0x98] sm:$0xff]
    %v4091 = vld [vmem:[%s4070 + $0xa0] sm:$0xff]
    %v4092 = vld [vmem:[%s4070 + $0xa8] sm:$0xff]
    %v4093 = vld [vmem:[%s4070 + $0xb0] sm:$0xff]
    %v4094 = vld [vmem:[%s4070 + $0xb8] sm:$0xff]
    %v4095 = vld [vmem:[%s4070 + $0xc0] sm:$0xff]
    %v4096 = vld [vmem:[%s4070 + $0xc8] sm:$0xff]
    %v4097 = vld [vmem:[%s4070 + $0xd0] sm:$0xff]
    %v4098 = vld [vmem:[%s4070 + $0xd8] sm:$0xff]
    %v4099 = vld [vmem:[%s4070 + $0xe0] sm:$0xff]
    %v4100 = vld [vmem:[%s4070 + $0xe8] sm:$0xff]
    %v4101 = vld [vmem:[%s4070 + $0xf0] sm:$0xff]
    %v4102 = vld [vmem:[%s4070 + $0xf8] sm:$0xff]
    %v4103 = vld [vmem:[%s4070 + $0x100] sm:$0xff]
    %v4104 = vld [vmem:[%s4070 + $0x108] sm:$0xff]
    %v4105 = vld [vmem:[%s4070 + $0x110] sm:$0xf]
    %v4107 = vsel %vm3551, %v4105, 0
    %4109 = vmatprep.subr.mxu0 0.0
    %4110 = vmatpush1.msra.mxu0 %v4071
    %4111 = vmatprep.subr.mxu0 0.0
    %4112 = vmatpush1.msra.mxu0 %v4072
    %4113 = vmatprep.subr.mxu0 0.0
    %4114 = vmatpush1.msra.mxu0 %v4073
    %4115 = vmatprep.subr.mxu0 0.0
    %4116 = vmatpush1.msra.mxu0 %v4074
    %4117 = vmatprep.subr.mxu0 0.0
    %4118 = vmatpush1.msra.mxu0 %v4075
    %4119 = vmatprep.subr.mxu0 0.0
    %4120 = vmatpush1.msra.mxu0 %v4076
    %4121 = vmatprep.subr.mxu0 0.0
    %4122 = vmatpush1.msra.mxu0 %v4077
    %4123 = vmatprep.subr.mxu0 0.0
    %4124 = vmatpush1.msra.mxu0 %v4078
    %4125 = vmatprep.subr.mxu0 0.0
    %4126 = vmatpush1.msra.mxu0 %v4079
    %4127 = vmatprep.subr.mxu0 0.0
    %4128 = vmatpush1.msra.mxu0 %v4080
    %4129 = vmatprep.subr.mxu0 0.0
    %4130 = vmatpush1.msra.mxu0 %v4081
    %4131 = vmatprep.subr.mxu0 0.0
    %4132 = vmatpush1.msra.mxu0 %v4082
    %4133 = vmatprep.subr.mxu0 0.0
    %4134 = vmatpush1.msra.mxu0 %v4083
    %4135 = vmatprep.subr.mxu0 0.0
    %4136 = vmatpush1.msra.mxu0 %v4084
    %4137 = vmatprep.subr.mxu0 0.0
    %4138 = vmatpush1.msra.mxu0 %v4085
    %4139 = vmatprep.subr.mxu0 0.0
    %4140 = vmatpush1.msra.mxu0 %v4086
    %4141 = vmatprep.subr.mxu0 0.0
    %4142 = vmatpush1.msra.mxu0 %v4087
    %4143 = vmatprep.subr.mxu0 0.0
    %4144 = vmatpush1.msra.mxu0 %v4088
    %4145 = vmatprep.subr.mxu0 0.0
    %4146 = vmatpush1.msra.mxu0 %v4089
    %4147 = vmatprep.subr.mxu0 0.0
    %4148 = vmatpush1.msra.mxu0 %v4090
    %4149 = vmatprep.subr.mxu0 0.0
    %4150 = vmatpush1.msra.mxu0 %v4091
    %4151 = vmatprep.subr.mxu0 0.0
    %4152 = vmatpush1.msra.mxu0 %v4092
    %4153 = vmatprep.subr.mxu0 0.0
    %4154 = vmatpush1.msra.mxu0 %v4093
    %4155 = vmatprep.subr.mxu0 0.0
    %4156 = vmatpush1.msra.mxu0 %v4094
    %4157 = vmatprep.subr.mxu0 0.0
    %4158 = vmatpush1.msra.mxu0 %v4095
    %4159 = vmatprep.subr.mxu0 0.0
    %4160 = vmatpush1.msra.mxu0 %v4096
    %4161 = vmatprep.subr.mxu0 0.0
    %4162 = vmatpush1.msra.mxu0 %v4097
    %4163 = vmatprep.subr.mxu0 0.0
    %4164 = vmatpush1.msra.mxu0 %v4098
    %4165 = vmatprep.subr.mxu0 0.0
    %4166 = vmatpush1.msra.mxu0 %v4099
    %4167 = vmatprep.subr.mxu0 0.0
    %4168 = vmatpush1.msra.mxu0 %v4100
    %4169 = vmatprep.subr.mxu0 0.0
    %4170 = vmatpush1.msra.mxu0 %v4101
    %4171 = vmatprep.subr.mxu0 0.0
    %4172 = vmatpush1.msra.mxu0 %v4102
    %4173 = vmatprep.mubr.f32.mxu0 %v3498
    %4174 = vmatmul.mubr.f32.gmra.mrb[0].mxu0 %v3497
    %v4175 = vpop.f32.mrb[0].mxu0
    %v4176 = vadd.f32 0.0, %v4175
    %v4177 = vpop.f32.mrb[0].mxu0
    %4178 = vmatprep.mubr.f32.mxu0 %v3501
    %4179 = vmatmul.mubr.f32.gmra.mrb[0].mxu0 %v3500
    %v4180 = vpop.f32.mrb[0].mxu0
    %v4181 = vadd.f32 0.0, %v4180
    %v4182 = vpop.f32.mrb[0].mxu0
    %4183 = vmatprep.mubr.f32.mxu0 %v3504
    %4184 = vmatmul.mubr.f32.gmra.mrb[0].mxu0 %v3503
    %v4185 = vpop.f32.mrb[0].mxu0
    %v4186 = vadd.f32 0.0, %v4185
    %v4187 = vpop.f32.mrb[0].mxu0
    %4188 = vdwg.mxu0
    %4189 = vmatprep.subr.mxu0 0.0
    %4190 = vmatpush1.msra.mxu0 %v4103
    %4191 = vmatprep.subr.mxu0 0.0
    %4192 = vmatpush1.msra.mxu0 %v4104
    %4193 = vmatprep.subr.mxu0 0.0
    %4194 = vmatpush1.msra.mxu0 %v4107
    %4195 = vmatprep.subr.mxu0 0.0
    %4196 = vmatpush1.msra.mxu0 0.0
    %4197 = vmatprep.subr.mxu0 0.0
    %4198 = vmatpush1.msra.mxu0 0.0
    %4199 = vmatprep.subr.mxu0 0.0
    %4200 = vmatpush1.msra.mxu0 0.0
    %4201 = vmatprep.subr.mxu0 0.0
    %4202 = vmatpush1.msra.mxu0 0.0
    %4203 = vmatprep.subr.mxu0 0.0
    %4204 = vmatpush1.msra.mxu0 0.0
    %4205 = vmatprep.subr.mxu0 0.0
    %4206 = vmatpush1.msra.mxu0 0.0
    %4207 = vmatprep.subr.mxu0 0.0
    %4208 = vmatpush1.msra.mxu0 0.0
    %4209 = vmatprep.subr.mxu0 0.0
    %4210 = vmatpush1.msra.mxu0 0.0
    %4211 = vmatprep.subr.mxu0 0.0
    %4212 = vmatpush1.msra.mxu0 0.0
    %4213 = vmatprep.subr.mxu0 0.0
    %4214 = vmatpush1.msra.mxu0 0.0
    %4215 = vmatprep.subr.mxu0 0.0
    %4216 = vmatpush1.msra.mxu0 0.0
    %4217 = vmatprep.subr.mxu0 0.0
    %4218 = vmatpush1.msra.mxu0 0.0
    %4219 = vmatprep.subr.mxu0 0.0
    %4220 = vmatpush1.msra.mxu0 0.0
    %4221 = vmatprep.subr.mxu0 0.0
    %4222 = vmatpush1.msra.mxu0 0.0
    %4223 = vmatprep.subr.mxu0 0.0
    %4224 = vmatpush1.msra.mxu0 0.0
    %4225 = vmatprep.subr.mxu0 0.0
    %4226 = vmatpush1.msra.mxu0 0.0
    %4227 = vmatprep.subr.mxu0 0.0
    %4228 = vmatpush1.msra.mxu0 0.0
    %4229 = vmatprep.subr.mxu0 0.0
    %4230 = vmatpush1.msra.mxu0 0.0
    %4231 = vmatprep.subr.mxu0 0.0
    %4232 = vmatpush1.msra.mxu0 0.0
    %4233 = vmatprep.subr.mxu0 0.0
    %4234 = vmatpush1.msra.mxu0 0.0
    %4235 = vmatprep.subr.mxu0 0.0
    %4236 = vmatpush1.msra.mxu0 0.0
    %4237 = vmatprep.subr.mxu0 0.0
    %4238 = vmatpush1.msra.mxu0 0.0
    %4239 = vmatprep.subr.mxu0 0.0
    %4240 = vmatpush1.msra.mxu0 0.0
    %4241 = vmatprep.subr.mxu0 0.0
    %4242 = vmatpush1.msra.mxu0 0.0
    %4243 = vmatprep.subr.mxu0 0.0
    %4244 = vmatpush1.msra.mxu0 0.0
    %4245 = vmatprep.subr.mxu0 0.0
    %4246 = vmatpush1.msra.mxu0 0.0
    %4247 = vmatprep.subr.mxu0 0.0
    %4248 = vmatpush1.msra.mxu0 0.0
    %4249 = vmatprep.subr.mxu0 0.0
    %4250 = vmatpush1.msra.mxu0 0.0
    %4251 = vmatprep.subr.mxu0 0.0
    %4252 = vmatpush1.msra.mxu0 0.0
    %4253 = vmatprep.mubr.f32.mxu0 0.0
    %4254 = vmatmul.mubr.f32.gmra.mrb[0].mxu0 %v3543
    %v4255 = vpop.f32.mrb[0].mxu0
    %v4256 = vadd.f32 %v4176, %v4255
    %v4257 = vpop.f32.mrb[0].mxu0
    %4258 = vmatprep.mubr.f32.mxu0 0.0
    %4259 = vmatmul.mubr.f32.gmra.mrb[0].mxu0 %v3546
    %v4260 = vpop.f32.mrb[0].mxu0
    %v4261 = vadd.f32 %v4181, %v4260
    %v4262 = vpop.f32.mrb[0].mxu0
    %4263 = vmatprep.mubr.f32.mxu0 0.0
    %4264 = vmatmul.mubr.f32.gmra.mrb[0].mxu0 %v3549
    %v4265 = vpop.f32.mrb[0].mxu0
    %v4266 = vadd.f32 %v4186, %v4265
    %v4267 = vpop.f32.mrb[0].mxu0
    %4268 = vdwg.mxu0
    %s4269 = scalar_lea.vmem %s7, 16
    %v4270 = vld [vmem:[%s4269] sm:$0x3f]
    %v4272 = vsel %vm3917, %v4270, 0
    %v4275 = vsel %vm3420, %v4266, 0
    %4277 = vmatprep.subr.mxu0 0.0
    %4278 = vmatpush1.msra.mxu0 %v4256
    %4279 = vmatprep.subr.mxu0 0.0
    %4280 = vmatpush1.msra.mxu0 %v4261
    %4281 = vmatprep.subr.mxu0 0.0
    %4282 = vmatpush1.msra.mxu0 %v4275
    %4283 = vmatprep.subr.mxu0 0.0
    %4284 = vmatpush1.msra.mxu0 0.0
    %4285 = vmatprep.subr.mxu0 0.0
    %4286 = vmatpush1.msra.mxu0 0.0
    %4287 = vmatprep.subr.mxu0 0.0
    %4288 = vmatpush1.msra.mxu0 0.0
    %4289 = vmatprep.subr.mxu0 0.0
    %4290 = vmatpush1.msra.mxu0 0.0
    %4291 = vmatprep.subr.mxu0 0.0
    %4292 = vmatpush1.msra.mxu0 0.0
    %4293 = vmatprep.subr.mxu0 0.0
    %4294 = vmatpush1.msra.mxu0 0.0
    %4295 = vmatprep.subr.mxu0 0.0
    %4296 = vmatpush1.msra.mxu0 0.0
    %4297 = vmatprep.subr.mxu0 0.0
    %4298 = vmatpush1.msra.mxu0 0.0
    %4299 = vmatprep.subr.mxu0 0.0
    %4300 = vmatpush1.msra.mxu0 0.0
    %4301 = vmatprep.subr.mxu0 0.0
    %4302 = vmatpush1.msra.mxu0 0.0
    %4303 = vmatprep.subr.mxu0 0.0
    %4304 = vmatpush1.msra.mxu0 0.0
    %4305 = vmatprep.subr.mxu0 0.0
    %4306 = vmatpush1.msra.mxu0 0.0
    %4307 = vmatprep.subr.mxu0 0.0
    %4308 = vmatpush1.msra.mxu0 0.0
    %4309 = vmatprep.subr.mxu0 0.0
    %4310 = vmatpush1.msra.mxu0 0.0
    %4311 = vmatprep.subr.mxu0 0.0
    %4312 = vmatpush1.msra.mxu0 0.0
    %4313 = vmatprep.subr.mxu0 0.0
    %4314 = vmatpush1.msra.mxu0 0.0
    %4315 = vmatprep.subr.mxu0 0.0
    %4316 = vmatpush1.msra.mxu0 0.0
    %4317 = vmatprep.subr.mxu0 0.0
    %4318 = vmatpush1.msra.mxu0 0.0
    %4319 = vmatprep.subr.mxu0 0.0
    %4320 = vmatpush1.msra.mxu0 0.0
    %4321 = vmatprep.subr.mxu0 0.0
    %4322 = vmatpush1.msra.mxu0 0.0
    %4323 = vmatprep.subr.mxu0 0.0
    %4324 = vmatpush1.msra.mxu0 0.0
    %4325 = vmatprep.subr.mxu0 0.0
    %4326 = vmatpush1.msra.mxu0 0.0
    %4327 = vmatprep.subr.mxu0 0.0
    %4328 = vmatpush1.msra.mxu0 0.0
    %4329 = vmatprep.subr.mxu0 0.0
    %4330 = vmatpush1.msra.mxu0 0.0
    %4331 = vmatprep.subr.mxu0 0.0
    %4332 = vmatpush1.msra.mxu0 0.0
    %4333 = vmatprep.subr.mxu0 0.0
    %4334 = vmatpush1.msra.mxu0 0.0
    %4335 = vmatprep.subr.mxu0 0.0
    %4336 = vmatpush1.msra.mxu0 0.0
    %4337 = vmatprep.subr.mxu0 0.0
    %4338 = vmatpush1.msra.mxu0 0.0
    %4339 = vmatprep.subr.mxu0 0.0
    %4340 = vmatpush1.msra.mxu0 0.0
    %4341 = vmatprep.mubr.f32.mxu0 0.0
    %4342 = vmatmul.mubr.f32.gmra.mrb[0].mxu0 %v4272
    %v4343 = vpop.f32.mrb[0].mxu0
    %v4344 = vadd.f32 0.0, %v4343
    %v4345 = vpop.f32.mrb[0].mxu0
    %4346 = vdwg.mxu0
    %v4347 = vadd.f32 %v4067, %v4344
    %v4348 = vld [vmem:[%s8] sm:$0x1]
    %v4350 = vlaneseq
    %v4351 = vshrl.u32 %v4350, 7
    %v4352 = vsub.s32 0, %v4351
    %v4353 = vrot.slane %v4348, %v4352
    %v4355 = vadd.f32 %v4347, %v4353
    %vm4356 = vcmask 586752
    %v4357 = vsel %vm4356, %v4355, 0.0
    %4358 = vadd.xlane.f32.xlu0 %v4357
    %v4359 = vpop.xlane.xlu0 %4358
    %v4360 = vrot.slane %v4359, 4
    %v4361 = vadd.f32 %v4359, %v4360
    %v4362 = vrot.slane %v4361, 2
    %v4363 = vadd.f32 %v4361, %v4362
    %v4364 = vrot.slane %v4363, 1
    %v4365 = vadd.f32 %v4363, %v4364
    %s4366 = vtos %v4365
    %v4367 = vstv %s4366
    %v4368 = vrcp.pop 432.0
    %v4369 = vmul.f32 %v4367, %v4368
    %v4370 = vsub.f32 %v4355, %v4369
    %v4371 = vmul.f32 %v4370, %v4370
    %v4372 = vsel %vm4356, %v4371, 0.0
    %4373 = vadd.xlane.f32.xlu0 %v4372
    %v4374 = vpop.xlane.xlu0 %4373
    %v4375 = vrot.slane %v4374, 4
    %v4376 = vadd.f32 %v4374, %v4375
    %v4377 = vrot.slane %v4376, 2
    %v4378 = vadd.f32 %v4376, %v4377
    %v4379 = vrot.slane %v4378, 1
    %v4380 = vadd.f32 %v4378, %v4379
    %s4381 = vtos %v4380
    %v4382 = vstv %s4381
    %v4383 = vrcp.pop 431.0
    %v4384 = vmul.f32 %v4382, %v4383
    %v4385 = vld [vmem:[%s9] sm:$0x1]
    %v4386 = vrsqrt.pop %v4384
    %v4387 = vmul.f32 %v4370, %v4386
    %v4389 = vlaneseq
    %v4390 = vshrl.u32 %v4389, 7
    %v4391 = vsub.s32 0, %v4390
    %v4392 = vrot.slane %v4385, %v4391
    %v4394 = vmul.f32 %v4392, %v4387
    %v4395 = vld [vmem:[%s10] sm:$0x1]
    %v4397 = vlaneseq
    %v4398 = vshrl.u32 %v4397, 7
    %v4399 = vsub.s32 0, %v4398
    %v4400 = vrot.slane %v4395, %v4399
    %v4402 = vadd.f32 %v4394, %v4400
    %v4403 = vmax.f32 %v4402, 0.0
    %v4405 = vrot.slane %v4403, 1
    %v4407 = vmax.f32 %v4403, %v4405
    %4409 = vrot.lane.b32.xlu0 %v4407, 116
    %v4410 = vpop.permute.xlu0 %4409
    %v4412 = vmax.f32 %v4407, %v4410
    %v4414 = vrot.slane %v4412, 2
    %4415 = vrot.lane.b32.xlu0 %v4414, 60
    %v4416 = vpop.permute.xlu0 %4415
    %v4418 = vrot.slane %v4412, 4
    %4419 = vrot.lane.b32.xlu0 %v4418, 120
    %v4420 = vpop.permute.xlu0 %4419
    %vm4422 = vcmask 490496
    %v4423 = vsel %vm4422, %v4412, %v4416
    %vm4424 = vcmask 982016
    %v4425 = vsel %vm4424, %v4423, %v4420
    %v4426 = vld [vmem:[%s11] sm:$0xff]
    %v4427 = vld [vmem:[%s11 + $0x8] sm:$0xff]
    %v4428 = vld [vmem:[%s11 + $0x10] sm:$0xff]
    %v4429 = vld [vmem:[%s11 + $0x18] sm:$0xff]
    %v4430 = vld [vmem:[%s11 + $0x20] sm:$0xff]
    %v4431 = vld [vmem:[%s11 + $0x28] sm:$0xff]
    %v4432 = vld [vmem:[%s11 + $0x30] sm:$0xff]
    %v4433 = vld [vmem:[%s11 + $0x38] sm:$0xff]
    %v4434 = vld [vmem:[%s11 + $0x40] sm:$0xff]
    %v4435 = vld [vmem:[%s11 + $0x48] sm:$0xff]
    %v4436 = vld [vmem:[%s11 + $0x50] sm:$0xff]
    %v4437 = vld [vmem:[%s11 + $0x58] sm:$0xff]
    %v4438 = vld [vmem:[%s11 + $0x60] sm:$0xff]
    %v4439 = vld [vmem:[%s11 + $0x68] sm:$0xff]
    %v4440 = vld [vmem:[%s11 + $0x70] sm:$0xff]
    %v4441 = vld [vmem:[%s11 + $0x78] sm:$0xff]
    %v4442 = vld [vmem:[%s11 + $0x80] sm:$0xff]
    %v4443 = vld [vmem:[%s11 + $0x88] sm:$0xff]
    %v4444 = vld [vmem:[%s11 + $0x90] sm:$0xff]
    %v4445 = vld [vmem:[%s11 + $0x98] sm:$0xff]
    %v4446 = vld [vmem:[%s11 + $0xa0] sm:$0xff]
    %v4447 = vld [vmem:[%s11 + $0xa8] sm:$0xff]
    %v4448 = vld [vmem:[%s11 + $0xb0] sm:$0xff]
    %v4449 = vld [vmem:[%s11 + $0xb8] sm:$0xff]
    %v4450 = vld [vmem:[%s11 + $0xc0] sm:$0xff]
    %v4451 = vld [vmem:[%s11 + $0xc8] sm:$0xff]
    %v4452 = vld [vmem:[%s11 + $0xd0] sm:$0xff]
    %v4453 = vld [vmem:[%s11 + $0xd8] sm:$0xff]
    %v4454 = vld [vmem:[%s11 + $0xe0] sm:$0xff]
    %v4455 = vld [vmem:[%s11 + $0xe8] sm:$0xff]
    %v4456 = vld [vmem:[%s11 + $0xf0] sm:$0xff]
    %v4457 = vld [vmem:[%s11 + $0xf8] sm:$0xff]
    %v4458 = vld [vmem:[%s11 + $0x100] sm:$0xff]
    %v4459 = vld [vmem:[%s11 + $0x108] sm:$0xff]
    %v4460 = vld [vmem:[%s11 + $0x110] sm:$0xff]
    %v4461 = vld [vmem:[%s11 + $0x118] sm:$0xff]
    %v4462 = vld [vmem:[%s11 + $0x120] sm:$0xff]
    %v4463 = vld [vmem:[%s11 + $0x128] sm:$0xff]
    %v4464 = vld [vmem:[%s11 + $0x130] sm:$0xff]
    %v4465 = vld [vmem:[%s11 + $0x138] sm:$0xff]
    %v4466 = vld [vmem:[%s11 + $0x140] sm:$0xff]
    %v4467 = vld [vmem:[%s11 + $0x148] sm:$0xff]
    %v4468 = vld [vmem:[%s11 + $0x150] sm:$0xff]
    %v4469 = vld [vmem:[%s11 + $0x158] sm:$0xff]
    %v4470 = vld [vmem:[%s11 + $0x160] sm:$0xf]
    %v4471 = vld [vmem:[%s11 + $0x168] sm:$0xf]
    %v4472 = vld [vmem:[%s12] sm:$0x3]
    %v4474 = vlaneseq
    %v4475 = vshrl.u32 %v4474, 7
    %v4476 = vsub.s32 0, %v4475
    %v4477 = vrot.slane %v4472, %v4476
    %v4478 = vlaneseq
    %v4479 = vshrl.u32 %v4478, 7
    %v4480 = vsub.s32 1, %v4479
    %v4481 = vrot.slane %v4472, %v4480
    %vm4484 = vcmask 424960
    %v4485 = vsel %vm4484, %v4420, 0
    %v4488 = vsel %vm3551, %v4470, 0
    %v4491 = vsel %vm3551, %v4471, 0
    %4493 = vmatprep.subr.mxu0 %v4427
    %4494 = vmatpush1.msra.mxu0 %v4426
    %4495 = vmatprep.subr.mxu0 %v4429
    %4496 = vmatpush1.msra.mxu0 %v4428
    %4497 = vmatprep.subr.mxu0 %v4431
    %4498 = vmatpush1.msra.mxu0 %v4430
    %4499 = vmatprep.subr.mxu0 %v4433
    %4500 = vmatpush1.msra.mxu0 %v4432
    %4501 = vmatprep.subr.mxu0 %v4435
    %4502 = vmatpush1.msra.mxu0 %v4434
    %4503 = vmatprep.subr.mxu0 %v4437
    %4504 = vmatpush1.msra.mxu0 %v4436
    %4505 = vmatprep.subr.mxu0 %v4439
    %4506 = vmatpush1.msra.mxu0 %v4438
    %4507 = vmatprep.subr.mxu0 %v4441
    %4508 = vmatpush1.msra.mxu0 %v4440
    %4509 = vmatprep.subr.mxu0 %v4443
    %4510 = vmatpush1.msra.mxu0 %v4442
    %4511 = vmatprep.subr.mxu0 %v4445
    %4512 = vmatpush1.msra.mxu0 %v4444
    %4513 = vmatprep.subr.mxu0 %v4447
    %4514 = vmatpush1.msra.mxu0 %v4446
    %4515 = vmatprep.subr.mxu0 %v4449
    %4516 = vmatpush1.msra.mxu0 %v4448
    %4517 = vmatprep.subr.mxu0 %v4451
    %4518 = vmatpush1.msra.mxu0 %v4450
    %4519 = vmatprep.subr.mxu0 %v4453
    %4520 = vmatpush1.msra.mxu0 %v4452
    %4521 = vmatprep.subr.mxu0 %v4455
    %4522 = vmatpush1.msra.mxu0 %v4454
    %4523 = vmatprep.subr.mxu0 %v4457
    %4524 = vmatpush1.msra.mxu0 %v4456
    %4525 = vmatprep.subr.mxu0 %v4459
    %4526 = vmatpush1.msra.mxu0 %v4458
    %4527 = vmatprep.subr.mxu0 %v4461
    %4528 = vmatpush1.msra.mxu0 %v4460
    %4529 = vmatprep.subr.mxu0 %v4463
    %4530 = vmatpush1.msra.mxu0 %v4462
    %4531 = vmatprep.subr.mxu0 %v4465
    %4532 = vmatpush1.msra.mxu0 %v4464
    %4533 = vmatprep.subr.mxu0 %v4467
    %4534 = vmatpush1.msra.mxu0 %v4466
    %4535 = vmatprep.subr.mxu0 %v4469
    %4536 = vmatpush1.msra.mxu0 %v4468
    %4537 = vmatprep.subr.mxu0 %v4491
    %4538 = vmatpush1.msra.mxu0 %v4488
    %4539 = vmatprep.subr.mxu0 0.0
    %4540 = vmatpush1.msra.mxu0 0.0
    %4541 = vmatprep.subr.mxu0 0.0
    %4542 = vmatpush1.msra.mxu0 0.0
    %4543 = vmatprep.subr.mxu0 0.0
    %4544 = vmatpush1.msra.mxu0 0.0
    %4545 = vmatprep.subr.mxu0 0.0
    %4546 = vmatpush1.msra.mxu0 0.0
    %4547 = vmatprep.subr.mxu0 0.0
    %4548 = vmatpush1.msra.mxu0 0.0
    %4549 = vmatprep.subr.mxu0 0.0
    %4550 = vmatpush1.msra.mxu0 0.0
    %4551 = vmatprep.subr.mxu0 0.0
    %4552 = vmatpush1.msra.mxu0 0.0
    %4553 = vmatprep.subr.mxu0 0.0
    %4554 = vmatpush1.msra.mxu0 0.0
    %4555 = vmatprep.subr.mxu0 0.0
    %4556 = vmatpush1.msra.mxu0 0.0
    %4557 = vmatprep.mubr.f32.mxu0 %v4485
    %4558 = vmatmul.mubr.f32.gmra.mrb[0].mxu0 %v4425
    %v4559 = vpop.f32.mrb[0].mxu0
    %v4560 = vadd.f32 %v4477, %v4559
    %v4561 = vpop.f32.mrb[0].mxu0
    %v4562 = vadd.f32 %v4481, %v4561
    %4563 = vdwg.mxu0
    %v4564 = vmax.f32 %v4560, 0.0
    %v4565 = vmax.f32 %v4562, 0.0
    %v4566 = vadd.f32 %v3240, %v3254
    %v4567 = vadd.f32 %v3241, %v3258
    %v4568 = vadd.f32 %v3242, %v3262
    %v4569 = vadd.f32 %v3243, %v3254
    %v4570 = vadd.f32 %v3244, %v3258
    %v4571 = vadd.f32 %v3245, %v3262
    %v4572 = vadd.f32 %v3246, %v3254
    %v4573 = vadd.f32 %v3247, %v3258
    %v4574 = vadd.f32 %v3248, %v3262
    %v4575 = vadd.f32 %v4566, %v4567
    %v4576 = vsel %vm3276, %v4568, 0.0
    %v4577 = vadd.f32 %v4575, %v4576
    %v4578 = vadd.f32 %v4577, %v4569
    %v4579 = vadd.f32 %v4578, %v4570
    %v4580 = vsel %vm3276, %v4571, 0.0
    %v4581 = vadd.f32 %v4579, %v4580
    %v4582 = vadd.f32 %v4581, %v4572
    %v4583 = vadd.f32 %v4582, %v4573
    %v4584 = vsel %vm3276, %v4574, 0.0
    %v4585 = vadd.f32 %v4583, %v4584
    %4586 = vadd.xlane.f32.xlu0 %v4585
    %v4587 = vpop.xlane.xlu0 %4586
    %v4588 = vrot.slane %v4587, 4
    %v4589 = vadd.f32 %v4587, %v4588
    %v4590 = vrot.slane %v4589, 2
    %v4591 = vadd.f32 %v4589, %v4590
    %v4592 = vrot.slane %v4591, 1
    %v4593 = vadd.f32 %v4591, %v4592
    %s4594 = vtos %v4593
    %v4595 = vstv %s4594
    %v4596 = vmul.f32 %v4595, %v3297
    %v4597 = vsub.f32 %v4566, %v4596
    %v4598 = vsub.f32 %v4567, %v4596
    %v4599 = vsub.f32 %v4568, %v4596
    %v4600 = vsub.f32 %v4569, %v4596
    %v4601 = vsub.f32 %v4570, %v4596
    %v4602 = vsub.f32 %v4571, %v4596
    %v4603 = vsub.f32 %v4572, %v4596
    %v4604 = vsub.f32 %v4573, %v4596
    %v4605 = vsub.f32 %v4574, %v4596
    %v4606 = vmul.f32 %v4597, %v4597
    %v4607 = vmul.f32 %v4598, %v4598
    %v4608 = vmul.f32 %v4599, %v4599
    %v4609 = vmul.f32 %v4600, %v4600
    %v4610 = vmul.f32 %v4601, %v4601
    %v4611 = vmul.f32 %v4602, %v4602
    %v4612 = vmul.f32 %v4603, %v4603
    %v4613 = vmul.f32 %v4604, %v4604
    %v4614 = vmul.f32 %v4605, %v4605
    %v4615 = vadd.f32 %v4606, %v4607
    %v4616 = vsel %vm3276, %v4608, 0.0
    %v4617 = vadd.f32 %v4615, %v4616
    %v4618 = vadd.f32 %v4617, %v4609
    %v4619 = vadd.f32 %v4618, %v4610
    %v4620 = vsel %vm3276, %v4611, 0.0
    %v4621 = vadd.f32 %v4619, %v4620
    %v4622 = vadd.f32 %v4621, %v4612
    %v4623 = vadd.f32 %v4622, %v4613
    %v4624 = vsel %vm3276, %v4614, 0.0
    %v4625 = vadd.f32 %v4623, %v4624
    %4626 = vadd.xlane.f32.xlu0 %v4625
    %v4627 = vpop.xlane.xlu0 %4626
    %v4628 = vrot.slane %v4627, 4
    %v4629 = vadd.f32 %v4627, %v4628
    %v4630 = vrot.slane %v4629, 2
    %v4631 = vadd.f32 %v4629, %v4630
    %v4632 = vrot.slane %v4631, 1
    %v4633 = vadd.f32 %v4631, %v4632
    %s4634 = vtos %v4633
    %v4635 = vstv %s4634
    %v4636 = vmul.f32 %v4635, %v3338
    %v4637 = vrsqrt.pop %v4636
    %v4638 = vmul.f32 %v4597, %v4637
    %v4639 = vmul.f32 %v4598, %v4637
    %v4640 = vmul.f32 %v4599, %v4637
    %v4641 = vmul.f32 %v4600, %v4637
    %v4642 = vmul.f32 %v4601, %v4637
    %v4643 = vmul.f32 %v4602, %v4637
    %v4644 = vmul.f32 %v4603, %v4637
    %v4645 = vmul.f32 %v4604, %v4637
    %v4646 = vmul.f32 %v4605, %v4637
    %v4647 = vmul.f32 %v3355, %v4638
    %v4648 = vmul.f32 %v3359, %v4639
    %v4649 = vmul.f32 %v3363, %v4640
    %v4650 = vmul.f32 %v3355, %v4641
    %v4651 = vmul.f32 %v3359, %v4642
    %v4652 = vmul.f32 %v3363, %v4643
    %v4653 = vmul.f32 %v3355, %v4644
    %v4654 = vmul.f32 %v3359, %v4645
    %v4655 = vmul.f32 %v3363, %v4646
    %v4656 = vadd.f32 %v4647, %v3381
    %v4657 = vadd.f32 %v4648, %v3385
    %v4658 = vadd.f32 %v4649, %v3389
    %v4659 = vadd.f32 %v4650, %v3381
    %v4660 = vadd.f32 %v4651, %v3385
    %v4661 = vadd.f32 %v4652, %v3389
    %v4662 = vadd.f32 %v4653, %v3381
    %v4663 = vadd.f32 %v4654, %v3385
    %v4664 = vadd.f32 %v4655, %v3389
    %v4665 = vmax.f32 %v4656, 0.0
    %v4666 = vmax.f32 %v4657, 0.0
    %v4667 = vmax.f32 %v4658, 0.0
    %v4668 = vmax.f32 %v4659, 0.0
    %v4669 = vmax.f32 %v4660, 0.0
    %v4670 = vmax.f32 %v4661, 0.0
    %v4671 = vmax.f32 %v4662, 0.0
    %v4672 = vmax.f32 %v4663, 0.0
    %v4673 = vmax.f32 %v4664, 0.0
    %v4683 = vrot.slane %v4665, 1
    %v4684 = vrot.slane %v4668, 1
    %v4685 = vsel %vm3420, %v4683, %v4684
    %v4686 = vrot.slane %v4666, 1
    %v4687 = vrot.slane %v4669, 1
    %v4688 = vsel %vm3420, %v4686, %v4687
    %v4689 = vrot.slane %v4667, 1
    %v4690 = vrot.slane %v4670, 1
    %v4691 = vsel %vm3420, %v4689, %v4690
    %v4692 = vrot.slane %v4671, 1
    %v4693 = vsel %vm3420, %v4684, %v4692
    %v4694 = vrot.slane %v4672, 1
    %v4695 = vsel %vm3420, %v4687, %v4694
    %v4696 = vrot.slane %v4673, 1
    %v4697 = vsel %vm3420, %v4690, %v4696
    %v4707 = vmax.f32 %v4665, %v4685
    %v4708 = vmax.f32 %v4666, %v4688
    %v4709 = vmax.f32 %v4667, %v4691
    %v4710 = vmax.f32 %v4668, %v4693
    %v4711 = vmax.f32 %v4669, %v4695
    %v4712 = vmax.f32 %v4670, %v4697
    %v4713 = vmax.f32 %v4671, %v4692
    %v4714 = vmax.f32 %v4672, %v4694
    %v4715 = vmax.f32 %v4673, %v4696
    %4725 = vrot.lane.b32.xlu0 %v4707, 116
    %v4726 = vpop.permute.xlu0 %4725
    %4727 = vrot.lane.b32.xlu0 %v4708, 116
    %v4728 = vpop.permute.xlu0 %4727
    %4729 = vrot.lane.b32.xlu0 %v4709, 116
    %v4730 = vpop.permute.xlu0 %4729
    %4731 = vrot.lane.b32.xlu0 %v4710, 116
    %v4732 = vpop.permute.xlu0 %4731
    %4733 = vrot.lane.b32.xlu0 %v4711, 116
    %v4734 = vpop.permute.xlu0 %4733
    %4735 = vrot.lane.b32.xlu0 %v4712, 116
    %v4736 = vpop.permute.xlu0 %4735
    %4737 = vrot.lane.b32.xlu0 %v4713, 116
    %v4738 = vpop.permute.xlu0 %4737
    %4739 = vrot.lane.b32.xlu0 %v4714, 116
    %v4740 = vpop.permute.xlu0 %4739
    %4741 = vrot.lane.b32.xlu0 %v4715, 116
    %v4742 = vpop.permute.xlu0 %4741
    %v4743 = vsel %vm3481, %v4726, %v4728
    %v4744 = vsel %vm3481, %v4728, %v4730
    %v4745 = vsel %vm3481, %v4732, %v4734
    %v4746 = vsel %vm3481, %v4734, %v4736
    %v4747 = vsel %vm3481, %v4738, %v4740
    %v4748 = vsel %vm3481, %v4740, %v4742
    %v4758 = vmax.f32 %v4707, %v4743
    %v4759 = vmax.f32 %v4708, %v4744
    %v4760 = vmax.f32 %v4709, %v4730
    %v4761 = vmax.f32 %v4710, %v4745
    %v4762 = vmax.f32 %v4711, %v4746
    %v4763 = vmax.f32 %v4712, %v4736
    %v4764 = vmax.f32 %v4713, %v4747
    %v4765 = vmax.f32 %v4714, %v4748
    %v4766 = vmax.f32 %v4715, %v4742
    %v4768 = vsel %vm3541, %v4760, 0
    %v4771 = vsel %vm3541, %v4763, 0
    %v4774 = vsel %vm3541, %v4766, 0
    %4776 = vmatprep.subr.mxu0 0.0
    %4777 = vmatpush1.msra.mxu0 %v3506
    %4778 = vmatprep.subr.mxu0 0.0
    %4779 = vmatpush1.msra.mxu0 %v3507
    %4780 = vmatprep.subr.mxu0 0.0
    %4781 = vmatpush1.msra.mxu0 %v3508
    %4782 = vmatprep.subr.mxu0 0.0
    %4783 = vmatpush1.msra.mxu0 %v3509
    %4784 = vmatprep.subr.mxu0 0.0
    %4785 = vmatpush1.msra.mxu0 %v3510
    %4786 = vmatprep.subr.mxu0 0.0
    %4787 = vmatpush1.msra.mxu0 %v3511
    %4788 = vmatprep.subr.mxu0 0.0
    %4789 = vmatpush1.msra.mxu0 %v3512
    %4790 = vmatprep.subr.mxu0 0.0
    %4791 = vmatpush1.msra.mxu0 %v3513
    %4792 = vmatprep.subr.mxu0 0.0
    %4793 = vmatpush1.msra.mxu0 %v3514
    %4794 = vmatprep.subr.mxu0 0.0
    %4795 = vmatpush1.msra.mxu0 %v3515
    %4796 = vmatprep.subr.mxu0 0.0
    %4797 = vmatpush1.msra.mxu0 %v3516
    %4798 = vmatprep.subr.mxu0 0.0
    %4799 = vmatpush1.msra.mxu0 %v3517
    %4800 = vmatprep.subr.mxu0 0.0
    %4801 = vmatpush1.msra.mxu0 %v3518
    %4802 = vmatprep.subr.mxu0 0.0
    %4803 = vmatpush1.msra.mxu0 %v3519
    %4804 = vmatprep.subr.mxu0 0.0
    %4805 = vmatpush1.msra.mxu0 %v3520
    %4806 = vmatprep.subr.mxu0 0.0
    %4807 = vmatpush1.msra.mxu0 %v3521
    %4808 = vmatprep.subr.mxu0 0.0
    %4809 = vmatpush1.msra.mxu0 %v3522
    %4810 = vmatprep.subr.mxu0 0.0
    %4811 = vmatpush1.msra.mxu0 %v3523
    %4812 = vmatprep.subr.mxu0 0.0
    %4813 = vmatpush1.msra.mxu0 %v3524
    %4814 = vmatprep.subr.mxu0 0.0
    %4815 = vmatpush1.msra.mxu0 %v3525
    %4816 = vmatprep.subr.mxu0 0.0
    %4817 = vmatpush1.msra.mxu0 %v3526
    %4818 = vmatprep.subr.mxu0 0.0
    %4819 = vmatpush1.msra.mxu0 %v3527
    %4820 = vmatprep.subr.mxu0 0.0
    %4821 = vmatpush1.msra.mxu0 %v3528
    %4822 = vmatprep.subr.mxu0 0.0
    %4823 = vmatpush1.msra.mxu0 %v3529
    %4824 = vmatprep.subr.mxu0 0.0
    %4825 = vmatpush1.msra.mxu0 %v3530
    %4826 = vmatprep.subr.mxu0 0.0
    %4827 = vmatpush1.msra.mxu0 %v3531
    %4828 = vmatprep.subr.mxu0 0.0
    %4829 = vmatpush1.msra.mxu0 %v3532
    %4830 = vmatprep.subr.mxu0 0.0
    %4831 = vmatpush1.msra.mxu0 %v3533
    %4832 = vmatprep.subr.mxu0 0.0
    %4833 = vmatpush1.msra.mxu0 %v3534
    %4834 = vmatprep.subr.mxu0 0.0
    %4835 = vmatpush1.msra.mxu0 %v3535
    %4836 = vmatprep.subr.mxu0 0.0
    %4837 = vmatpush1.msra.mxu0 %v3536
    %4838 = vmatprep.subr.mxu0 0.0
    %4839 = vmatpush1.msra.mxu0 %v3537
    %4840 = vmatprep.mubr.f32.mxu0 %v4759
    %4841 = vmatmul.mubr.f32.gmra.mrb[0].mxu0 %v4758
    %v4842 = vpop.f32.mrb[0].mxu0
    %v4843 = vadd.f32 0.0, %v4842
    %v4844 = vpop.f32.mrb[0].mxu0
    %4845 = vmatprep.mubr.f32.mxu0 %v4762
    %4846 = vmatmul.mubr.f32.gmra.mrb[0].mxu0 %v4761
    %v4847 = vpop.f32.mrb[0].mxu0
    %v4848 = vadd.f32 0.0, %v4847
    %v4849 = vpop.f32.mrb[0].mxu0
    %4850 = vmatprep.mubr.f32.mxu0 %v4765
    %4851 = vmatmul.mubr.f32.gmra.mrb[0].mxu0 %v4764
    %v4852 = vpop.f32.mrb[0].mxu0
    %v4853 = vadd.f32 0.0, %v4852
    %v4854 = vpop.f32.mrb[0].mxu0
    %4855 = vdwg.mxu0
    %4856 = vmatprep.subr.mxu0 0.0
    %4857 = vmatpush1.msra.mxu0 %v3538
    %4858 = vmatprep.subr.mxu0 0.0
    %4859 = vmatpush1.msra.mxu0 %v3539
    %4860 = vmatprep.subr.mxu0 0.0
    %4861 = vmatpush1.msra.mxu0 %v3553
    %4862 = vmatprep.subr.mxu0 0.0
    %4863 = vmatpush1.msra.mxu0 0.0
    %4864 = vmatprep.subr.mxu0 0.0
    %4865 = vmatpush1.msra.mxu0 0.0
    %4866 = vmatprep.subr.mxu0 0.0
    %4867 = vmatpush1.msra.mxu0 0.0
    %4868 = vmatprep.subr.mxu0 0.0
    %4869 = vmatpush1.msra.mxu0 0.0
    %4870 = vmatprep.subr.mxu0 0.0
    %4871 = vmatpush1.msra.mxu0 0.0
    %4872 = vmatprep.subr.mxu0 0.0
    %4873 = vmatpush1.msra.mxu0 0.0
    %4874 = vmatprep.subr.mxu0 0.0
    %4875 = vmatpush1.msra.mxu0 0.0
    %4876 = vmatprep.subr.mxu0 0.0
    %4877 = vmatpush1.msra.mxu0 0.0
    %4878 = vmatprep.subr.mxu0 0.0
    %4879 = vmatpush1.msra.mxu0 0.0
    %4880 = vmatprep.subr.mxu0 0.0
    %4881 = vmatpush1.msra.mxu0 0.0
    %4882 = vmatprep.subr.mxu0 0.0
    %4883 = vmatpush1.msra.mxu0 0.0
    %4884 = vmatprep.subr.mxu0 0.0
    %4885 = vmatpush1.msra.mxu0 0.0
    %4886 = vmatprep.subr.mxu0 0.0
    %4887 = vmatpush1.msra.mxu0 0.0
    %4888 = vmatprep.subr.mxu0 0.0
    %4889 = vmatpush1.msra.mxu0 0.0
    %4890 = vmatprep.subr.mxu0 0.0
    %4891 = vmatpush1.msra.mxu0 0.0
    %4892 = vmatprep.subr.mxu0 0.0
    %4893 = vmatpush1.msra.mxu0 0.0
    %4894 = vmatprep.subr.mxu0 0.0
    %4895 = vmatpush1.msra.mxu0 0.0
    %4896 = vmatprep.subr.mxu0 0.0
    %4897 = vmatpush1.msra.mxu0 0.0
    %4898 = vmatprep.subr.mxu0 0.0
    %4899 = vmatpush1.msra.mxu0 0.0
    %4900 = vmatprep.subr.mxu0 0.0
    %4901 = vmatpush1.msra.mxu0 0.0
    %4902 = vmatprep.subr.mxu0 0.0
    %4903 = vmatpush1.msra.mxu0 0.0
    %4904 = vmatprep.subr.mxu0 0.0
    %4905 = vmatpush1.msra.mxu0 0.0
    %4906 = vmatprep.subr.mxu0 0.0
    %4907 = vmatpush1.msra.mxu0 0.0
    %4908 = vmatprep.subr.mxu0 0.0
    %4909 = vmatpush1.msra.mxu0 0.0
    %4910 = vmatprep.subr.mxu0 0.0
    %4911 = vmatpush1.msra.mxu0 0.0
    %4912 = vmatprep.subr.mxu0 0.0
    %4913 = vmatpush1.msra.mxu0 0.0
    %4914 = vmatprep.subr.mxu0 0.0
    %4915 = vmatpush1.msra.mxu0 0.0
    %4916 = vmatprep.subr.mxu0 0.0
    %4917 = vmatpush1.msra.mxu0 0.0
    %4918 = vmatprep.subr.mxu0 0.0
    %4919 = vmatpush1.msra.mxu0 0.0
    %4920 = vmatprep.mubr.f32.mxu0 0.0
    %4921 = vmatmul.mubr.f32.gmra.mrb[0].mxu0 %v4768
    %v4922 = vpop.f32.mrb[0].mxu0
    %v4923 = vadd.f32 %v4843, %v4922
    %v4924 = vpop.f32.mrb[0].mxu0
    %4925 = vmatprep.mubr.f32.mxu0 0.0
    %4926 = vmatmul.mubr.f32.gmra.mrb[0].mxu0 %v4771
    %v4927 = vpop.f32.mrb[0].mxu0
    %v4928 = vadd.f32 %v4848, %v4927
    %v4929 = vpop.f32.mrb[0].mxu0
    %4930 = vmatprep.mubr.f32.mxu0 0.0
    %4931 = vmatmul.mubr.f32.gmra.mrb[0].mxu0 %v4774
    %v4932 = vpop.f32.mrb[0].mxu0
    %v4933 = vadd.f32 %v4853, %v4932
    %v4934 = vpop.f32.mrb[0].mxu0
    %4935 = vdwg.mxu0
    %4936 = vmatprep.subr.mxu0 0.0
    %4937 = vmatpush1.msra.mxu0 %v3717
    %4938 = vmatprep.subr.mxu0 0.0
    %4939 = vmatpush1.msra.mxu0 %v3718
    %4940 = vmatprep.subr.mxu0 0.0
    %4941 = vmatpush1.msra.mxu0 %v3719
    %4942 = vmatprep.subr.mxu0 0.0
    %4943 = vmatpush1.msra.mxu0 %v3720
    %4944 = vmatprep.subr.mxu0 0.0
    %4945 = vmatpush1.msra.mxu0 %v3721
    %4946 = vmatprep.subr.mxu0 0.0
    %4947 = vmatpush1.msra.mxu0 %v3722
    %4948 = vmatprep.subr.mxu0 0.0
    %4949 = vmatpush1.msra.mxu0 %v3723
    %4950 = vmatprep.subr.mxu0 0.0
    %4951 = vmatpush1.msra.mxu0 %v3724
    %4952 = vmatprep.subr.mxu0 0.0
    %4953 = vmatpush1.msra.mxu0 %v3725
    %4954 = vmatprep.subr.mxu0 0.0
    %4955 = vmatpush1.msra.mxu0 %v3726
    %4956 = vmatprep.subr.mxu0 0.0
    %4957 = vmatpush1.msra.mxu0 %v3727
    %4958 = vmatprep.subr.mxu0 0.0
    %4959 = vmatpush1.msra.mxu0 %v3728
    %4960 = vmatprep.subr.mxu0 0.0
    %4961 = vmatpush1.msra.mxu0 %v3729
    %4962 = vmatprep.subr.mxu0 0.0
    %4963 = vmatpush1.msra.mxu0 %v3730
    %4964 = vmatprep.subr.mxu0 0.0
    %4965 = vmatpush1.msra.mxu0 %v3731
    %4966 = vmatprep.subr.mxu0 0.0
    %4967 = vmatpush1.msra.mxu0 %v3732
    %4968 = vmatprep.subr.mxu0 0.0
    %4969 = vmatpush1.msra.mxu0 %v3733
    %4970 = vmatprep.subr.mxu0 0.0
    %4971 = vmatpush1.msra.mxu0 %v3734
    %4972 = vmatprep.subr.mxu0 0.0
    %4973 = vmatpush1.msra.mxu0 %v3735
    %4974 = vmatprep.subr.mxu0 0.0
    %4975 = vmatpush1.msra.mxu0 %v3736
    %4976 = vmatprep.subr.mxu0 0.0
    %4977 = vmatpush1.msra.mxu0 %v3737
    %4978 = vmatprep.subr.mxu0 0.0
    %4979 = vmatpush1.msra.mxu0 %v3738
    %4980 = vmatprep.subr.mxu0 0.0
    %4981 = vmatpush1.msra.mxu0 %v3739
    %4982 = vmatprep.subr.mxu0 0.0
    %4983 = vmatpush1.msra.mxu0 %v3740
    %4984 = vmatprep.subr.mxu0 0.0
    %4985 = vmatpush1.msra.mxu0 %v3741
    %4986 = vmatprep.subr.mxu0 0.0
    %4987 = vmatpush1.msra.mxu0 %v3742
    %4988 = vmatprep.subr.mxu0 0.0
    %4989 = vmatpush1.msra.mxu0 %v3743
    %4990 = vmatprep.subr.mxu0 0.0
    %4991 = vmatpush1.msra.mxu0 %v3744
    %4992 = vmatprep.subr.mxu0 0.0
    %4993 = vmatpush1.msra.mxu0 %v3745
    %4994 = vmatprep.subr.mxu0 0.0
    %4995 = vmatpush1.msra.mxu0 %v3746
    %4996 = vmatprep.subr.mxu0 0.0
    %4997 = vmatpush1.msra.mxu0 %v3747
    %4998 = vmatprep.subr.mxu0 0.0
    %4999 = vmatpush1.msra.mxu0 %v3748
    %5000 = vmatprep.mubr.f32.mxu0 %v4759
    %5001 = vmatmul.mubr.f32.gmra.mrb[0].mxu0 %v4758
    %v5002 = vpop.f32.mrb[0].mxu0
    %v5003 = vadd.f32 0.0, %v5002
    %v5004 = vpop.f32.mrb[0].mxu0
    %5005 = vmatprep.mubr.f32.mxu0 %v4762
    %5006 = vmatmul.mubr.f32.gmra.mrb[0].mxu0 %v4761
    %v5007 = vpop.f32.mrb[0].mxu0
    %v5008 = vadd.f32 0.0, %v5007
    %v5009 = vpop.f32.mrb[0].mxu0
    %5010 = vmatprep.mubr.f32.mxu0 %v4765
    %5011 = vmatmul.mubr.f32.gmra.mrb[0].mxu0 %v4764
    %v5012 = vpop.f32.mrb[0].mxu0
    %v5013 = vadd.f32 0.0, %v5012
    %v5014 = vpop.f32.mrb[0].mxu0
    %5015 = vdwg.mxu0
    %5016 = vmatprep.subr.mxu0 0.0
    %5017 = vmatpush1.msra.mxu0 %v3749
    %5018 = vmatprep.subr.mxu0 0.0
    %5019 = vmatpush1.msra.mxu0 %v3750
    %5020 = vmatprep.subr.mxu0 0.0
    %5021 = vmatpush1.msra.mxu0 %v3753
    %5022 = vmatprep.subr.mxu0 0.0
    %5023 = vmatpush1.msra.mxu0 0.0
    %5024 = vmatprep.subr.mxu0 0.0
    %5025 = vmatpush1.msra.mxu0 0.0
    %5026 = vmatprep.subr.mxu0 0.0
    %5027 = vmatpush1.msra.mxu0 0.0
    %5028 = vmatprep.subr.mxu0 0.0
    %5029 = vmatpush1.msra.mxu0 0.0
    %5030 = vmatprep.subr.mxu0 0.0
    %5031 = vmatpush1.msra.mxu0 0.0
    %5032 = vmatprep.subr.mxu0 0.0
    %5033 = vmatpush1.msra.mxu0 0.0
    %5034 = vmatprep.subr.mxu0 0.0
    %5035 = vmatpush1.msra.mxu0 0.0
    %5036 = vmatprep.subr.mxu0 0.0
    %5037 = vmatpush1.msra.mxu0 0.0
    %5038 = vmatprep.subr.mxu0 0.0
    %5039 = vmatpush1.msra.mxu0 0.0
    %5040 = vmatprep.subr.mxu0 0.0
    %5041 = vmatpush1.msra.mxu0 0.0
    %5042 = vmatprep.subr.mxu0 0.0
    %5043 = vmatpush1.msra.mxu0 0.0
    %5044 = vmatprep.subr.mxu0 0.0
    %5045 = vmatpush1.msra.mxu0 0.0
    %5046 = vmatprep.subr.mxu0 0.0
    %5047 = vmatpush1.msra.mxu0 0.0
    %5048 = vmatprep.subr.mxu0 0.0
    %5049 = vmatpush1.msra.mxu0 0.0
    %5050 = vmatprep.subr.mxu0 0.0
    %5051 = vmatpush1.msra.mxu0 0.0
    %5052 = vmatprep.subr.mxu0 0.0
    %5053 = vmatpush1.msra.mxu0 0.0
    %5054 = vmatprep.subr.mxu0 0.0
    %5055 = vmatpush1.msra.mxu0 0.0
    %5056 = vmatprep.subr.mxu0 0.0
    %5057 = vmatpush1.msra.mxu0 0.0
    %5058 = vmatprep.subr.mxu0 0.0
    %5059 = vmatpush1.msra.mxu0 0.0
    %5060 = vmatprep.subr.mxu0 0.0
    %5061 = vmatpush1.msra.mxu0 0.0
    %5062 = vmatprep.subr.mxu0 0.0
    %5063 = vmatpush1.msra.mxu0 0.0
    %5064 = vmatprep.subr.mxu0 0.0
    %5065 = vmatpush1.msra.mxu0 0.0
    %5066 = vmatprep.subr.mxu0 0.0
    %5067 = vmatpush1.msra.mxu0 0.0
    %5068 = vmatprep.subr.mxu0 0.0
    %5069 = vmatpush1.msra.mxu0 0.0
    %5070 = vmatprep.subr.mxu0 0.0
    %5071 = vmatpush1.msra.mxu0 0.0
    %5072 = vmatprep.subr.mxu0 0.0
    %5073 = vmatpush1.msra.mxu0 0.0
    %5074 = vmatprep.subr.mxu0 0.0
    %5075 = vmatpush1.msra.mxu0 0.0
    %5076 = vmatprep.subr.mxu0 0.0
    %5077 = vmatpush1.msra.mxu0 0.0
    %5078 = vmatprep.subr.mxu0 0.0
    %5079 = vmatpush1.msra.mxu0 0.0
    %5080 = vmatprep.mubr.f32.mxu0 0.0
    %5081 = vmatmul.mubr.f32.gmra.mrb[0].mxu0 %v4768
    %v5082 = vpop.f32.mrb[0].mxu0
    %v5083 = vadd.f32 %v5003, %v5082
    %v5084 = vpop.f32.mrb[0].mxu0
    %5085 = vmatprep.mubr.f32.mxu0 0.0
    %5086 = vmatmul.mubr.f32.gmra.mrb[0].mxu0 %v4771
    %v5087 = vpop.f32.mrb[0].mxu0
    %v5088 = vadd.f32 %v5008, %v5087
    %v5089 = vpop.f32.mrb[0].mxu0
    %5090 = vmatprep.mubr.f32.mxu0 0.0
    %5091 = vmatmul.mubr.f32.gmra.mrb[0].mxu0 %v4774
    %v5092 = vpop.f32.mrb[0].mxu0
    %v5093 = vadd.f32 %v5013, %v5092
    %v5094 = vpop.f32.mrb[0].mxu0
    %5095 = vdwg.mxu0
    %v5097 = vsel %vm3420, %v5093, 0
    %5099 = vmatprep.subr.mxu0 0.0
    %5100 = vmatpush1.msra.mxu0 %v5083
    %5101 = vmatprep.subr.mxu0 0.0
    %5102 = vmatpush1.msra.mxu0 %v5088
    %5103 = vmatprep.subr.mxu0 0.0
    %5104 = vmatpush1.msra.mxu0 %v5097
    %5105 = vmatprep.subr.mxu0 0.0
    %5106 = vmatpush1.msra.mxu0 0.0
    %5107 = vmatprep.subr.mxu0 0.0
    %5108 = vmatpush1.msra.mxu0 0.0
    %5109 = vmatprep.subr.mxu0 0.0
    %5110 = vmatpush1.msra.mxu0 0.0
    %5111 = vmatprep.subr.mxu0 0.0
    %5112 = vmatpush1.msra.mxu0 0.0
    %5113 = vmatprep.subr.mxu0 0.0
    %5114 = vmatpush1.msra.mxu0 0.0
    %5115 = vmatprep.subr.mxu0 0.0
    %5116 = vmatpush1.msra.mxu0 0.0
    %5117 = vmatprep.subr.mxu0 0.0
    %5118 = vmatpush1.msra.mxu0 0.0
    %5119 = vmatprep.subr.mxu0 0.0
    %5120 = vmatpush1.msra.mxu0 0.0
    %5121 = vmatprep.subr.mxu0 0.0
    %5122 = vmatpush1.msra.mxu0 0.0
    %5123 = vmatprep.subr.mxu0 0.0
    %5124 = vmatpush1.msra.mxu0 0.0
    %5125 = vmatprep.subr.mxu0 0.0
    %5126 = vmatpush1.msra.mxu0 0.0
    %5127 = vmatprep.subr.mxu0 0.0
    %5128 = vmatpush1.msra.mxu0 0.0
    %5129 = vmatprep.subr.mxu0 0.0
    %5130 = vmatpush1.msra.mxu0 0.0
    %5131 = vmatprep.subr.mxu0 0.0
    %5132 = vmatpush1.msra.mxu0 0.0
    %5133 = vmatprep.subr.mxu0 0.0
    %5134 = vmatpush1.msra.mxu0 0.0
    %5135 = vmatprep.subr.mxu0 0.0
    %5136 = vmatpush1.msra.mxu0 0.0
    %5137 = vmatprep.subr.mxu0 0.0
    %5138 = vmatpush1.msra.mxu0 0.0
    %5139 = vmatprep.subr.mxu0 0.0
    %5140 = vmatpush1.msra.mxu0 0.0
    %5141 = vmatprep.subr.mxu0 0.0
    %5142 = vmatpush1.msra.mxu0 0.0
    %5143 = vmatprep.subr.mxu0 0.0
    %5144 = vmatpush1.msra.mxu0 0.0
    %5145 = vmatprep.subr.mxu0 0.0
    %5146 = vmatpush1.msra.mxu0 0.0
    %5147 = vmatprep.subr.mxu0 0.0
    %5148 = vmatpush1.msra.mxu0 0.0
    %5149 = vmatprep.subr.mxu0 0.0
    %5150 = vmatpush1.msra.mxu0 0.0
    %5151 = vmatprep.subr.mxu0 0.0
    %5152 = vmatpush1.msra.mxu0 0.0
    %5153 = vmatprep.subr.mxu0 0.0
    %5154 = vmatpush1.msra.mxu0 0.0
    %5155 = vmatprep.subr.mxu0 0.0
    %5156 = vmatpush1.msra.mxu0 0.0
    %5157 = vmatprep.subr.mxu0 0.0
    %5158 = vmatpush1.msra.mxu0 0.0
    %5159 = vmatprep.subr.mxu0 0.0
    %5160 = vmatpush1.msra.mxu0 0.0
    %5161 = vmatprep.subr.mxu0 0.0
    %5162 = vmatpush1.msra.mxu0 0.0
    %5163 = vmatprep.mubr.f32.mxu0 0.0
    %5164 = vmatmul.mubr.f32.gmra.mrb[0].mxu0 %v3919
    %v5165 = vpop.f32.mrb[0].mxu0
    %v5166 = vadd.f32 0.0, %v5165
    %v5167 = vpop.f32.mrb[0].mxu0
    %5168 = vdwg.mxu0
    %v5170 = vsel %vm3420, %v4933, 0
    %5172 = vmatprep.subr.mxu0 0.0
    %5173 = vmatpush1.msra.mxu0 %v4923
    %5174 = vmatprep.subr.mxu0 0.0
    %5175 = vmatpush1.msra.mxu0 %v4928
    %5176 = vmatprep.subr.mxu0 0.0
    %5177 = vmatpush1.msra.mxu0 %v5170
    %5178 = vmatprep.subr.mxu0 0.0
    %5179 = vmatpush1.msra.mxu0 0.0
    %5180 = vmatprep.subr.mxu0 0.0
    %5181 = vmatpush1.msra.mxu0 0.0
    %5182 = vmatprep.subr.mxu0 0.0
    %5183 = vmatpush1.msra.mxu0 0.0
    %5184 = vmatprep.subr.mxu0 0.0
    %5185 = vmatpush1.msra.mxu0 0.0
    %5186 = vmatprep.subr.mxu0 0.0
    %5187 = vmatpush1.msra.mxu0 0.0
    %5188 = vmatprep.subr.mxu0 0.0
    %5189 = vmatpush1.msra.mxu0 0.0
    %5190 = vmatprep.subr.mxu0 0.0
    %5191 = vmatpush1.msra.mxu0 0.0
    %5192 = vmatprep.subr.mxu0 0.0
    %5193 = vmatpush1.msra.mxu0 0.0
    %5194 = vmatprep.subr.mxu0 0.0
    %5195 = vmatpush1.msra.mxu0 0.0
    %5196 = vmatprep.subr.mxu0 0.0
    %5197 = vmatpush1.msra.mxu0 0.0
    %5198 = vmatprep.subr.mxu0 0.0
    %5199 = vmatpush1.msra.mxu0 0.0
    %5200 = vmatprep.subr.mxu0 0.0
    %5201 = vmatpush1.msra.mxu0 0.0
    %5202 = vmatprep.subr.mxu0 0.0
    %5203 = vmatpush1.msra.mxu0 0.0
    %5204 = vmatprep.subr.mxu0 0.0
    %5205 = vmatpush1.msra.mxu0 0.0
    %5206 = vmatprep.subr.mxu0 0.0
    %5207 = vmatpush1.msra.mxu0 0.0
    %5208 = vmatprep.subr.mxu0 0.0
    %5209 = vmatpush1.msra.mxu0 0.0
    %5210 = vmatprep.subr.mxu0 0.0
    %5211 = vmatpush1.msra.mxu0 0.0
    %5212 = vmatprep.subr.mxu0 0.0
    %5213 = vmatpush1.msra.mxu0 0.0
    %5214 = vmatprep.subr.mxu0 0.0
    %5215 = vmatpush1.msra.mxu0 0.0
    %5216 = vmatprep.subr.mxu0 0.0
    %5217 = vmatpush1.msra.mxu0 0.0
    %5218 = vmatprep.subr.mxu0 0.0
    %5219 = vmatpush1.msra.mxu0 0.0
    %5220 = vmatprep.subr.mxu0 0.0
    %5221 = vmatpush1.msra.mxu0 0.0
    %5222 = vmatprep.subr.mxu0 0.0
    %5223 = vmatpush1.msra.mxu0 0.0
    %5224 = vmatprep.subr.mxu0 0.0
    %5225 = vmatpush1.msra.mxu0 0.0
    %5226 = vmatprep.subr.mxu0 0.0
    %5227 = vmatpush1.msra.mxu0 0.0
    %5228 = vmatprep.subr.mxu0 0.0
    %5229 = vmatpush1.msra.mxu0 0.0
    %5230 = vmatprep.subr.mxu0 0.0
    %5231 = vmatpush1.msra.mxu0 0.0
    %5232 = vmatprep.subr.mxu0 0.0
    %5233 = vmatpush1.msra.mxu0 0.0
    %5234 = vmatprep.subr.mxu0 0.0
    %5235 = vmatpush1.msra.mxu0 0.0
    %5236 = vmatprep.mubr.f32.mxu0 0.0
    %5237 = vmatmul.mubr.f32.gmra.mrb[0].mxu0 %v3995
    %v5238 = vpop.f32.mrb[0].mxu0
    %v5239 = vadd.f32 %v5166, %v5238
    %v5240 = vpop.f32.mrb[0].mxu0
    %5241 = vdwg.mxu0
    %5242 = vmatprep.subr.mxu0 0.0
    %5243 = vmatpush1.msra.mxu0 %v4071
    %5244 = vmatprep.subr.mxu0 0.0
    %5245 = vmatpush1.msra.mxu0 %v4072
    %5246 = vmatprep.subr.mxu0 0.0
    %5247 = vmatpush1.msra.mxu0 %v4073
    %5248 = vmatprep.subr.mxu0 0.0
    %5249 = vmatpush1.msra.mxu0 %v4074
    %5250 = vmatprep.subr.mxu0 0.0
    %5251 = vmatpush1.msra.mxu0 %v4075
    %5252 = vmatprep.subr.mxu0 0.0
    %5253 = vmatpush1.msra.mxu0 %v4076
    %5254 = vmatprep.subr.mxu0 0.0
    %5255 = vmatpush1.msra.mxu0 %v4077
    %5256 = vmatprep.subr.mxu0 0.0
    %5257 = vmatpush1.msra.mxu0 %v4078
    %5258 = vmatprep.subr.mxu0 0.0
    %5259 = vmatpush1.msra.mxu0 %v4079
    %5260 = vmatprep.subr.mxu0 0.0
    %5261 = vmatpush1.msra.mxu0 %v4080
    %5262 = vmatprep.subr.mxu0 0.0
    %5263 = vmatpush1.msra.mxu0 %v4081
    %5264 = vmatprep.subr.mxu0 0.0
    %5265 = vmatpush1.msra.mxu0 %v4082
    %5266 = vmatprep.subr.mxu0 0.0
    %5267 = vmatpush1.msra.mxu0 %v4083
    %5268 = vmatprep.subr.mxu0 0.0
    %5269 = vmatpush1.msra.mxu0 %v4084
    %5270 = vmatprep.subr.mxu0 0.0
    %5271 = vmatpush1.msra.mxu0 %v4085
    %5272 = vmatprep.subr.mxu0 0.0
    %5273 = vmatpush1.msra.mxu0 %v4086
    %5274 = vmatprep.subr.mxu0 0.0
    %5275 = vmatpush1.msra.mxu0 %v4087
    %5276 = vmatprep.subr.mxu0 0.0
    %5277 = vmatpush1.msra.mxu0 %v4088
    %5278 = vmatprep.subr.mxu0 0.0
    %5279 = vmatpush1.msra.mxu0 %v4089
    %5280 = vmatprep.subr.mxu0 0.0
    %5281 = vmatpush1.msra.mxu0 %v4090
    %5282 = vmatprep.subr.mxu0 0.0
    %5283 = vmatpush1.msra.mxu0 %v4091
    %5284 = vmatprep.subr.mxu0 0.0
    %5285 = vmatpush1.msra.mxu0 %v4092
    %5286 = vmatprep.subr.mxu0 0.0
    %5287 = vmatpush1.msra.mxu0 %v4093
    %5288 = vmatprep.subr.mxu0 0.0
    %5289 = vmatpush1.msra.mxu0 %v4094
    %5290 = vmatprep.subr.mxu0 0.0
    %5291 = vmatpush1.msra.mxu0 %v4095
    %5292 = vmatprep.subr.mxu0 0.0
    %5293 = vmatpush1.msra.mxu0 %v4096
    %5294 = vmatprep.subr.mxu0 0.0
    %5295 = vmatpush1.msra.mxu0 %v4097
    %5296 = vmatprep.subr.mxu0 0.0
    %5297 = vmatpush1.msra.mxu0 %v4098
    %5298 = vmatprep.subr.mxu0 0.0
    %5299 = vmatpush1.msra.mxu0 %v4099
    %5300 = vmatprep.subr.mxu0 0.0
    %5301 = vmatpush1.msra.mxu0 %v4100
    %5302 = vmatprep.subr.mxu0 0.0
    %5303 = vmatpush1.msra.mxu0 %v4101
    %5304 = vmatprep.subr.mxu0 0.0
    %5305 = vmatpush1.msra.mxu0 %v4102
    %5306 = vmatprep.mubr.f32.mxu0 %v4759
    %5307 = vmatmul.mubr.f32.gmra.mrb[0].mxu0 %v4758
    %v5308 = vpop.f32.mrb[0].mxu0
    %v5309 = vadd.f32 0.0, %v5308
    %v5310 = vpop.f32.mrb[0].mxu0
    %5311 = vmatprep.mubr.f32.mxu0 %v4762
    %5312 = vmatmul.mubr.f32.gmra.mrb[0].mxu0 %v4761
    %v5313 = vpop.f32.mrb[0].mxu0
    %v5314 = vadd.f32 0.0, %v5313
    %v5315 = vpop.f32.mrb[0].mxu0
    %5316 = vmatprep.mubr.f32.mxu0 %v4765
    %5317 = vmatmul.mubr.f32.gmra.mrb[0].mxu0 %v4764
    %v5318 = vpop.f32.mrb[0].mxu0
    %v5319 = vadd.f32 0.0, %v5318
    %v5320 = vpop.f32.mrb[0].mxu0
    %5321 = vdwg.mxu0
    %5322 = vmatprep.subr.mxu0 0.0
    %5323 = vmatpush1.msra.mxu0 %v4103
    %5324 = vmatprep.subr.mxu0 0.0
    %5325 = vmatpush1.msra.mxu0 %v4104
    %5326 = vmatprep.subr.mxu0 0.0
    %5327 = vmatpush1.msra.mxu0 %v4107
    %5328 = vmatprep.subr.mxu0 0.0
    %5329 = vmatpush1.msra.mxu0 0.0
    %5330 = vmatprep.subr.mxu0 0.0
    %5331 = vmatpush1.msra.mxu0 0.0
    %5332 = vmatprep.subr.mxu0 0.0
    %5333 = vmatpush1.msra.mxu0 0.0
    %5334 = vmatprep.subr.mxu0 0.0
    %5335 = vmatpush1.msra.mxu0 0.0
    %5336 = vmatprep.subr.mxu0 0.0
    %5337 = vmatpush1.msra.mxu0 0.0
    %5338 = vmatprep.subr.mxu0 0.0
    %5339 = vmatpush1.msra.mxu0 0.0
    %5340 = vmatprep.subr.mxu0 0.0
    %5341 = vmatpush1.msra.mxu0 0.0
    %5342 = vmatprep.subr.mxu0 0.0
    %5343 = vmatpush1.msra.mxu0 0.0
    %5344 = vmatprep.subr.mxu0 0.0
    %5345 = vmatpush1.msra.mxu0 0.0
    %5346 = vmatprep.subr.mxu0 0.0
    %5347 = vmatpush1.msra.mxu0 0.0
    %5348 = vmatprep.subr.mxu0 0.0
    %5349 = vmatpush1.msra.mxu0 0.0
    %5350 = vmatprep.subr.mxu0 0.0
    %5351 = vmatpush1.msra.mxu0 0.0
    %5352 = vmatprep.subr.mxu0 0.0
    %5353 = vmatpush1.msra.mxu0 0.0
    %5354 = vmatprep.subr.mxu0 0.0
    %5355 = vmatpush1.msra.mxu0 0.0
    %5356 = vmatprep.subr.mxu0 0.0
    %5357 = vmatpush1.msra.mxu0 0.0
    %5358 = vmatprep.subr.mxu0 0.0
    %5359 = vmatpush1.msra.mxu0 0.0
    %5360 = vmatprep.subr.mxu0 0.0
    %5361 = vmatpush1.msra.mxu0 0.0
    %5362 = vmatprep.subr.mxu0 0.0
    %5363 = vmatpush1.msra.mxu0 0.0
    %5364 = vmatprep.subr.mxu0 0.0
    %5365 = vmatpush1.msra.mxu0 0.0
    %5366 = vmatprep.subr.mxu0 0.0
    %5367 = vmatpush1.msra.mxu0 0.0
    %5368 = vmatprep.subr.mxu0 0.0
    %5369 = vmatpush1.msra.mxu0 0.0
    %5370 = vmatprep.subr.mxu0 0.0
    %5371 = vmatpush1.msra.mxu0 0.0
    %5372 = vmatprep.subr.mxu0 0.0
    %5373 = vmatpush1.msra.mxu0 0.0
    %5374 = vmatprep.subr.mxu0 0.0
    %5375 = vmatpush1.msra.mxu0 0.0
    %5376 = vmatprep.subr.mxu0 0.0
    %5377 = vmatpush1.msra.mxu0 0.0
    %5378 = vmatprep.subr.mxu0 0.0
    %5379 = vmatpush1.msra.mxu0 0.0
    %5380 = vmatprep.subr.mxu0 0.0
    %5381 = vmatpush1.msra.mxu0 0.0
    %5382 = vmatprep.subr.mxu0 0.0
    %5383 = vmatpush1.msra.mxu0 0.0
    %5384 = vmatprep.subr.mxu0 0.0
    %5385 = vmatpush1.msra.mxu0 0.0
    %5386 = vmatprep.mubr.f32.mxu0 0.0
    %5387 = vmatmul.mubr.f32.gmra.mrb[0].mxu0 %v4768
    %v5388 = vpop.f32.mrb[0].mxu0
    %v5389 = vadd.f32 %v5309, %v5388
    %v5390 = vpop.f32.mrb[0].mxu0
    %5391 = vmatprep.mubr.f32.mxu0 0.0
    %5392 = vmatmul.mubr.f32.gmra.mrb[0].mxu0 %v4771
    %v5393 = vpop.f32.mrb[0].mxu0
    %v5394 = vadd.f32 %v5314, %v5393
    %v5395 = vpop.f32.mrb[0].mxu0
    %5396 = vmatprep.mubr.f32.mxu0 0.0
    %5397 = vmatmul.mubr.f32.gmra.mrb[0].mxu0 %v4774
    %v5398 = vpop.f32.mrb[0].mxu0
    %v5399 = vadd.f32 %v5319, %v5398
    %v5400 = vpop.f32.mrb[0].mxu0
    %5401 = vdwg.mxu0
    %v5403 = vsel %vm3420, %v5399, 0
    %5405 = vmatprep.subr.mxu0 0.0
    %5406 = vmatpush1.msra.mxu0 %v5389
    %5407 = vmatprep.subr.mxu0 0.0
    %5408 = vmatpush1.msra.mxu0 %v5394
    %5409 = vmatprep.subr.mxu0 0.0
    %5410 = vmatpush1.msra.mxu0 %v5403
    %5411 = vmatprep.subr.mxu0 0.0
    %5412 = vmatpush1.msra.mxu0 0.0
    %5413 = vmatprep.subr.mxu0 0.0
    %5414 = vmatpush1.msra.mxu0 0.0
    %5415 = vmatprep.subr.mxu0 0.0
    %5416 = vmatpush1.msra.mxu0 0.0
    %5417 = vmatprep.subr.mxu0 0.0
    %5418 = vmatpush1.msra.mxu0 0.0
    %5419 = vmatprep.subr.mxu0 0.0
    %5420 = vmatpush1.msra.mxu0 0.0
    %5421 = vmatprep.subr.mxu0 0.0
    %5422 = vmatpush1.msra.mxu0 0.0
    %5423 = vmatprep.subr.mxu0 0.0
    %5424 = vmatpush1.msra.mxu0 0.0
    %5425 = vmatprep.subr.mxu0 0.0
    %5426 = vmatpush1.msra.mxu0 0.0
    %5427 = vmatprep.subr.mxu0 0.0
    %5428 = vmatpush1.msra.mxu0 0.0
    %5429 = vmatprep.subr.mxu0 0.0
    %5430 = vmatpush1.msra.mxu0 0.0
    %5431 = vmatprep.subr.mxu0 0.0
    %5432 = vmatpush1.msra.mxu0 0.0
    %5433 = vmatprep.subr.mxu0 0.0
    %5434 = vmatpush1.msra.mxu0 0.0
    %5435 = vmatprep.subr.mxu0 0.0
    %5436 = vmatpush1.msra.mxu0 0.0
    %5437 = vmatprep.subr.mxu0 0.0
    %5438 = vmatpush1.msra.mxu0 0.0
    %5439 = vmatprep.subr.mxu0 0.0
    %5440 = vmatpush1.msra.mxu0 0.0
    %5441 = vmatprep.subr.mxu0 0.0
    %5442 = vmatpush1.msra.mxu0 0.0
    %5443 = vmatprep.subr.mxu0 0.0
    %5444 = vmatpush1.msra.mxu0 0.0
    %5445 = vmatprep.subr.mxu0 0.0
    %5446 = vmatpush1.msra.mxu0 0.0
    %5447 = vmatprep.subr.mxu0 0.0
    %5448 = vmatpush1.msra.mxu0 0.0
    %5449 = vmatprep.subr.mxu0 0.0
    %5450 = vmatpush1.msra.mxu0 0.0
    %5451 = vmatprep.subr.mxu0 0.0
    %5452 = vmatpush1.msra.mxu0 0.0
    %5453 = vmatprep.subr.mxu0 0.0
    %5454 = vmatpush1.msra.mxu0 0.0
    %5455 = vmatprep.subr.mxu0 0.0
    %5456 = vmatpush1.msra.mxu0 0.0
    %5457 = vmatprep.subr.mxu0 0.0
    %5458 = vmatpush1.msra.mxu0 0.0
    %5459 = vmatprep.subr.mxu0 0.0
    %5460 = vmatpush1.msra.mxu0 0.0
    %5461 = vmatprep.subr.mxu0 0.0
    %5462 = vmatpush1.msra.mxu0 0.0
    %5463 = vmatprep.subr.mxu0 0.0
    %5464 = vmatpush1.msra.mxu0 0.0
    %5465 = vmatprep.subr.mxu0 0.0
    %5466 = vmatpush1.msra.mxu0 0.0
    %5467 = vmatprep.subr.mxu0 0.0
    %5468 = vmatpush1.msra.mxu0 0.0
    %5469 = vmatprep.mubr.f32.mxu0 0.0
    %5470 = vmatmul.mubr.f32.gmra.mrb[0].mxu0 %v4272
    %v5471 = vpop.f32.mrb[0].mxu0
    %v5472 = vadd.f32 0.0, %v5471
    %v5473 = vpop.f32.mrb[0].mxu0
    %5474 = vdwg.mxu0
    %v5475 = vadd.f32 %v5239, %v5472
    %v5476 = vadd.f32 %v5475, %v4353
    %v5477 = vsel %vm4356, %v5476, 0.0
    %5478 = vadd.xlane.f32.xlu0 %v5477
    %v5479 = vpop.xlane.xlu0 %5478
    %v5480 = vrot.slane %v5479, 4
    %v5481 = vadd.f32 %v5479, %v5480
    %v5482 = vrot.slane %v5481, 2
    %v5483 = vadd.f32 %v5481, %v5482
    %v5484 = vrot.slane %v5483, 1
    %v5485 = vadd.f32 %v5483, %v5484
    %s5486 = vtos %v5485
    %v5487 = vstv %s5486
    %v5488 = vmul.f32 %v5487, %v4368
    %v5489 = vsub.f32 %v5476, %v5488
    %v5490 = vmul.f32 %v5489, %v5489
    %v5491 = vsel %vm4356, %v5490, 0.0
    %5492 = vadd.xlane.f32.xlu0 %v5491
    %v5493 = vpop.xlane.xlu0 %5492
    %v5494 = vrot.slane %v5493, 4
    %v5495 = vadd.f32 %v5493, %v5494
    %v5496 = vrot.slane %v5495, 2
    %v5497 = vadd.f32 %v5495, %v5496
    %v5498 = vrot.slane %v5497, 1
    %v5499 = vadd.f32 %v5497, %v5498
    %s5500 = vtos %v5499
    %v5501 = vstv %s5500
    %v5502 = vmul.f32 %v5501, %v4383
    %v5503 = vrsqrt.pop %v5502
    %v5504 = vmul.f32 %v5489, %v5503
    %v5505 = vmul.f32 %v4392, %v5504
    %v5506 = vadd.f32 %v5505, %v4400
    %v5507 = vmax.f32 %v5506, 0.0
    %v5509 = vrot.slane %v5507, 1
    %v5511 = vmax.f32 %v5507, %v5509
    %5513 = vrot.lane.b32.xlu0 %v5511, 116
    %v5514 = vpop.permute.xlu0 %5513
    %v5516 = vmax.f32 %v5511, %v5514
    %v5518 = vrot.slane %v5516, 2
    %5519 = vrot.lane.b32.xlu0 %v5518, 60
    %v5520 = vpop.permute.xlu0 %5519
    %v5522 = vrot.slane %v5516, 4
    %5523 = vrot.lane.b32.xlu0 %v5522, 120
    %v5524 = vpop.permute.xlu0 %5523
    %v5526 = vsel %vm4422, %v5516, %v5520
    %v5527 = vsel %vm4424, %v5526, %v5524
    %v5528 = vsel %vm4484, %v5524, 0
    %5530 = vmatprep.subr.mxu0 %v4427
    %5531 = vmatpush1.msra.mxu0 %v4426
    %5532 = vmatprep.subr.mxu0 %v4429
    %5533 = vmatpush1.msra.mxu0 %v4428
    %5534 = vmatprep.subr.mxu0 %v4431
    %5535 = vmatpush1.msra.mxu0 %v4430
    %5536 = vmatprep.subr.mxu0 %v4433
    %5537 = vmatpush1.msra.mxu0 %v4432
    %5538 = vmatprep.subr.mxu0 %v4435
    %5539 = vmatpush1.msra.mxu0 %v4434
    %5540 = vmatprep.subr.mxu0 %v4437
    %5541 = vmatpush1.msra.mxu0 %v4436
    %5542 = vmatprep.subr.mxu0 %v4439
    %5543 = vmatpush1.msra.mxu0 %v4438
    %5544 = vmatprep.subr.mxu0 %v4441
    %5545 = vmatpush1.msra.mxu0 %v4440
    %5546 = vmatprep.subr.mxu0 %v4443
    %5547 = vmatpush1.msra.mxu0 %v4442
    %5548 = vmatprep.subr.mxu0 %v4445
    %5549 = vmatpush1.msra.mxu0 %v4444
    %5550 = vmatprep.subr.mxu0 %v4447
    %5551 = vmatpush1.msra.mxu0 %v4446
    %5552 = vmatprep.subr.mxu0 %v4449
    %5553 = vmatpush1.msra.mxu0 %v4448
    %5554 = vmatprep.subr.mxu0 %v4451
    %5555 = vmatpush1.msra.mxu0 %v4450
    %5556 = vmatprep.subr.mxu0 %v4453
    %5557 = vmatpush1.msra.mxu0 %v4452
    %5558 = vmatprep.subr.mxu0 %v4455
    %5559 = vmatpush1.msra.mxu0 %v4454
    %5560 = vmatprep.subr.mxu0 %v4457
    %5561 = vmatpush1.msra.mxu0 %v4456
    %5562 = vmatprep.subr.mxu0 %v4459
    %5563 = vmatpush1.msra.mxu0 %v4458
    %5564 = vmatprep.subr.mxu0 %v4461
    %5565 = vmatpush1.msra.mxu0 %v4460
    %5566 = vmatprep.subr.mxu0 %v4463
    %5567 = vmatpush1.msra.mxu0 %v4462
    %5568 = vmatprep.subr.mxu0 %v4465
    %5569 = vmatpush1.msra.mxu0 %v4464
    %5570 = vmatprep.subr.mxu0 %v4467
    %5571 = vmatpush1.msra.mxu0 %v4466
    %5572 = vmatprep.subr.mxu0 %v4469
    %5573 = vmatpush1.msra.mxu0 %v4468
    %5574 = vmatprep.subr.mxu0 %v4491
    %5575 = vmatpush1.msra.mxu0 %v4488
    %5576 = vmatprep.subr.mxu0 0.0
    %5577 = vmatpush1.msra.mxu0 0.0
    %5578 = vmatprep.subr.mxu0 0.0
    %5579 = vmatpush1.msra.mxu0 0.0
    %5580 = vmatprep.subr.mxu0 0.0
    %5581 = vmatpush1.msra.mxu0 0.0
    %5582 = vmatprep.subr.mxu0 0.0
    %5583 = vmatpush1.msra.mxu0 0.0
    %5584 = vmatprep.subr.mxu0 0.0
    %5585 = vmatpush1.msra.mxu0 0.0
    %5586 = vmatprep.subr.mxu0 0.0
    %5587 = vmatpush1.msra.mxu0 0.0
    %5588 = vmatprep.subr.mxu0 0.0
    %5589 = vmatpush1.msra.mxu0 0.0
    %5590 = vmatprep.subr.mxu0 0.0
    %5591 = vmatpush1.msra.mxu0 0.0
    %5592 = vmatprep.subr.mxu0 0.0
    %5593 = vmatpush1.msra.mxu0 0.0
    %5594 = vmatprep.mubr.f32.mxu0 %v5528
    %5595 = vmatmul.mubr.f32.gmra.mrb[0].mxu0 %v5527
    %v5596 = vpop.f32.mrb[0].mxu0
    %v5597 = vadd.f32 %v4477, %v5596
    %v5598 = vpop.f32.mrb[0].mxu0
    %v5599 = vadd.f32 %v4481, %v5598
    %5600 = vdwg.mxu0
    %v5601 = vmax.f32 %v5597, 0.0
    %v5602 = vmax.f32 %v5599, 0.0
    %v5605 = vrot.slane %v5601, 7
    %v5606 = vrot.slane %v5602, 7
    %vm5609 = vcmask 1040384
    %v5610 = vsel %vm5609, %v4564, %v5605
    %v5611 = vsel %vm5609, %v4565, %v5606
    %v5614 = vcombine.low %v5610, %v5611
    %v5616 = vunpack.c.l.s4 1983009808
    %v5617 = vunpack.c.0.s8 %v5616
    %v5618 = vlaneseq
    %v5619 = vshrl.u32 %v5618, 7
    %v5620 = vsub.s32 %v5617, %v5619
    %v5621 = vrot.slane %v5614, %v5620
    %vm5623 = vcmask 1041408
    %vm5624 = vcmask 584706
    %vm5625 = vmor %vm5624, %vm5623
    %5626 = vst.msk [vmem:[#allocation2] sm:$0xf] %vm5625, %v5621
    %v5627 = vmul.f32 %v5610, %v5610
    %v5628 = vmul.f32 %v5611, %v5611
    %v5629 = vsel %vm5623, %v5627, 0.0
    %vm5630 = vcmask 582656
    %v5631 = vsel %vm5630, %v5628, 0.0
    %v5632 = vadd.f32 %v5629, %v5631
    %5633 = vadd.xlane.f32.xlu0 %v5632
    %v5634 = vpop.xlane.xlu0 %5633
    %vm5635 = vcmask 588800
    %v5636 = vsel %vm5635, %v5611, 0
    %5638 = vmatprep.subr.mxu0 %v5636
    %5639 = vmatpush1.xpose.msra.mxu0 %v5610
    %5640 = vmatprep.subr.mxu0 0.0
    %5641 = vmatpush1.xpose.msra.mxu0 0.0
    %5642 = vmatprep.subr.mxu0 0.0
    %5643 = vmatpush1.xpose.msra.mxu0 0.0
    %5644 = vmatprep.subr.mxu0 0.0
    %5645 = vmatpush1.xpose.msra.mxu0 0.0
    %5646 = vmatprep.subr.mxu0 0.0
    %5647 = vmatpush1.xpose.msra.mxu0 0.0
    %5648 = vmatprep.subr.mxu0 0.0
    %5649 = vmatpush1.xpose.msra.mxu0 0.0
    %5650 = vmatprep.subr.mxu0 0.0
    %5651 = vmatpush1.xpose.msra.mxu0 0.0
    %5652 = vmatprep.subr.mxu0 0.0
    %5653 = vmatpush1.xpose.msra.mxu0 0.0
    %5654 = vmatprep.subr.mxu0 0.0
    %5655 = vmatpush1.xpose.msra.mxu0 0.0
    %5656 = vmatprep.subr.mxu0 0.0
    %5657 = vmatpush1.xpose.msra.mxu0 0.0
    %5658 = vmatprep.subr.mxu0 0.0
    %5659 = vmatpush1.xpose.msra.mxu0 0.0
    %5660 = vmatprep.subr.mxu0 0.0
    %5661 = vmatpush1.xpose.msra.mxu0 0.0
    %5662 = vmatprep.subr.mxu0 0.0
    %5663 = vmatpush1.xpose.msra.mxu0 0.0
    %5664 = vmatprep.subr.mxu0 0.0
    %5665 = vmatpush1.xpose.msra.mxu0 0.0
    %5666 = vmatprep.subr.mxu0 0.0
    %5667 = vmatpush1.xpose.msra.mxu0 0.0
    %5668 = vmatprep.subr.mxu0 0.0
    %5669 = vmatpush1.xpose.msra.mxu0 0.0
    %5670 = vmatprep.subr.mxu0 0.0
    %5671 = vmatpush1.xpose.msra.mxu0 0.0
    %5672 = vmatprep.subr.mxu0 0.0
    %5673 = vmatpush1.xpose.msra.mxu0 0.0
    %5674 = vmatprep.subr.mxu0 0.0
    %5675 = vmatpush1.xpose.msra.mxu0 0.0
    %5676 = vmatprep.subr.mxu0 0.0
    %5677 = vmatpush1.xpose.msra.mxu0 0.0
    %5678 = vmatprep.subr.mxu0 0.0
    %5679 = vmatpush1.xpose.msra.mxu0 0.0
    %5680 = vmatprep.subr.mxu0 0.0
    %5681 = vmatpush1.xpose.msra.mxu0 0.0
    %5682 = vmatprep.subr.mxu0 0.0
    %5683 = vmatpush1.xpose.msra.mxu0 0.0
    %5684 = vmatprep.subr.mxu0 0.0
    %5685 = vmatpush1.xpose.msra.mxu0 0.0
    %5686 = vmatprep.subr.mxu0 0.0
    %5687 = vmatpush1.xpose.msra.mxu0 0.0
    %5688 = vmatprep.subr.mxu0 0.0
    %5689 = vmatpush1.xpose.msra.mxu0 0.0
    %5690 = vmatprep.subr.mxu0 0.0
    %5691 = vmatpush1.xpose.msra.mxu0 0.0
    %5692 = vmatprep.subr.mxu0 0.0
    %5693 = vmatpush1.xpose.msra.mxu0 0.0
    %5694 = vmatprep.subr.mxu0 0.0
    %5695 = vmatpush1.xpose.msra.mxu0 0.0
    %5696 = vmatprep.subr.mxu0 0.0
    %5697 = vmatpush1.xpose.msra.mxu0 0.0
    %5698 = vmatprep.subr.mxu0 0.0
    %5699 = vmatpush1.xpose.msra.mxu0 0.0
    %5700 = vmatprep.subr.mxu0 0.0
    %5701 = vmatpush1.xpose.msra.mxu0 0.0
    %5702 = vmatprep.mubr.f32.mxu0 %v5636
    %5703 = vmatmul.mubr.f32.gmra.mrb[0].mxu0 %v5610
    %v5704 = vpop.f32.mrb[0].mxu0
    %v5705 = vadd.f32 0.0, %v5704
    %v5706 = vpop.f32.mrb[0].mxu0
    %5707 = vdwg.mxu0
    %v5708 = vmul.f32 %v5705, 2.0
    %v5709 = vsub.f32 %v5634, %v5708
    %v5711 = vlaneseq
    %v5712 = vand.u32 %v5711, 127
    %v5713 = vlaneseq
    %v5714 = vshrl.u32 %v5713, 7
    %v5715 = vsub.s32 %v5712, %v5714
    %v5716 = vrot.slane %v5634, %v5715
    %v5718 = vadd.f32 %v5709, %v5716
    %v5719 = vmul.f32 %v5718, -0.005
    %v5720 = vmul.f32 %v5719, 1.442695
    %v5721 = vpow.pop %v5720
    %vm5722 = vcmask 9216
    %5723 = vst.msk [vmem:[#allocation4] sm:$0x3] %vm5722, %v5721
    // Predicated region
    $region54: #{fused_forward.1} parent=1 // pred_check
      _
    $region55: #{fused_forward.1} parent=1 // pred_check_branch
      %5725 = sbr.rel (0) target = $region57
    $region56: #{fused_forward.1} parent=1 // pred_region
      %s5727 = ssub.s32 64, 64
      %5728 = vsyncadd [#allocation3], %s5727
      %s5730 = sshll.u32 [#allocation2], 4
      %s5731 = int_to_ptr.vmem [resolvable:$true] %s5730
      %5733 = dma.vmem_to_hbm [thread:$0]  %s5731, 64, %s13, [#allocation3]
    $region57: #{fused_forward.1} parent=1 // pred_fallthru
      _
    // Predicated region
    $region58: #{fused_forward.1} parent=1 // pred_check
      _
    $region59: #{fused_forward.1} parent=1 // pred_check_branch
      %5735 = sbr.rel (0) target = $region61
    $region60: #{fused_forward.1} parent=1 // pred_region
      %s5737 = ssub.s32 32, 32
      %5738 = vsyncadd [#allocation5], %s5737
      %s5740 = sshll.u32 [#allocation4], 4
      %s5741 = int_to_ptr.vmem [resolvable:$true] %s5740
      %5743 = dma.vmem_to_hbm [thread:$0]  %s5741, 32, %s14, [#allocation5]
    $region61: #{fused_forward.1} parent=1 // pred_fallthru
      _
    // Predicated region
    $region62: #{fused_forward.1} parent=1 // pred_check
      _
    $region63: #{fused_forward.1} parent=1 // pred_check_branch
      %5745 = sbr.rel (0) target = $region65
    $region64: #{fused_forward.1} parent=1 // pred_region
      %5746 = dma.done [#allocation3], 64
    $region65: #{fused_forward.1} parent=1 // pred_fallthru
      _
    // Predicated region
    $region66: #{fused_forward.1} parent=1 // pred_check
      _
    $region67: #{fused_forward.1} parent=1 // pred_check_branch
      %5748 = sbr.rel (0) target = $region69
    $region68: #{fused_forward.1} parent=1 // pred_region
      %5749 = dma.done [#allocation5], 32
    $region69: #{fused_forward.1} parent=1 // pred_fallthru
      _
    %5750 = vsyncpa [#allocation3], 1
    %5751 = vsyncpa [#allocation5], 1

</llo_original>
